<compile_context>
chip_gen: v7x
topology: tpu7x:2x2x1
jax: 0.10.0
libtpu: 0.0.40
codegen_flags: <defaults>
</compile_context>

<pallas_src>
import functools

import jax
import jax.numpy as jnp
import numpy as np
from jax import lax
from jax.experimental import pallas as pl
from jax.experimental.pallas import tpu as pltpu

EPS = 1e-5


def _dense_layer_kernel(h, w, x_ref, s1_ref, t1_ref, w1_ref, s2_ref, t2_ref,
                        w2_ref, o_ref, pad_ref, col_ref):
    """One fused DenseNet layer for a single batch element.

    x_ref  : (H*W, Cin)        concatenated input features (channels-last)
    s1/t1  : (1, Cin)          folded BN1 scale / shift
    w1_ref : (Cin, Cmid)       1x1-conv weights
    s2/t2  : (1, Cmid)         folded BN2 scale / shift
    w2_ref : (9*Cmid, G)       3x3-conv weights, (kh, kw, cin) flattened
    o_ref  : (H*W, Cin + G)    [passthrough input | new features]
    pad_ref: (H+2, W+2, Cmid)  zero-padded post-BN2 activation (VMEM scratch)
    col_ref: (H*W, 9*Cmid)     im2col patches (VMEM scratch)
    """
    hw, cin = x_ref.shape
    cmid = w1_ref.shape[1]
    g = w2_ref.shape[1]

    x = x_ref[...]                                               # (HW, Cin)

    # BN1 + ReLU1 + 1x1 conv: one matmul over all pixels.
    a1 = jnp.maximum(x * s1_ref[...] + t1_ref[...], 0.0)
    btl = jnp.dot(a1, w1_ref[...], preferred_element_type=jnp.float32)

    # BN2 + ReLU2.
    a2 = jnp.maximum(btl * s2_ref[...] + t2_ref[...], 0.0)       # (HW, Cmid)

    # Zero-pad spatially (conv padding=1) in VMEM scratch.
    pad_ref[...] = jnp.zeros_like(pad_ref)
    pad_ref[pl.ds(1, h), pl.ds(1, w), :] = a2.reshape(h, w, cmid)

    # im2col: gather the 9 taps into (HW, 9*Cmid) so the 3x3 conv becomes a
    # single MXU matmul (contraction dim 9*Cmid) instead of 9 tiny ones.
    for kh in range(3):
        for kw in range(3):
            t = kh * 3 + kw
            col_ref[:, pl.ds(t * cmid, cmid)] = (
                pad_ref[pl.ds(kh, h), pl.ds(kw, w), :].reshape(hw, cmid))
    new = jnp.dot(col_ref[...], w2_ref[...],
                  preferred_element_type=jnp.float32)            # (HW, G)

    # Fused DenseNet concat: pass input through, append the new features.
    o_ref[:, pl.ds(0, cin)] = x.astype(o_ref.dtype)
    o_ref[:, pl.ds(cin, g)] = new.astype(o_ref.dtype)


def _dense_layer_call(feats, h, w, s1, t1, w1, s2, t2, w2):
    n, hw, cin = feats.shape
    cmid = w1.shape[1]
    g = w2.shape[1]
    kernel = functools.partial(_dense_layer_kernel, h, w)
    return pl.pallas_call(
        kernel,
        out_shape=jax.ShapeDtypeStruct((n, hw, cin + g), feats.dtype),
        grid=(n,),
        in_specs=[
            pl.BlockSpec((None, hw, cin), lambda b: (b, 0, 0)),
            pl.BlockSpec((1, cin), lambda b: (0, 0)),
            pl.BlockSpec((1, cin), lambda b: (0, 0)),
            pl.BlockSpec((cin, cmid), lambda b: (0, 0)),
            pl.BlockSpec((1, cmid), lambda b: (0, 0)),
            pl.BlockSpec((1, cmid), lambda b: (0, 0)),
            pl.BlockSpec((9 * cmid, g), lambda b: (0, 0)),
        ],
        out_specs=pl.BlockSpec((None, hw, cin + g), lambda b: (b, 0, 0)),
        scratch_shapes=[
            pltpu.VMEM((h + 2, w + 2, cmid), jnp.float32),
            pltpu.VMEM((hw, 9 * cmid), jnp.float32),
        ],
        compiler_params=pltpu.CompilerParams(
            dimension_semantics=("parallel",)),
    )(feats, s1, t1, w1, s2, t2, w2)


def _fold_bn(gamma, beta, mean, var, eps=EPS):
    scale = gamma / jnp.sqrt(var + eps)
    shift = beta - mean * scale
    return scale.reshape(1, -1), shift.reshape(1, -1)


def dense_block_pallas(x_nchw, layers):
    """_DenseBlock.forward: x (N, C0, H, W) -> (N, C0 + L*growth, H, W)."""
    n, c0, h, w = x_nchw.shape
    feats = jnp.transpose(x_nchw, (0, 2, 3, 1)).reshape(n, h * w, c0)
    for p in layers:
        cmid, cin = p["conv1_w"].shape[:2]
        g = p["conv2_w"].shape[0]
        s1, t1 = _fold_bn(p["bn1_g"], p["bn1_b"], p["bn1_m"], p["bn1_v"])
        s2, t2 = _fold_bn(p["bn2_g"], p["bn2_b"], p["bn2_m"], p["bn2_v"])
        w1 = p["conv1_w"].reshape(cmid, cin).T                     # (Cin, Cmid)
        w2 = jnp.transpose(p["conv2_w"], (2, 3, 1, 0)).reshape(9 * cmid, g)
        feats = _dense_layer_call(feats, h, w, s1, t1, w1, s2, t2, w2)
    c_total = feats.shape[-1]
    return jnp.transpose(feats.reshape(n, h, w, c_total), (0, 3, 1, 2))


# ---------------- independent plain-JAX reference ---------------------------
def _bn_ref(x, gamma, beta, mean, var, eps=EPS):
    inv = gamma / jnp.sqrt(var + eps)
    return ((x - mean[None, :, None, None]) * inv[None, :, None, None]
            + beta[None, :, None, None])


def dense_block_reference(x_nchw, layers):
    feats = x_nchw
    for p in layers:
        a1 = jnp.maximum(
            _bn_ref(feats, p["bn1_g"], p["bn1_b"], p["bn1_m"], p["bn1_v"]), 0.0)
        btl = lax.conv_general_dilated(
            a1, p["conv1_w"], (1, 1), "VALID",
            dimension_numbers=("NCHW", "OIHW", "NCHW"),
            precision=lax.Precision.HIGHEST)
        a2 = jnp.maximum(
            _bn_ref(btl, p["bn2_g"], p["bn2_b"], p["bn2_m"], p["bn2_v"]), 0.0)
        nf = lax.conv_general_dilated(
            a2, p["conv2_w"], (1, 1), ((1, 1), (1, 1)),
            dimension_numbers=("NCHW", "OIHW", "NCHW"),
            precision=lax.Precision.HIGHEST)
        feats = jnp.concatenate([feats, nf], axis=1)
    return feats


def init_dense_block_params(key, num_layers, num_input_features, bn_size,
                            growth_rate):
    layers = []
    cin = num_input_features
    cmid = bn_size * growth_rate
    for _ in range(num_layers):
        key, *ks = jax.random.split(key, 11)
        layers.append(dict(
            bn1_g=jax.random.uniform(ks[0], (cin,), jnp.float32, 0.5, 1.5),
            bn1_b=0.1 * jax.random.normal(ks[1], (cin,), jnp.float32),
            bn1_m=0.1 * jax.random.normal(ks[2], (cin,), jnp.float32),
            bn1_v=jax.random.uniform(ks[3], (cin,), jnp.float32, 0.5, 1.5),
            conv1_w=jax.random.normal(ks[4], (cmid, cin, 1, 1), jnp.float32)
                    / np.sqrt(cin),
            bn2_g=jax.random.uniform(ks[5], (cmid,), jnp.float32, 0.5, 1.5),
            bn2_b=0.1 * jax.random.normal(ks[6], (cmid,), jnp.float32),
            bn2_m=0.1 * jax.random.normal(ks[7], (cmid,), jnp.float32),
            bn2_v=jax.random.uniform(ks[8], (cmid,), jnp.float32, 0.5, 1.5),
            conv2_w=jax.random.normal(ks[9], (growth_rate, cmid, 3, 3),
                                      jnp.float32) / np.sqrt(9 * cmid),
        ))
        cin += growth_rate
    return layers


if __name__ == "__main__":
    # _DenseBlock(num_layers=2, num_input_features=4, bn_size=2, growth_rate=4,
    #             drop_rate=0)
    N, C0, H, W = 2, 4, 16, 16
    NUM_LAYERS, BN_SIZE, GROWTH = 2, 2, 4

    key = jax.random.PRNGKey(0)
    kx, kp = jax.random.split(key)
    x = jax.random.normal(kx, (N, C0, H, W), jnp.float32)
    layers = init_dense_block_params(kp, NUM_LAYERS, C0, BN_SIZE, GROWTH)

    out = jax.block_until_ready(dense_block_pallas(x, layers))
    ref = jax.block_until_ready(dense_block_reference(x, layers))

    c_total = C0 + NUM_LAYERS * GROWTH
    assert out.shape == (N, c_total, H, W), out.shape
    np.testing.assert_allclose(np.asarray(out), np.asarray(ref),
                               rtol=1e-4, atol=1e-4)
    print("KERNEL_OK")
</pallas_src>

<mosaic_0001>
module attributes {stable_mosaic.version = 11 : i64} {
  func.func @_dense_layer_kernel(%arg0: i32, %arg1: memref<1x256x4xf32, #tpu.memory_space<vmem>>, %arg2: memref<1x4xf32, #tpu.memory_space<vmem>>, %arg3: memref<1x4xf32, #tpu.memory_space<vmem>>, %arg4: memref<4x8xf32, #tpu.memory_space<vmem>>, %arg5: memref<1x8xf32, #tpu.memory_space<vmem>>, %arg6: memref<1x8xf32, #tpu.memory_space<vmem>>, %arg7: memref<72x4xf32, #tpu.memory_space<vmem>>, %arg8: memref<1x256x8xf32, #tpu.memory_space<vmem>>, %arg9: memref<18x18x8xf32, #tpu.memory_space<vmem>>, %arg10: memref<256x72xf32, #tpu.memory_space<vmem>>) attributes {dimension_semantics = [#tpu.dimension_semantics<parallel>], iteration_bounds = array<i64: 2>, scalar_prefetch = 0 : i64, scratch_operands = 2 : i64, tpu.core_type = #tpu.core_type<tc>, window_params = [{transform_indices = @transform_0, window_bounds = array<i64: 1, 256, 4>}, {pipeline_mode = #tpu.pipeline_mode<synchronous>, transform_indices = @transform_1, window_bounds = array<i64: 1, 4>}, {pipeline_mode = #tpu.pipeline_mode<synchronous>, transform_indices = @transform_2, window_bounds = array<i64: 1, 4>}, {pipeline_mode = #tpu.pipeline_mode<synchronous>, transform_indices = @transform_3, window_bounds = array<i64: 4, 8>}, {pipeline_mode = #tpu.pipeline_mode<synchronous>, transform_indices = @transform_4, window_bounds = array<i64: 1, 8>}, {pipeline_mode = #tpu.pipeline_mode<synchronous>, transform_indices = @transform_5, window_bounds = array<i64: 1, 8>}, {pipeline_mode = #tpu.pipeline_mode<synchronous>, transform_indices = @transform_6, window_bounds = array<i64: 72, 4>}, {transform_indices = @transform_7, window_bounds = array<i64: 1, 256, 8>}]} {
    %c0 = arith.constant 0 : index
    %c0_0 = arith.constant 0 : index
    %c0_1 = arith.constant 0 : index
    %0 = vector.load %arg1[%c0, %c0_0, %c0_1] : memref<1x256x4xf32, #tpu.memory_space<vmem>>, vector<1x256x4xf32>
    %1 = vector.shape_cast %0 : vector<1x256x4xf32> to vector<256x4xf32>
    %c0_2 = arith.constant 0 : index
    %c0_3 = arith.constant 0 : index
    %2 = vector.load %arg2[%c0_2, %c0_3] : memref<1x4xf32, #tpu.memory_space<vmem>>, vector<1x4xf32>
    %3 = vector.broadcast %2 : vector<1x4xf32> to vector<256x4xf32>
    %4 = arith.mulf %1, %3 : vector<256x4xf32>
    %c0_4 = arith.constant 0 : index
    %c0_5 = arith.constant 0 : index
    %5 = vector.load %arg3[%c0_4, %c0_5] : memref<1x4xf32, #tpu.memory_space<vmem>>, vector<1x4xf32>
    %6 = vector.broadcast %5 : vector<1x4xf32> to vector<256x4xf32>
    %7 = arith.addf %4, %6 : vector<256x4xf32>
    %cst = arith.constant 0.000000e+00 : f32
    %8 = vector.broadcast %cst : f32 to vector<256x4xf32>
    %9 = arith.maximumf %7, %8 : vector<256x4xf32>
    %c0_6 = arith.constant 0 : index
    %c0_7 = arith.constant 0 : index
    %10 = vector.load %arg4[%c0_6, %c0_7] : memref<4x8xf32, #tpu.memory_space<vmem>>, vector<4x8xf32>
    %cst_8 = arith.constant dense<0.000000e+00> : vector<256x8xf32>
    %11 = tpu.matmul %9, %10, %cst_8 {dimension_numbers = #tpu.dot_dimension_numbers<[1], [0], [0], [1], [0, 0, 1, 1], [], []>} : vector<256x4xf32>, vector<4x8xf32>, vector<256x8xf32> -> vector<256x8xf32>
    %c0_9 = arith.constant 0 : index
    %c0_10 = arith.constant 0 : index
    %12 = vector.load %arg5[%c0_9, %c0_10] : memref<1x8xf32, #tpu.memory_space<vmem>>, vector<1x8xf32>
    %13 = vector.broadcast %12 : vector<1x8xf32> to vector<256x8xf32>
    %14 = arith.mulf %11, %13 : vector<256x8xf32>
    %c0_11 = arith.constant 0 : index
    %c0_12 = arith.constant 0 : index
    %15 = vector.load %arg6[%c0_11, %c0_12] : memref<1x8xf32, #tpu.memory_space<vmem>>, vector<1x8xf32>
    %16 = vector.broadcast %15 : vector<1x8xf32> to vector<256x8xf32>
    %17 = arith.addf %14, %16 : vector<256x8xf32>
    %cst_13 = arith.constant 0.000000e+00 : f32
    %18 = vector.broadcast %cst_13 : f32 to vector<256x8xf32>
    %19 = arith.maximumf %17, %18 : vector<256x8xf32>
    %cst_14 = arith.constant 0.000000e+00 : f32
    %20 = vector.broadcast %cst_14 : f32 to vector<18x18x8xf32>
    %c0_15 = arith.constant 0 : index
    %c0_16 = arith.constant 0 : index
    %c0_17 = arith.constant 0 : index
    %21 = vector.load %arg9[%c0_15, %c0_16, %c0_17] : memref<18x18x8xf32, #tpu.memory_space<vmem>>, vector<18x18x8xf32>
    tpu.vector_store %arg9[%c0_15, %c0_16, %c0_17], %20 {strides = array<i32>} : memref<18x18x8xf32, #tpu.memory_space<vmem>>, vector<18x18x8xf32>,
    %22 = vector.shape_cast %19 : vector<256x8xf32> to vector<16x16x8xf32>
    %c1 = arith.constant 1 : index
    %c1_18 = arith.constant 1 : index
    %c0_19 = arith.constant 0 : index
    %23 = vector.load %arg9[%c1, %c1_18, %c0_19] : memref<18x18x8xf32, #tpu.memory_space<vmem>>, vector<16x16x8xf32>
    tpu.vector_store %arg9[%c1, %c1_18, %c0_19], %22 {strides = array<i32>} : memref<18x18x8xf32, #tpu.memory_space<vmem>>, vector<16x16x8xf32>,
    %c0_20 = arith.constant 0 : index
    %c0_21 = arith.constant 0 : index
    %c0_22 = arith.constant 0 : index
    %24 = vector.load %arg9[%c0_20, %c0_21, %c0_22] : memref<18x18x8xf32, #tpu.memory_space<vmem>>, vector<16x16x8xf32>
    %25 = vector.shape_cast %24 : vector<16x16x8xf32> to vector<256x8xf32>
    %c0_23 = arith.constant 0 : index
    %c0_24 = arith.constant 0 : index
    %26 = vector.load %arg10[%c0_23, %c0_24] : memref<256x72xf32, #tpu.memory_space<vmem>>, vector<256x8xf32>
    tpu.vector_store %arg10[%c0_23, %c0_24], %25 {strides = array<i32>} : memref<256x72xf32, #tpu.memory_space<vmem>>, vector<256x8xf32>,
    %c0_25 = arith.constant 0 : index
    %c1_26 = arith.constant 1 : index
    %c0_27 = arith.constant 0 : index
    %27 = vector.load %arg9[%c0_25, %c1_26, %c0_27] : memref<18x18x8xf32, #tpu.memory_space<vmem>>, vector<16x16x8xf32>
    %28 = vector.shape_cast %27 : vector<16x16x8xf32> to vector<256x8xf32>
    %c0_28 = arith.constant 0 : index
    %c8 = arith.constant 8 : index
    %29 = vector.load %arg10[%c0_28, %c8] : memref<256x72xf32, #tpu.memory_space<vmem>>, vector<256x8xf32>
    tpu.vector_store %arg10[%c0_28, %c8], %28 {strides = array<i32>} : memref<256x72xf32, #tpu.memory_space<vmem>>, vector<256x8xf32>,
    %c0_29 = arith.constant 0 : index
    %c2 = arith.constant 2 : index
    %c0_30 = arith.constant 0 : index
    %30 = vector.load %arg9[%c0_29, %c2, %c0_30] : memref<18x18x8xf32, #tpu.memory_space<vmem>>, vector<16x16x8xf32>
    %31 = vector.shape_cast %30 : vector<16x16x8xf32> to vector<256x8xf32>
    %c0_31 = arith.constant 0 : index
    %c16 = arith.constant 16 : index
    %32 = vector.load %arg10[%c0_31, %c16] : memref<256x72xf32, #tpu.memory_space<vmem>>, vector<256x8xf32>
    tpu.vector_store %arg10[%c0_31, %c16], %31 {strides = array<i32>} : memref<256x72xf32, #tpu.memory_space<vmem>>, vector<256x8xf32>,
    %c1_32 = arith.constant 1 : index
    %c0_33 = arith.constant 0 : index
    %c0_34 = arith.constant 0 : index
    %33 = vector.load %arg9[%c1_32, %c0_33, %c0_34] : memref<18x18x8xf32, #tpu.memory_space<vmem>>, vector<16x16x8xf32>
    %34 = vector.shape_cast %33 : vector<16x16x8xf32> to vector<256x8xf32>
    %c0_35 = arith.constant 0 : index
    %c24 = arith.constant 24 : index
    %35 = vector.load %arg10[%c0_35, %c24] : memref<256x72xf32, #tpu.memory_space<vmem>>, vector<256x8xf32>
    tpu.vector_store %arg10[%c0_35, %c24], %34 {strides = array<i32>} : memref<256x72xf32, #tpu.memory_space<vmem>>, vector<256x8xf32>,
    %c1_36 = arith.constant 1 : index
    %c1_37 = arith.constant 1 : index
    %c0_38 = arith.constant 0 : index
    %36 = vector.load %arg9[%c1_36, %c1_37, %c0_38] : memref<18x18x8xf32, #tpu.memory_space<vmem>>, vector<16x16x8xf32>
    %37 = vector.shape_cast %36 : vector<16x16x8xf32> to vector<256x8xf32>
    %c0_39 = arith.constant 0 : index
    %c32 = arith.constant 32 : index
    %38 = vector.load %arg10[%c0_39, %c32] : memref<256x72xf32, #tpu.memory_space<vmem>>, vector<256x8xf32>
    tpu.vector_store %arg10[%c0_39, %c32], %37 {strides = array<i32>} : memref<256x72xf32, #tpu.memory_space<vmem>>, vector<256x8xf32>,
    %c1_40 = arith.constant 1 : index
    %c2_41 = arith.constant 2 : index
    %c0_42 = arith.constant 0 : index
    %39 = vector.load %arg9[%c1_40, %c2_41, %c0_42] : memref<18x18x8xf32, #tpu.memory_space<vmem>>, vector<16x16x8xf32>
    %40 = vector.shape_cast %39 : vector<16x16x8xf32> to vector<256x8xf32>
    %c0_43 = arith.constant 0 : index
    %c40 = arith.constant 40 : index
    %41 = vector.load %arg10[%c0_43, %c40] : memref<256x72xf32, #tpu.memory_space<vmem>>, vector<256x8xf32>
    tpu.vector_store %arg10[%c0_43, %c40], %40 {strides = array<i32>} : memref<256x72xf32, #tpu.memory_space<vmem>>, vector<256x8xf32>,
    %c2_44 = arith.constant 2 : index
    %c0_45 = arith.constant 0 : index
    %c0_46 = arith.constant 0 : index
    %42 = vector.load %arg9[%c2_44, %c0_45, %c0_46] : memref<18x18x8xf32, #tpu.memory_space<vmem>>, vector<16x16x8xf32>
    %43 = vector.shape_cast %42 : vector<16x16x8xf32> to vector<256x8xf32>
    %c0_47 = arith.constant 0 : index
    %c48 = arith.constant 48 : index
    %44 = vector.load %arg10[%c0_47, %c48] : memref<256x72xf32, #tpu.memory_space<vmem>>, vector<256x8xf32>
    tpu.vector_store %arg10[%c0_47, %c48], %43 {strides = array<i32>} : memref<256x72xf32, #tpu.memory_space<vmem>>, vector<256x8xf32>,
    %c2_48 = arith.constant 2 : index
    %c1_49 = arith.constant 1 : index
    %c0_50 = arith.constant 0 : index
    %45 = vector.load %arg9[%c2_48, %c1_49, %c0_50] : memref<18x18x8xf32, #tpu.memory_space<vmem>>, vector<16x16x8xf32>
    %46 = vector.shape_cast %45 : vector<16x16x8xf32> to vector<256x8xf32>
    %c0_51 = arith.constant 0 : index
    %c56 = arith.constant 56 : index
    %47 = vector.load %arg10[%c0_51, %c56] : memref<256x72xf32, #tpu.memory_space<vmem>>, vector<256x8xf32>
    tpu.vector_store %arg10[%c0_51, %c56], %46 {strides = array<i32>} : memref<256x72xf32, #tpu.memory_space<vmem>>, vector<256x8xf32>,
    %c2_52 = arith.constant 2 : index
    %c2_53 = arith.constant 2 : index
    %c0_54 = arith.constant 0 : index
    %48 = vector.load %arg9[%c2_52, %c2_53, %c0_54] : memref<18x18x8xf32, #tpu.memory_space<vmem>>, vector<16x16x8xf32>
    %49 = vector.shape_cast %48 : vector<16x16x8xf32> to vector<256x8xf32>
    %c0_55 = arith.constant 0 : index
    %c64 = arith.constant 64 : index
    %50 = vector.load %arg10[%c0_55, %c64] : memref<256x72xf32, #tpu.memory_space<vmem>>, vector<256x8xf32>
    tpu.vector_store %arg10[%c0_55, %c64], %49 {strides = array<i32>} : memref<256x72xf32, #tpu.memory_space<vmem>>, vector<256x8xf32>,
    %c0_56 = arith.constant 0 : index
    %c0_57 = arith.constant 0 : index
    %51 = vector.load %arg10[%c0_56, %c0_57] : memref<256x72xf32, #tpu.memory_space<vmem>>, vector<256x72xf32>
    %c0_58 = arith.constant 0 : index
    %c0_59 = arith.constant 0 : index
    %52 = vector.load %arg7[%c0_58, %c0_59] : memref<72x4xf32, #tpu.memory_space<vmem>>, vector<72x4xf32>
    %cst_60 = arith.constant dense<0.000000e+00> : vector<256x4xf32>
    %53 = tpu.matmul %51, %52, %cst_60 {dimension_numbers = #tpu.dot_dimension_numbers<[1], [0], [0], [1], [0, 0, 1, 1], [], []>} : vector<256x72xf32>, vector<72x4xf32>, vector<256x4xf32> -> vector<256x4xf32>
    %c0_61 = arith.constant 0 : index
    %c0_62 = arith.constant 0 : index
    %c0_63 = arith.constant 0 : index
    %54 = vector.load %arg8[%c0_61, %c0_62, %c0_63] : memref<1x256x8xf32, #tpu.memory_space<vmem>>, vector<1x256x4xf32>
    %55 = vector.shape_cast %54 : vector<1x256x4xf32> to vector<256x4xf32>
    %56 = vector.shape_cast %1 : vector<256x4xf32> to vector<1x256x4xf32>
    tpu.vector_store %arg8[%c0_61, %c0_62, %c0_63], %56 {strides = array<i32>} : memref<1x256x8xf32, #tpu.memory_space<vmem>>, vector<1x256x4xf32>,
    %c0_64 = arith.constant 0 : index
    %c0_65 = arith.constant 0 : index
    %c4 = arith.constant 4 : index
    %57 = vector.load %arg8[%c0_64, %c0_65, %c4] : memref<1x256x8xf32, #tpu.memory_space<vmem>>, vector<1x256x4xf32>
    %58 = vector.shape_cast %57 : vector<1x256x4xf32> to vector<256x4xf32>
    %59 = vector.shape_cast %53 : vector<256x4xf32> to vector<1x256x4xf32>
    tpu.vector_store %arg8[%c0_64, %c0_65, %c4], %59 {strides = array<i32>} : memref<1x256x8xf32, #tpu.memory_space<vmem>>, vector<1x256x4xf32>,
    return
  }
  func.func @transform_0(%arg0: i32) -> (i32, i32, i32) {
    %c0_i32 = arith.constant 0 : i32
    %c0_i32_0 = arith.constant 0 : i32
    %c0_i32_1 = arith.constant 0 : i32
    return %arg0, %c0_i32, %c0_i32_0 : i32, i32, i32
  }
  func.func @transform_1(%arg0: i32) -> (i32, i32) {
    %c0_i32 = arith.constant 0 : i32
    %c0_i32_0 = arith.constant 0 : i32
    %c0_i32_1 = arith.constant 0 : i32
    return %c0_i32, %c0_i32_0 : i32, i32
  }
  func.func @transform_2(%arg0: i32) -> (i32, i32) {
    %c0_i32 = arith.constant 0 : i32
    %c0_i32_0 = arith.constant 0 : i32
    %c0_i32_1 = arith.constant 0 : i32
    return %c0_i32, %c0_i32_0 : i32, i32
  }
  func.func @transform_3(%arg0: i32) -> (i32, i32) {
    %c0_i32 = arith.constant 0 : i32
    %c0_i32_0 = arith.constant 0 : i32
    %c0_i32_1 = arith.constant 0 : i32
    return %c0_i32, %c0_i32_0 : i32, i32
  }
  func.func @transform_4(%arg0: i32) -> (i32, i32) {
    %c0_i32 = arith.constant 0 : i32
    %c0_i32_0 = arith.constant 0 : i32
    %c0_i32_1 = arith.constant 0 : i32
    return %c0_i32, %c0_i32_0 : i32, i32
  }
  func.func @transform_5(%arg0: i32) -> (i32, i32) {
    %c0_i32 = arith.constant 0 : i32
    %c0_i32_0 = arith.constant 0 : i32
    %c0_i32_1 = arith.constant 0 : i32
    return %c0_i32, %c0_i32_0 : i32, i32
  }
  func.func @transform_6(%arg0: i32) -> (i32, i32) {
    %c0_i32 = arith.constant 0 : i32
    %c0_i32_0 = arith.constant 0 : i32
    %c0_i32_1 = arith.constant 0 : i32
    return %c0_i32, %c0_i32_0 : i32, i32
  }
  func.func @transform_7(%arg0: i32) -> (i32, i32, i32) {
    %c0_i32 = arith.constant 0 : i32
    %c0_i32_0 = arith.constant 0 : i32
    %c0_i32_1 = arith.constant 0 : i32
    return %arg0, %c0_i32, %c0_i32_0 : i32, i32, i32
  }
}

</mosaic_0001>

<llo_original>
// kernel: tpu_custom_call.1
$region0: #{tpu_custom_call.1}
  #allocation0 [shape = 'u32[]', space=smem, size = 0x4, offset = 0x4, fixed_abs, tag = 'smem constant byte address 0x4 - core index']
  #allocation1 [shape = 'u32[144,128]{1,0:T(1,128)}', space=vmem, size = 0x12000, scoped, tag = 'internal scratch']
  #allocation2 [shape = 'f32[18,18,8]{2,1,0:T(8,128)}', space=vmem, size = 0x36000, scoped, tag = 'scratch operand']
  #allocation3 [shape = 'f32[256,72]{1,0:T(8,128)}', space=vmem, size = 0x20000, scoped, tag = 'scratch operand']
  %s0 = inlined_call_operand.vmem [shape: f32[2,256,4], index: 0, kind: input, shape index: {}]
  %s1 = inlined_call_operand.vmem [shape: f32[1,4], index: 1, kind: input, shape index: {}]
  %s2 = inlined_call_operand.vmem [shape: f32[1,4], index: 2, kind: input, shape index: {}]
  %s3 = inlined_call_operand.vmem [shape: f32[4,8], index: 3, kind: input, shape index: {}]
  %s4 = inlined_call_operand.vmem [shape: f32[1,8], index: 4, kind: input, shape index: {}]
  %s5 = inlined_call_operand.vmem [shape: f32[1,8], index: 5, kind: input, shape index: {}]
  %s6 = inlined_call_operand.vmem [shape: f32[72,4], index: 6, kind: input, shape index: {}]
  %s7 = inlined_call_operand.vmem [shape: f32[2,256,8], index: 7, kind: output, shape index: {}]
  %s8 = sld [smem:[#allocation0]]
  $region61: #{tpu_custom_call.1} parent=0
    _
  %s10 = ssub.s32 1, %s8
  %s11 = scalar_select 0, %s10, %s8
  loop: start=0, step=1, limit=4
  $region2: #{tpu_custom_call.1} parent=0 // loop_pre_header
    _
  $region3: #{tpu_custom_call.1} parent=0 // loop_header
    %s13 = sphi 0, %s17
    %p14 = scmp.ge.s32.totalorder %s13, 4
    %s23 = sphi 0, %s25
    %s26 = sphi 0, %s23
    %s27 = sphi 0, %s26
    %s43 = sphi 0, %s27
    %s47 = sphi 0, %s47
    %s49 = sphi 0, %s47
    %s50 = sphi 0, %s49
    %s64 = sphi 0, %s50
    %s68 = sphi 0, %s68
    %s70 = sphi 0, %s68
    %s71 = sphi 0, %s70
    %s85 = sphi 0, %s71
    %s89 = sphi 0, %s89
    %s91 = sphi 0, %s89
    %s92 = sphi 0, %s91
    %s106 = sphi 0, %s92
    %s110 = sphi 0, %s110
    %s112 = sphi 0, %s110
    %s113 = sphi 0, %s112
    %s127 = sphi 0, %s113
    %s131 = sphi 0, %s131
    %s133 = sphi 0, %s131
    %s134 = sphi 0, %s133
    %s148 = sphi 0, %s134
    %s152 = sphi 0, %s152
    %s154 = sphi 0, %s152
    %s155 = sphi 0, %s154
    %s169 = sphi 0, %s155
    %s175 = sphi 0, %s177
    %s178 = sphi 0, %s175
    %s179 = sphi 0, %s178
    %s195 = sphi 0, %s179
  $region4: #{tpu_custom_call.1} parent=0 // loop_header_branch
    %16 = sbr.rel (%p14) target = $region8
  $region5: #{tpu_custom_call.1} parent=0 // loop_body
    %s18 = ssub.s32 %s13, 1
    %s19 = ssub.s32 %s13, 2
    %s20 = sadd.s32 %s13, 1
    %s21 = ssub.s32 %s13, %s20
    %p22 = scmp.eq.s32.totalorder %s21, 0
    %s24 = sadd.s32 %s23, 1
    %s25 = scalar_select %p22, %s23, %s24
    %p28 = pneg %p22
    %p29 = scmp.eq.s32.totalorder %s13, 1
    %p30 = por %p28, %p29
    %p31 = scmp.ne.s32.totalorder %s23, %s26
    %p32 = scmp.eq.s32.totalorder %s13, 0
    %p33 = por %p31, %p32
    %p34 = scmp.ne.s32.totalorder %s23, %s26
    %p35 = scmp.eq.s32.totalorder %s18, 1
    %p36 = por %p34, %p35
    %p37 = scmp.ne.s32.totalorder %s26, %s27
    %p38 = scmp.eq.s32.totalorder %s18, 0
    %p39 = por %p37, %p38
    %p40 = scmp.ne.s32.totalorder %s26, %s27
    %p41 = scmp.eq.s32.totalorder %s19, 1
    %p42 = por %p40, %p41
    %p44 = scmp.ne.s32.totalorder %s27, %s43
    %p45 = scmp.eq.s32.totalorder %s19, 0
    %p46 = por %p44, %p45
    %s48 = sadd.s32 %s47, 1
    %p51 = scmp.eq.s32.totalorder %s13, 1
    %p52 = scmp.ne.s32.totalorder %s47, %s49
    %p53 = scmp.eq.s32.totalorder %s13, 0
    %p54 = por %p52, %p53
    %p55 = scmp.ne.s32.totalorder %s47, %s49
    %p56 = scmp.eq.s32.totalorder %s18, 1
    %p57 = por %p55, %p56
    %p58 = scmp.ne.s32.totalorder %s49, %s50
    %p59 = scmp.eq.s32.totalorder %s18, 0
    %p60 = por %p58, %p59
    %p61 = scmp.ne.s32.totalorder %s49, %s50
    %p62 = scmp.eq.s32.totalorder %s19, 1
    %p63 = por %p61, %p62
    %p65 = scmp.ne.s32.totalorder %s50, %s64
    %p66 = scmp.eq.s32.totalorder %s19, 0
    %p67 = por %p65, %p66
    %s69 = sadd.s32 %s68, 1
    %p72 = scmp.eq.s32.totalorder %s13, 1
    %p73 = scmp.ne.s32.totalorder %s68, %s70
    %p74 = scmp.eq.s32.totalorder %s13, 0
    %p75 = por %p73, %p74
    %p76 = scmp.ne.s32.totalorder %s68, %s70
    %p77 = scmp.eq.s32.totalorder %s18, 1
    %p78 = por %p76, %p77
    %p79 = scmp.ne.s32.totalorder %s70, %s71
    %p80 = scmp.eq.s32.totalorder %s18, 0
    %p81 = por %p79, %p80
    %p82 = scmp.ne.s32.totalorder %s70, %s71
    %p83 = scmp.eq.s32.totalorder %s19, 1
    %p84 = por %p82, %p83
    %p86 = scmp.ne.s32.totalorder %s71, %s85
    %p87 = scmp.eq.s32.totalorder %s19, 0
    %p88 = por %p86, %p87
    %s90 = sadd.s32 %s89, 1
    %p93 = scmp.eq.s32.totalorder %s13, 1
    %p94 = scmp.ne.s32.totalorder %s89, %s91
    %p95 = scmp.eq.s32.totalorder %s13, 0
    %p96 = por %p94, %p95
    %p97 = scmp.ne.s32.totalorder %s89, %s91
    %p98 = scmp.eq.s32.totalorder %s18, 1
    %p99 = por %p97, %p98
    %p100 = scmp.ne.s32.totalorder %s91, %s92
    %p101 = scmp.eq.s32.totalorder %s18, 0
    %p102 = por %p100, %p101
    %p103 = scmp.ne.s32.totalorder %s91, %s92
    %p104 = scmp.eq.s32.totalorder %s19, 1
    %p105 = por %p103, %p104
    %p107 = scmp.ne.s32.totalorder %s92, %s106
    %p108 = scmp.eq.s32.totalorder %s19, 0
    %p109 = por %p107, %p108
    %s111 = sadd.s32 %s110, 1
    %p114 = scmp.eq.s32.totalorder %s13, 1
    %p115 = scmp.ne.s32.totalorder %s110, %s112
    %p116 = scmp.eq.s32.totalorder %s13, 0
    %p117 = por %p115, %p116
    %p118 = scmp.ne.s32.totalorder %s110, %s112
    %p119 = scmp.eq.s32.totalorder %s18, 1
    %p120 = por %p118, %p119
    %p121 = scmp.ne.s32.totalorder %s112, %s113
    %p122 = scmp.eq.s32.totalorder %s18, 0
    %p123 = por %p121, %p122
    %p124 = scmp.ne.s32.totalorder %s112, %s113
    %p125 = scmp.eq.s32.totalorder %s19, 1
    %p126 = por %p124, %p125
    %p128 = scmp.ne.s32.totalorder %s113, %s127
    %p129 = scmp.eq.s32.totalorder %s19, 0
    %p130 = por %p128, %p129
    %s132 = sadd.s32 %s131, 1
    %p135 = scmp.eq.s32.totalorder %s13, 1
    %p136 = scmp.ne.s32.totalorder %s131, %s133
    %p137 = scmp.eq.s32.totalorder %s13, 0
    %p138 = por %p136, %p137
    %p139 = scmp.ne.s32.totalorder %s131, %s133
    %p140 = scmp.eq.s32.totalorder %s18, 1
    %p141 = por %p139, %p140
    %p142 = scmp.ne.s32.totalorder %s133, %s134
    %p143 = scmp.eq.s32.totalorder %s18, 0
    %p144 = por %p142, %p143
    %p145 = scmp.ne.s32.totalorder %s133, %s134
    %p146 = scmp.eq.s32.totalorder %s19, 1
    %p147 = por %p145, %p146
    %p149 = scmp.ne.s32.totalorder %s134, %s148
    %p150 = scmp.eq.s32.totalorder %s19, 0
    %p151 = por %p149, %p150
    %s153 = sadd.s32 %s152, 1
    %p156 = scmp.eq.s32.totalorder %s13, 1
    %p157 = scmp.ne.s32.totalorder %s152, %s154
    %p158 = scmp.eq.s32.totalorder %s13, 0
    %p159 = por %p157, %p158
    %p160 = scmp.ne.s32.totalorder %s152, %s154
    %p161 = scmp.eq.s32.totalorder %s18, 1
    %p162 = por %p160, %p161
    %p163 = scmp.ne.s32.totalorder %s154, %s155
    %p164 = scmp.eq.s32.totalorder %s18, 0
    %p165 = por %p163, %p164
    %p166 = scmp.ne.s32.totalorder %s154, %s155
    %p167 = scmp.eq.s32.totalorder %s19, 1
    %p168 = por %p166, %p167
    %p170 = scmp.ne.s32.totalorder %s155, %s169
    %p171 = scmp.eq.s32.totalorder %s19, 0
    %p172 = por %p170, %p171
    %s173 = ssub.s32 %s13, %s20
    %p174 = scmp.eq.s32.totalorder %s173, 0
    %s176 = sadd.s32 %s175, 1
    %s177 = scalar_select %p174, %s175, %s176
    %p180 = pneg %p174
    %p181 = scmp.eq.s32.totalorder %s13, 1
    %p182 = por %p180, %p181
    %p183 = scmp.ne.s32.totalorder %s175, %s178
    %p184 = scmp.eq.s32.totalorder %s13, 0
    %p185 = por %p183, %p184
    %p186 = scmp.ne.s32.totalorder %s175, %s178
    %p187 = scmp.eq.s32.totalorder %s18, 1
    %p188 = por %p186, %p187
    %p189 = scmp.ne.s32.totalorder %s178, %s179
    %p190 = scmp.eq.s32.totalorder %s18, 0
    %p191 = por %p189, %p190
    %p192 = scmp.ne.s32.totalorder %s178, %s179
    %p193 = scmp.eq.s32.totalorder %s19, 1
    %p194 = por %p192, %p193
    %p196 = scmp.ne.s32.totalorder %s179, %s195
    %p197 = scmp.eq.s32.totalorder %s19, 0
    %p198 = por %p196, %p197
    %p199 = scmp.le.s32.totalorder 1, %s13
    %p200 = scmp.lt.s32.totalorder %s13, 3
    %p201 = pnand %p199, %p200
    %p202 = pneg %p201
    // Predicated region
    $region9: #{tpu_custom_call.1} parent=5 // pred_check
      _
    $region10: #{tpu_custom_call.1} parent=5 // pred_check_branch
      %204 = sbr.rel (%p201) target = $region12
    $region11: #{tpu_custom_call.1} parent=5 // pred_region
      %s205 = ssub.s32 %s13, 1
      // Predicated region
      $region13: #{tpu_custom_call.1} parent=11 // pred_check
        %p206 = pneg %p60
      $region14: #{tpu_custom_call.1} parent=11 // pred_check_branch
        %208 = sbr.rel (%p206) target = $region16
      $region15: #{tpu_custom_call.1} parent=11 // pred_region
        _
      $region16: #{tpu_custom_call.1} parent=11 // pred_fallthru
        _
      // Predicated region
      $region17: #{tpu_custom_call.1} parent=11 // pred_check
        %p209 = pneg %p81
      $region18: #{tpu_custom_call.1} parent=11 // pred_check_branch
        %211 = sbr.rel (%p209) target = $region20
      $region19: #{tpu_custom_call.1} parent=11 // pred_region
        _
      $region20: #{tpu_custom_call.1} parent=11 // pred_fallthru
        _
      // Predicated region
      $region21: #{tpu_custom_call.1} parent=11 // pred_check
        %p212 = pneg %p102
      $region22: #{tpu_custom_call.1} parent=11 // pred_check_branch
        %214 = sbr.rel (%p212) target = $region24
      $region23: #{tpu_custom_call.1} parent=11 // pred_region
        _
      $region24: #{tpu_custom_call.1} parent=11 // pred_fallthru
        _
      // Predicated region
      $region25: #{tpu_custom_call.1} parent=11 // pred_check
        %p215 = pneg %p123
      $region26: #{tpu_custom_call.1} parent=11 // pred_check_branch
        %217 = sbr.rel (%p215) target = $region28
      $region27: #{tpu_custom_call.1} parent=11 // pred_region
        _
      $region28: #{tpu_custom_call.1} parent=11 // pred_fallthru
        _
      // Predicated region
      $region29: #{tpu_custom_call.1} parent=11 // pred_check
        %p218 = pneg %p144
      $region30: #{tpu_custom_call.1} parent=11 // pred_check_branch
        %220 = sbr.rel (%p218) target = $region32
      $region31: #{tpu_custom_call.1} parent=11 // pred_region
        _
      $region32: #{tpu_custom_call.1} parent=11 // pred_fallthru
        _
      // Predicated region
      $region33: #{tpu_custom_call.1} parent=11 // pred_check
        %p221 = pneg %p165
      $region34: #{tpu_custom_call.1} parent=11 // pred_check_branch
        %223 = sbr.rel (%p221) target = $region36
      $region35: #{tpu_custom_call.1} parent=11 // pred_region
        _
      $region36: #{tpu_custom_call.1} parent=11 // pred_fallthru
        _
    $region12: #{tpu_custom_call.1} parent=5 // pred_fallthru
      _
    %p224 = scmp.lt.s32.totalorder %s13, 2
    // Predicated region
    $region37: #{tpu_custom_call.1} parent=5 // pred_check
      %p225 = pneg %p224
    $region38: #{tpu_custom_call.1} parent=5 // pred_check_branch
      %227 = sbr.rel (%p225) target = $region40
    $region39: #{tpu_custom_call.1} parent=5 // pred_region
      // Predicated region
      $region41: #{tpu_custom_call.1} parent=39 // pred_check
        %p228 = pneg %p33
      $region42: #{tpu_custom_call.1} parent=39 // pred_check_branch
        %230 = sbr.rel (%p228) target = $region44
      $region43: #{tpu_custom_call.1} parent=39 // pred_region
        %p231 = scmp.lt.s32.totalorder %s13, 1
        %s232 = scalar_select %p231, %s13, 1
        %s233 = smul.addr %s232, 32
        %s234 = smul.addr %s233, 8
        %s235 = scalar_lea.vmem %s0, %s234
      $region44: #{tpu_custom_call.1} parent=39 // pred_fallthru
        _
    $region40: #{tpu_custom_call.1} parent=5 // pred_fallthru
      _
    %p236 = scmp.le.s32.totalorder 1, %s13
    %p237 = scmp.lt.s32.totalorder %s13, 3
    %p238 = pnand %p236, %p237
    %p239 = pneg %p238
    // Predicated region
    $region45: #{tpu_custom_call.1} parent=5 // pred_check
      _
    $region46: #{tpu_custom_call.1} parent=5 // pred_check_branch
      %241 = sbr.rel (%p238) target = $region48
    $region47: #{tpu_custom_call.1} parent=5 // pred_region
      %s242 = ssub.s32 %s13, 1
      %p243 = scmp.lt.s32.totalorder %s18, 1
      %s244 = scalar_select %p243, %s18, 1
      %s245 = smul.addr %s244, 32
      %s246 = smul.addr %s245, 8
      %s247 = scalar_lea.vmem %s0, %s246
      %p248 = pneg %p39
      %p249 = pneg %p36
      %p250 = pneg %p60
      %p251 = pneg %p57
      %p252 = pneg %p81
      %p253 = pneg %p78
      %p254 = pneg %p102
      %p255 = pneg %p99
      %p256 = pneg %p123
      %p257 = pneg %p120
      %p258 = pneg %p144
      %p259 = pneg %p141
      %p260 = pneg %p165
      %p261 = pneg %p162
      %p262 = pneg %p191
      %p263 = pneg %p188
      %p264 = scmp.lt.s32.totalorder %s18, 1
      %s265 = scalar_select %p264, %s18, 1
      %s266 = smul.addr %s265, 32
      %s267 = smul.addr %s266, 8
      %s268 = scalar_lea.vmem %s7, %s267
      %p269 = scmp.lt.s32.totalorder %s18, 1
      %s270 = scalar_select %p269, %s18, 1
      %s271 = smul.addr %s270, 32
      %s272 = smul.addr %s271, 8
      %s273 = scalar_lea.vmem %s0, %s272
      %p274 = scmp.lt.s32.totalorder %s18, 1
      %s275 = scalar_select %p274, %s18, 1
      %s276 = smul.addr %s275, 32
      %s277 = smul.addr %s276, 8
      %s278 = scalar_lea.vmem %s7, %s277
      %v279 = vld [vmem:[%s273] sm:$0xff]
      %v280 = vld [vmem:[%s273 + $0x8] sm:$0xff]
      %v281 = vld [vmem:[%s273 + $0x10] sm:$0xff]
      %v282 = vld [vmem:[%s273 + $0x18] sm:$0xff]
      %v283 = vld [vmem:[%s273 + $0x20] sm:$0xff]
      %v284 = vld [vmem:[%s273 + $0x28] sm:$0xff]
      %v285 = vld [vmem:[%s273 + $0x30] sm:$0xff]
      %v286 = vld [vmem:[%s273 + $0x38] sm:$0xff]
      %v287 = vld [vmem:[%s273 + $0x40] sm:$0xff]
      %v288 = vld [vmem:[%s273 + $0x48] sm:$0xff]
      %v289 = vld [vmem:[%s273 + $0x50] sm:$0xff]
      %v290 = vld [vmem:[%s273 + $0x58] sm:$0xff]
      %v291 = vld [vmem:[%s273 + $0x60] sm:$0xff]
      %v292 = vld [vmem:[%s273 + $0x68] sm:$0xff]
      %v293 = vld [vmem:[%s273 + $0x70] sm:$0xff]
      %v294 = vld [vmem:[%s273 + $0x78] sm:$0xff]
      %v295 = vld [vmem:[%s273 + $0x80] sm:$0xff]
      %v296 = vld [vmem:[%s273 + $0x88] sm:$0xff]
      %v297 = vld [vmem:[%s273 + $0x90] sm:$0xff]
      %v298 = vld [vmem:[%s273 + $0x98] sm:$0xff]
      %v299 = vld [vmem:[%s273 + $0xa0] sm:$0xff]
      %v300 = vld [vmem:[%s273 + $0xa8] sm:$0xff]
      %v301 = vld [vmem:[%s273 + $0xb0] sm:$0xff]
      %v302 = vld [vmem:[%s273 + $0xb8] sm:$0xff]
      %v303 = vld [vmem:[%s273 + $0xc0] sm:$0xff]
      %v304 = vld [vmem:[%s273 + $0xc8] sm:$0xff]
      %v305 = vld [vmem:[%s273 + $0xd0] sm:$0xff]
      %v306 = vld [vmem:[%s273 + $0xd8] sm:$0xff]
      %v307 = vld [vmem:[%s273 + $0xe0] sm:$0xff]
      %v308 = vld [vmem:[%s273 + $0xe8] sm:$0xff]
      %v309 = vld [vmem:[%s273 + $0xf0] sm:$0xff]
      %v310 = vld [vmem:[%s273 + $0xf8] sm:$0xff]
      %v311 = vld [vmem:[%s1] sm:$0x1]
      %v313 = vlaneseq
      %v314 = vshrl.u32 %v313, 7
      %v315 = vsub.s32 0, %v314
      %v316 = vrot.slane %v311, %v315
      %v318 = vmul.f32 %v279, %v316
      %v319 = vmul.f32 %v280, %v316
      %v320 = vmul.f32 %v281, %v316
      %v321 = vmul.f32 %v282, %v316
      %v322 = vmul.f32 %v283, %v316
      %v323 = vmul.f32 %v284, %v316
      %v324 = vmul.f32 %v285, %v316
      %v325 = vmul.f32 %v286, %v316
      %v326 = vmul.f32 %v287, %v316
      %v327 = vmul.f32 %v288, %v316
      %v328 = vmul.f32 %v289, %v316
      %v329 = vmul.f32 %v290, %v316
      %v330 = vmul.f32 %v291, %v316
      %v331 = vmul.f32 %v292, %v316
      %v332 = vmul.f32 %v293, %v316
      %v333 = vmul.f32 %v294, %v316
      %v334 = vmul.f32 %v295, %v316
      %v335 = vmul.f32 %v296, %v316
      %v336 = vmul.f32 %v297, %v316
      %v337 = vmul.f32 %v298, %v316
      %v338 = vmul.f32 %v299, %v316
      %v339 = vmul.f32 %v300, %v316
      %v340 = vmul.f32 %v301, %v316
      %v341 = vmul.f32 %v302, %v316
      %v342 = vmul.f32 %v303, %v316
      %v343 = vmul.f32 %v304, %v316
      %v344 = vmul.f32 %v305, %v316
      %v345 = vmul.f32 %v306, %v316
      %v346 = vmul.f32 %v307, %v316
      %v347 = vmul.f32 %v308, %v316
      %v348 = vmul.f32 %v309, %v316
      %v349 = vmul.f32 %v310, %v316
      %v350 = vld [vmem:[%s2] sm:$0x1]
      %v352 = vlaneseq
      %v353 = vshrl.u32 %v352, 7
      %v354 = vsub.s32 0, %v353
      %v355 = vrot.slane %v350, %v354
      %v357 = vadd.f32 %v318, %v355
      %v358 = vadd.f32 %v319, %v355
      %v359 = vadd.f32 %v320, %v355
      %v360 = vadd.f32 %v321, %v355
      %v361 = vadd.f32 %v322, %v355
      %v362 = vadd.f32 %v323, %v355
      %v363 = vadd.f32 %v324, %v355
      %v364 = vadd.f32 %v325, %v355
      %v365 = vadd.f32 %v326, %v355
      %v366 = vadd.f32 %v327, %v355
      %v367 = vadd.f32 %v328, %v355
      %v368 = vadd.f32 %v329, %v355
      %v369 = vadd.f32 %v330, %v355
      %v370 = vadd.f32 %v331, %v355
      %v371 = vadd.f32 %v332, %v355
      %v372 = vadd.f32 %v333, %v355
      %v373 = vadd.f32 %v334, %v355
      %v374 = vadd.f32 %v335, %v355
      %v375 = vadd.f32 %v336, %v355
      %v376 = vadd.f32 %v337, %v355
      %v377 = vadd.f32 %v338, %v355
      %v378 = vadd.f32 %v339, %v355
      %v379 = vadd.f32 %v340, %v355
      %v380 = vadd.f32 %v341, %v355
      %v381 = vadd.f32 %v342, %v355
      %v382 = vadd.f32 %v343, %v355
      %v383 = vadd.f32 %v344, %v355
      %v384 = vadd.f32 %v345, %v355
      %v385 = vadd.f32 %v346, %v355
      %v386 = vadd.f32 %v347, %v355
      %v387 = vadd.f32 %v348, %v355
      %v388 = vadd.f32 %v349, %v355
      %v389 = vmax.f32 %v357, 0.0
      %v390 = vmax.f32 %v358, 0.0
      %v391 = vmax.f32 %v359, 0.0
      %v392 = vmax.f32 %v360, 0.0
      %v393 = vmax.f32 %v361, 0.0
      %v394 = vmax.f32 %v362, 0.0
      %v395 = vmax.f32 %v363, 0.0
      %v396 = vmax.f32 %v364, 0.0
      %v397 = vmax.f32 %v365, 0.0
      %v398 = vmax.f32 %v366, 0.0
      %v399 = vmax.f32 %v367, 0.0
      %v400 = vmax.f32 %v368, 0.0
      %v401 = vmax.f32 %v369, 0.0
      %v402 = vmax.f32 %v370, 0.0
      %v403 = vmax.f32 %v371, 0.0
      %v404 = vmax.f32 %v372, 0.0
      %v405 = vmax.f32 %v373, 0.0
      %v406 = vmax.f32 %v374, 0.0
      %v407 = vmax.f32 %v375, 0.0
      %v408 = vmax.f32 %v376, 0.0
      %v409 = vmax.f32 %v377, 0.0
      %v410 = vmax.f32 %v378, 0.0
      %v411 = vmax.f32 %v379, 0.0
      %v412 = vmax.f32 %v380, 0.0
      %v413 = vmax.f32 %v381, 0.0
      %v414 = vmax.f32 %v382, 0.0
      %v415 = vmax.f32 %v383, 0.0
      %v416 = vmax.f32 %v384, 0.0
      %v417 = vmax.f32 %v385, 0.0
      %v418 = vmax.f32 %v386, 0.0
      %v419 = vmax.f32 %v387, 0.0
      %v420 = vmax.f32 %v388, 0.0
      %v421 = vld [vmem:[%s3] sm:$0xf]
      %vm422 = vcmask 31744
      %v424 = vsel %vm422, %v389, 0
      %v427 = vsel %vm422, %v390, 0
      %v430 = vsel %vm422, %v391, 0
      %v433 = vsel %vm422, %v392, 0
      %v436 = vsel %vm422, %v393, 0
      %v439 = vsel %vm422, %v394, 0
      %v442 = vsel %vm422, %v395, 0
      %v445 = vsel %vm422, %v396, 0
      %v448 = vsel %vm422, %v397, 0
      %v451 = vsel %vm422, %v398, 0
      %v454 = vsel %vm422, %v399, 0
      %v457 = vsel %vm422, %v400, 0
      %v460 = vsel %vm422, %v401, 0
      %v463 = vsel %vm422, %v402, 0
      %v466 = vsel %vm422, %v403, 0
      %v469 = vsel %vm422, %v404, 0
      %v472 = vsel %vm422, %v405, 0
      %v475 = vsel %vm422, %v406, 0
      %v478 = vsel %vm422, %v407, 0
      %v481 = vsel %vm422, %v408, 0
      %v484 = vsel %vm422, %v409, 0
      %v487 = vsel %vm422, %v410, 0
      %v490 = vsel %vm422, %v411, 0
      %v493 = vsel %vm422, %v412, 0
      %v496 = vsel %vm422, %v413, 0
      %v499 = vsel %vm422, %v414, 0
      %v502 = vsel %vm422, %v415, 0
      %v505 = vsel %vm422, %v416, 0
      %v508 = vsel %vm422, %v417, 0
      %v511 = vsel %vm422, %v418, 0
      %v514 = vsel %vm422, %v419, 0
      %v517 = vsel %vm422, %v420, 0
      %vm519 = vcmask 1043456
      %v521 = vsel %vm519, %v421, 0
      %523 = vmatprep.subr.mxu0 0.0
      %524 = vmatpush1.msra.mxu0 %v521
      %525 = vmatprep.subr.mxu0 0.0
      %526 = vmatpush1.msra.mxu0 0.0
      %527 = vmatprep.subr.mxu0 0.0
      %528 = vmatpush1.msra.mxu0 0.0
      %529 = vmatprep.subr.mxu0 0.0
      %530 = vmatpush1.msra.mxu0 0.0
      %531 = vmatprep.subr.mxu0 0.0
      %532 = vmatpush1.msra.mxu0 0.0
      %533 = vmatprep.subr.mxu0 0.0
      %534 = vmatpush1.msra.mxu0 0.0
      %535 = vmatprep.subr.mxu0 0.0
      %536 = vmatpush1.msra.mxu0 0.0
      %537 = vmatprep.subr.mxu0 0.0
      %538 = vmatpush1.msra.mxu0 0.0
      %539 = vmatprep.subr.mxu0 0.0
      %540 = vmatpush1.msra.mxu0 0.0
      %541 = vmatprep.subr.mxu0 0.0
      %542 = vmatpush1.msra.mxu0 0.0
      %543 = vmatprep.subr.mxu0 0.0
      %544 = vmatpush1.msra.mxu0 0.0
      %545 = vmatprep.subr.mxu0 0.0
      %546 = vmatpush1.msra.mxu0 0.0
      %547 = vmatprep.subr.mxu0 0.0
      %548 = vmatpush1.msra.mxu0 0.0
      %549 = vmatprep.subr.mxu0 0.0
      %550 = vmatpush1.msra.mxu0 0.0
      %551 = vmatprep.subr.mxu0 0.0
      %552 = vmatpush1.msra.mxu0 0.0
      %553 = vmatprep.subr.mxu0 0.0
      %554 = vmatpush1.msra.mxu0 0.0
      %555 = vmatprep.subr.mxu0 0.0
      %556 = vmatpush1.msra.mxu0 0.0
      %557 = vmatprep.subr.mxu0 0.0
      %558 = vmatpush1.msra.mxu0 0.0
      %559 = vmatprep.subr.mxu0 0.0
      %560 = vmatpush1.msra.mxu0 0.0
      %561 = vmatprep.subr.mxu0 0.0
      %562 = vmatpush1.msra.mxu0 0.0
      %563 = vmatprep.subr.mxu0 0.0
      %564 = vmatpush1.msra.mxu0 0.0
      %565 = vmatprep.subr.mxu0 0.0
      %566 = vmatpush1.msra.mxu0 0.0
      %567 = vmatprep.subr.mxu0 0.0
      %568 = vmatpush1.msra.mxu0 0.0
      %569 = vmatprep.subr.mxu0 0.0
      %570 = vmatpush1.msra.mxu0 0.0
      %571 = vmatprep.subr.mxu0 0.0
      %572 = vmatpush1.msra.mxu0 0.0
      %573 = vmatprep.subr.mxu0 0.0
      %574 = vmatpush1.msra.mxu0 0.0
      %575 = vmatprep.subr.mxu0 0.0
      %576 = vmatpush1.msra.mxu0 0.0
      %577 = vmatprep.subr.mxu0 0.0
      %578 = vmatpush1.msra.mxu0 0.0
      %579 = vmatprep.subr.mxu0 0.0
      %580 = vmatpush1.msra.mxu0 0.0
      %581 = vmatprep.subr.mxu0 0.0
      %582 = vmatpush1.msra.mxu0 0.0
      %583 = vmatprep.subr.mxu0 0.0
      %584 = vmatpush1.msra.mxu0 0.0
      %585 = vmatprep.subr.mxu0 0.0
      %586 = vmatpush1.msra.mxu0 0.0
      %587 = vmatprep.mubr.f32.mxu0 0.0
      %588 = vmatmul.mubr.f32.gmra.mrb[0].mxu0 %v424
      %v589 = vpop.f32.mrb[0].mxu0
      %v590 = vadd.f32 0.0, %v589
      %v591 = vpop.f32.mrb[0].mxu0
      %592 = vmatprep.mubr.f32.mxu0 0.0
      %593 = vmatmul.mubr.f32.gmra.mrb[0].mxu0 %v427
      %v594 = vpop.f32.mrb[0].mxu0
      %v595 = vadd.f32 0.0, %v594
      %v596 = vpop.f32.mrb[0].mxu0
      %597 = vmatprep.mubr.f32.mxu0 0.0
      %598 = vmatmul.mubr.f32.gmra.mrb[0].mxu0 %v430
      %v599 = vpop.f32.mrb[0].mxu0
      %v600 = vadd.f32 0.0, %v599
      %v601 = vpop.f32.mrb[0].mxu0
      %602 = vmatprep.mubr.f32.mxu0 0.0
      %603 = vmatmul.mubr.f32.gmra.mrb[0].mxu0 %v433
      %v604 = vpop.f32.mrb[0].mxu0
      %v605 = vadd.f32 0.0, %v604
      %v606 = vpop.f32.mrb[0].mxu0
      %607 = vmatprep.mubr.f32.mxu0 0.0
      %608 = vmatmul.mubr.f32.gmra.mrb[0].mxu0 %v436
      %v609 = vpop.f32.mrb[0].mxu0
      %v610 = vadd.f32 0.0, %v609
      %v611 = vpop.f32.mrb[0].mxu0
      %612 = vmatprep.mubr.f32.mxu0 0.0
      %613 = vmatmul.mubr.f32.gmra.mrb[0].mxu0 %v439
      %v614 = vpop.f32.mrb[0].mxu0
      %v615 = vadd.f32 0.0, %v614
      %v616 = vpop.f32.mrb[0].mxu0
      %617 = vmatprep.mubr.f32.mxu0 0.0
      %618 = vmatmul.mubr.f32.gmra.mrb[0].mxu0 %v442
      %v619 = vpop.f32.mrb[0].mxu0
      %v620 = vadd.f32 0.0, %v619
      %v621 = vpop.f32.mrb[0].mxu0
      %622 = vmatprep.mubr.f32.mxu0 0.0
      %623 = vmatmul.mubr.f32.gmra.mrb[0].mxu0 %v445
      %v624 = vpop.f32.mrb[0].mxu0
      %v625 = vadd.f32 0.0, %v624
      %v626 = vpop.f32.mrb[0].mxu0
      %627 = vmatprep.mubr.f32.mxu0 0.0
      %628 = vmatmul.mubr.f32.gmra.mrb[0].mxu0 %v448
      %v629 = vpop.f32.mrb[0].mxu0
      %v630 = vadd.f32 0.0, %v629
      %v631 = vpop.f32.mrb[0].mxu0
      %632 = vmatprep.mubr.f32.mxu0 0.0
      %633 = vmatmul.mubr.f32.gmra.mrb[0].mxu0 %v451
      %v634 = vpop.f32.mrb[0].mxu0
      %v635 = vadd.f32 0.0, %v634
      %v636 = vpop.f32.mrb[0].mxu0
      %637 = vmatprep.mubr.f32.mxu0 0.0
      %638 = vmatmul.mubr.f32.gmra.mrb[0].mxu0 %v454
      %v639 = vpop.f32.mrb[0].mxu0
      %v640 = vadd.f32 0.0, %v639
      %v641 = vpop.f32.mrb[0].mxu0
      %642 = vmatprep.mubr.f32.mxu0 0.0
      %643 = vmatmul.mubr.f32.gmra.mrb[0].mxu0 %v457
      %v644 = vpop.f32.mrb[0].mxu0
      %v645 = vadd.f32 0.0, %v644
      %v646 = vpop.f32.mrb[0].mxu0
      %647 = vmatprep.mubr.f32.mxu0 0.0
      %648 = vmatmul.mubr.f32.gmra.mrb[0].mxu0 %v460
      %v649 = vpop.f32.mrb[0].mxu0
      %v650 = vadd.f32 0.0, %v649
      %v651 = vpop.f32.mrb[0].mxu0
      %652 = vmatprep.mubr.f32.mxu0 0.0
      %653 = vmatmul.mubr.f32.gmra.mrb[0].mxu0 %v463
      %v654 = vpop.f32.mrb[0].mxu0
      %v655 = vadd.f32 0.0, %v654
      %v656 = vpop.f32.mrb[0].mxu0
      %657 = vmatprep.mubr.f32.mxu0 0.0
      %658 = vmatmul.mubr.f32.gmra.mrb[0].mxu0 %v466
      %v659 = vpop.f32.mrb[0].mxu0
      %v660 = vadd.f32 0.0, %v659
      %v661 = vpop.f32.mrb[0].mxu0
      %662 = vmatprep.mubr.f32.mxu0 0.0
      %663 = vmatmul.mubr.f32.gmra.mrb[0].mxu0 %v469
      %v664 = vpop.f32.mrb[0].mxu0
      %v665 = vadd.f32 0.0, %v664
      %v666 = vpop.f32.mrb[0].mxu0
      %667 = vmatprep.mubr.f32.mxu0 0.0
      %668 = vmatmul.mubr.f32.gmra.mrb[0].mxu0 %v472
      %v669 = vpop.f32.mrb[0].mxu0
      %v670 = vadd.f32 0.0, %v669
      %v671 = vpop.f32.mrb[0].mxu0
      %672 = vmatprep.mubr.f32.mxu0 0.0
      %673 = vmatmul.mubr.f32.gmra.mrb[0].mxu0 %v475
      %v674 = vpop.f32.mrb[0].mxu0
      %v675 = vadd.f32 0.0, %v674
      %v676 = vpop.f32.mrb[0].mxu0
      %677 = vmatprep.mubr.f32.mxu0 0.0
      %678 = vmatmul.mubr.f32.gmra.mrb[0].mxu0 %v478
      %v679 = vpop.f32.mrb[0].mxu0
      %v680 = vadd.f32 0.0, %v679
      %v681 = vpop.f32.mrb[0].mxu0
      %682 = vmatprep.mubr.f32.mxu0 0.0
      %683 = vmatmul.mubr.f32.gmra.mrb[0].mxu0 %v481
      %v684 = vpop.f32.mrb[0].mxu0
      %v685 = vadd.f32 0.0, %v684
      %v686 = vpop.f32.mrb[0].mxu0
      %687 = vmatprep.mubr.f32.mxu0 0.0
      %688 = vmatmul.mubr.f32.gmra.mrb[0].mxu0 %v484
      %v689 = vpop.f32.mrb[0].mxu0
      %v690 = vadd.f32 0.0, %v689
      %v691 = vpop.f32.mrb[0].mxu0
      %692 = vmatprep.mubr.f32.mxu0 0.0
      %693 = vmatmul.mubr.f32.gmra.mrb[0].mxu0 %v487
      %v694 = vpop.f32.mrb[0].mxu0
      %v695 = vadd.f32 0.0, %v694
      %v696 = vpop.f32.mrb[0].mxu0
      %697 = vmatprep.mubr.f32.mxu0 0.0
      %698 = vmatmul.mubr.f32.gmra.mrb[0].mxu0 %v490
      %v699 = vpop.f32.mrb[0].mxu0
      %v700 = vadd.f32 0.0, %v699
      %v701 = vpop.f32.mrb[0].mxu0
      %702 = vmatprep.mubr.f32.mxu0 0.0
      %703 = vmatmul.mubr.f32.gmra.mrb[0].mxu0 %v493
      %v704 = vpop.f32.mrb[0].mxu0
      %v705 = vadd.f32 0.0, %v704
      %v706 = vpop.f32.mrb[0].mxu0
      %707 = vmatprep.mubr.f32.mxu0 0.0
      %708 = vmatmul.mubr.f32.gmra.mrb[0].mxu0 %v496
      %v709 = vpop.f32.mrb[0].mxu0
      %v710 = vadd.f32 0.0, %v709
      %v711 = vpop.f32.mrb[0].mxu0
      %712 = vmatprep.mubr.f32.mxu0 0.0
      %713 = vmatmul.mubr.f32.gmra.mrb[0].mxu0 %v499
      %v714 = vpop.f32.mrb[0].mxu0
      %v715 = vadd.f32 0.0, %v714
      %v716 = vpop.f32.mrb[0].mxu0
      %717 = vmatprep.mubr.f32.mxu0 0.0
      %718 = vmatmul.mubr.f32.gmra.mrb[0].mxu0 %v502
      %v719 = vpop.f32.mrb[0].mxu0
      %v720 = vadd.f32 0.0, %v719
      %v721 = vpop.f32.mrb[0].mxu0
      %722 = vmatprep.mubr.f32.mxu0 0.0
      %723 = vmatmul.mubr.f32.gmra.mrb[0].mxu0 %v505
      %v724 = vpop.f32.mrb[0].mxu0
      %v725 = vadd.f32 0.0, %v724
      %v726 = vpop.f32.mrb[0].mxu0
      %727 = vmatprep.mubr.f32.mxu0 0.0
      %728 = vmatmul.mubr.f32.gmra.mrb[0].mxu0 %v508
      %v729 = vpop.f32.mrb[0].mxu0
      %v730 = vadd.f32 0.0, %v729
      %v731 = vpop.f32.mrb[0].mxu0
      %732 = vmatprep.mubr.f32.mxu0 0.0
      %733 = vmatmul.mubr.f32.gmra.mrb[0].mxu0 %v511
      %v734 = vpop.f32.mrb[0].mxu0
      %v735 = vadd.f32 0.0, %v734
      %v736 = vpop.f32.mrb[0].mxu0
      %737 = vmatprep.mubr.f32.mxu0 0.0
      %738 = vmatmul.mubr.f32.gmra.mrb[0].mxu0 %v514
      %v739 = vpop.f32.mrb[0].mxu0
      %v740 = vadd.f32 0.0, %v739
      %v741 = vpop.f32.mrb[0].mxu0
      %742 = vmatprep.mubr.f32.mxu0 0.0
      %743 = vmatmul.mubr.f32.gmra.mrb[0].mxu0 %v517
      %v744 = vpop.f32.mrb[0].mxu0
      %v745 = vadd.f32 0.0, %v744
      %v746 = vpop.f32.mrb[0].mxu0
      %747 = vdwg.mxu0
      %v748 = vld [vmem:[%s4] sm:$0x1]
      %v750 = vlaneseq
      %v751 = vshrl.u32 %v750, 7
      %v752 = vsub.s32 0, %v751
      %v753 = vrot.slane %v748, %v752
      %v755 = vmul.f32 %v590, %v753
      %v756 = vmul.f32 %v595, %v753
      %v757 = vmul.f32 %v600, %v753
      %v758 = vmul.f32 %v605, %v753
      %v759 = vmul.f32 %v610, %v753
      %v760 = vmul.f32 %v615, %v753
      %v761 = vmul.f32 %v620, %v753
      %v762 = vmul.f32 %v625, %v753
      %v763 = vmul.f32 %v630, %v753
      %v764 = vmul.f32 %v635, %v753
      %v765 = vmul.f32 %v640, %v753
      %v766 = vmul.f32 %v645, %v753
      %v767 = vmul.f32 %v650, %v753
      %v768 = vmul.f32 %v655, %v753
      %v769 = vmul.f32 %v660, %v753
      %v770 = vmul.f32 %v665, %v753
      %v771 = vmul.f32 %v670, %v753
      %v772 = vmul.f32 %v675, %v753
      %v773 = vmul.f32 %v680, %v753
      %v774 = vmul.f32 %v685, %v753
      %v775 = vmul.f32 %v690, %v753
      %v776 = vmul.f32 %v695, %v753
      %v777 = vmul.f32 %v700, %v753
      %v778 = vmul.f32 %v705, %v753
      %v779 = vmul.f32 %v710, %v753
      %v780 = vmul.f32 %v715, %v753
      %v781 = vmul.f32 %v720, %v753
      %v782 = vmul.f32 %v725, %v753
      %v783 = vmul.f32 %v730, %v753
      %v784 = vmul.f32 %v735, %v753
      %v785 = vmul.f32 %v740, %v753
      %v786 = vmul.f32 %v745, %v753
      %v787 = vld [vmem:[%s5] sm:$0x1]
      %v789 = vlaneseq
      %v790 = vshrl.u32 %v789, 7
      %v791 = vsub.s32 0, %v790
      %v792 = vrot.slane %v787, %v791
      %v794 = vadd.f32 %v755, %v792
      %v795 = vadd.f32 %v756, %v792
      %v796 = vadd.f32 %v757, %v792
      %v797 = vadd.f32 %v758, %v792
      %v798 = vadd.f32 %v759, %v792
      %v799 = vadd.f32 %v760, %v792
      %v800 = vadd.f32 %v761, %v792
      %v801 = vadd.f32 %v762, %v792
      %v802 = vadd.f32 %v763, %v792
      %v803 = vadd.f32 %v764, %v792
      %v804 = vadd.f32 %v765, %v792
      %v805 = vadd.f32 %v766, %v792
      %v806 = vadd.f32 %v767, %v792
      %v807 = vadd.f32 %v768, %v792
      %v808 = vadd.f32 %v769, %v792
      %v809 = vadd.f32 %v770, %v792
      %v810 = vadd.f32 %v771, %v792
      %v811 = vadd.f32 %v772, %v792
      %v812 = vadd.f32 %v773, %v792
      %v813 = vadd.f32 %v774, %v792
      %v814 = vadd.f32 %v775, %v792
      %v815 = vadd.f32 %v776, %v792
      %v816 = vadd.f32 %v777, %v792
      %v817 = vadd.f32 %v778, %v792
      %v818 = vadd.f32 %v779, %v792
      %v819 = vadd.f32 %v780, %v792
      %v820 = vadd.f32 %v781, %v792
      %v821 = vadd.f32 %v782, %v792
      %v822 = vadd.f32 %v783, %v792
      %v823 = vadd.f32 %v784, %v792
      %v824 = vadd.f32 %v785, %v792
      %v825 = vadd.f32 %v786, %v792
      %v826 = vmax.f32 %v794, 0.0
      %v827 = vmax.f32 %v795, 0.0
      %v828 = vmax.f32 %v796, 0.0
      %v829 = vmax.f32 %v797, 0.0
      %v830 = vmax.f32 %v798, 0.0
      %v831 = vmax.f32 %v799, 0.0
      %v832 = vmax.f32 %v800, 0.0
      %v833 = vmax.f32 %v801, 0.0
      %v834 = vmax.f32 %v802, 0.0
      %v835 = vmax.f32 %v803, 0.0
      %v836 = vmax.f32 %v804, 0.0
      %v837 = vmax.f32 %v805, 0.0
      %v838 = vmax.f32 %v806, 0.0
      %v839 = vmax.f32 %v807, 0.0
      %v840 = vmax.f32 %v808, 0.0
      %v841 = vmax.f32 %v809, 0.0
      %v842 = vmax.f32 %v810, 0.0
      %v843 = vmax.f32 %v811, 0.0
      %v844 = vmax.f32 %v812, 0.0
      %v845 = vmax.f32 %v813, 0.0
      %v846 = vmax.f32 %v814, 0.0
      %v847 = vmax.f32 %v815, 0.0
      %v848 = vmax.f32 %v816, 0.0
      %v849 = vmax.f32 %v817, 0.0
      %v850 = vmax.f32 %v818, 0.0
      %v851 = vmax.f32 %v819, 0.0
      %v852 = vmax.f32 %v820, 0.0
      %v853 = vmax.f32 %v821, 0.0
      %v854 = vmax.f32 %v822, 0.0
      %v855 = vmax.f32 %v823, 0.0
      %v856 = vmax.f32 %v824, 0.0
      %v857 = vmax.f32 %v825, 0.0
      %vm858 = vcmask 64512
      %859 = vst.msk [vmem:[#allocation2] sm:$0xff] %vm858, 0.0
      %860 = vst.msk [vmem:[#allocation2 + $0x8] sm:$0xff] %vm858, 0.0
      %vm861 = vcmask 58368
      %862 = vst.msk [vmem:[#allocation2 + $0x10] sm:$0x3] %vm861, 0.0
      %863 = vst.msk [vmem:[#allocation2 + $0x18] sm:$0xff] %vm858, 0.0
      %864 = vst.msk [vmem:[#allocation2 + $0x20] sm:$0xff] %vm858, 0.0
      %865 = vst.msk [vmem:[#allocation2 + $0x28] sm:$0x3] %vm861, 0.0
      %866 = vst.msk [vmem:[#allocation2 + $0x30] sm:$0xff] %vm858, 0.0
      %867 = vst.msk [vmem:[#allocation2 + $0x38] sm:$0xff] %vm858, 0.0
      %868 = vst.msk [vmem:[#allocation2 + $0x40] sm:$0x3] %vm861, 0.0
      %869 = vst.msk [vmem:[#allocation2 + $0x48] sm:$0xff] %vm858, 0.0
      %870 = vst.msk [vmem:[#allocation2 + $0x50] sm:$0xff] %vm858, 0.0
      %871 = vst.msk [vmem:[#allocation2 + $0x58] sm:$0x3] %vm861, 0.0
      %872 = vst.msk [vmem:[#allocation2 + $0x60] sm:$0xff] %vm858, 0.0
      %873 = vst.msk [vmem:[#allocation2 + $0x68] sm:$0xff] %vm858, 0.0
      %874 = vst.msk [vmem:[#allocation2 + $0x70] sm:$0x3] %vm861, 0.0
      %875 = vst.msk [vmem:[#allocation2 + $0x78] sm:$0xff] %vm858, 0.0
      %876 = vst.msk [vmem:[#allocation2 + $0x80] sm:$0xff] %vm858, 0.0
      %877 = vst.msk [vmem:[#allocation2 + $0x88] sm:$0x3] %vm861, 0.0
      %878 = vst.msk [vmem:[#allocation2 + $0x90] sm:$0xff] %vm858, 0.0
      %879 = vst.msk [vmem:[#allocation2 + $0x98] sm:$0xff] %vm858, 0.0
      %880 = vst.msk [vmem:[#allocation2 + $0xa0] sm:$0x3] %vm861, 0.0
      %881 = vst.msk [vmem:[#allocation2 + $0xa8] sm:$0xff] %vm858, 0.0
      %882 = vst.msk [vmem:[#allocation2 + $0xb0] sm:$0xff] %vm858, 0.0
      %883 = vst.msk [vmem:[#allocation2 + $0xb8] sm:$0x3] %vm861, 0.0
      %884 = vst.msk [vmem:[#allocation2 + $0xc0] sm:$0xff] %vm858, 0.0
      %885 = vst.msk [vmem:[#allocation2 + $0xc8] sm:$0xff] %vm858, 0.0
      %886 = vst.msk [vmem:[#allocation2 + $0xd0] sm:$0x3] %vm861, 0.0
      %887 = vst.msk [vmem:[#allocation2 + $0xd8] sm:$0xff] %vm858, 0.0
      %888 = vst.msk [vmem:[#allocation2 + $0xe0] sm:$0xff] %vm858, 0.0
      %889 = vst.msk [vmem:[#allocation2 + $0xe8] sm:$0x3] %vm861, 0.0
      %890 = vst.msk [vmem:[#allocation2 + $0xf0] sm:$0xff] %vm858, 0.0
      %891 = vst.msk [vmem:[#allocation2 + $0xf8] sm:$0xff] %vm858, 0.0
      %892 = vst.msk [vmem:[#allocation2 + $0x100] sm:$0x3] %vm861, 0.0
      %893 = vst.msk [vmem:[#allocation2 + $0x108] sm:$0xff] %vm858, 0.0
      %894 = vst.msk [vmem:[#allocation2 + $0x110] sm:$0xff] %vm858, 0.0
      %895 = vst.msk [vmem:[#allocation2 + $0x118] sm:$0x3] %vm861, 0.0
      %896 = vst.msk [vmem:[#allocation2 + $0x120] sm:$0xff] %vm858, 0.0
      %897 = vst.msk [vmem:[#allocation2 + $0x128] sm:$0xff] %vm858, 0.0
      %898 = vst.msk [vmem:[#allocation2 + $0x130] sm:$0x3] %vm861, 0.0
      %899 = vst.msk [vmem:[#allocation2 + $0x138] sm:$0xff] %vm858, 0.0
      %900 = vst.msk [vmem:[#allocation2 + $0x140] sm:$0xff] %vm858, 0.0
      %901 = vst.msk [vmem:[#allocation2 + $0x148] sm:$0x3] %vm861, 0.0
      %902 = vst.msk [vmem:[#allocation2 + $0x150] sm:$0xff] %vm858, 0.0
      %903 = vst.msk [vmem:[#allocation2 + $0x158] sm:$0xff] %vm858, 0.0
      %904 = vst.msk [vmem:[#allocation2 + $0x160] sm:$0x3] %vm861, 0.0
      %905 = vst.msk [vmem:[#allocation2 + $0x168] sm:$0xff] %vm858, 0.0
      %906 = vst.msk [vmem:[#allocation2 + $0x170] sm:$0xff] %vm858, 0.0
      %907 = vst.msk [vmem:[#allocation2 + $0x178] sm:$0x3] %vm861, 0.0
      %908 = vst.msk [vmem:[#allocation2 + $0x180] sm:$0xff] %vm858, 0.0
      %909 = vst.msk [vmem:[#allocation2 + $0x188] sm:$0xff] %vm858, 0.0
      %910 = vst.msk [vmem:[#allocation2 + $0x190] sm:$0x3] %vm861, 0.0
      %911 = vst.msk [vmem:[#allocation2 + $0x198] sm:$0xff] %vm858, 0.0
      %912 = vst.msk [vmem:[#allocation2 + $0x1a0] sm:$0xff] %vm858, 0.0
      %913 = vst.msk [vmem:[#allocation2 + $0x1a8] sm:$0x3] %vm861, 0.0
      %s914 = scalar_lea.vmem [#allocation2], 24
      %915 = vst.msk [vmem:[%s914 + $0x1] sm:$0xff] %vm858, %v826
      %916 = vst.msk [vmem:[%s914 + $0x9] sm:$0xff] %vm858, %v827
      %917 = vst.msk [vmem:[%s914 + $0x19] sm:$0xff] %vm858, %v828
      %918 = vst.msk [vmem:[%s914 + $0x21] sm:$0xff] %vm858, %v829
      %919 = vst.msk [vmem:[%s914 + $0x31] sm:$0xff] %vm858, %v830
      %920 = vst.msk [vmem:[%s914 + $0x39] sm:$0xff] %vm858, %v831
      %921 = vst.msk [vmem:[%s914 + $0x49] sm:$0xff] %vm858, %v832
      %922 = vst.msk [vmem:[%s914 + $0x51] sm:$0xff] %vm858, %v833
      %923 = vst.msk [vmem:[%s914 + $0x61] sm:$0xff] %vm858, %v834
      %924 = vst.msk [vmem:[%s914 + $0x69] sm:$0xff] %vm858, %v835
      %925 = vst.msk [vmem:[%s914 + $0x79] sm:$0xff] %vm858, %v836
      %926 = vst.msk [vmem:[%s914 + $0x81] sm:$0xff] %vm858, %v837
      %927 = vst.msk [vmem:[%s914 + $0x91] sm:$0xff] %vm858, %v838
      %928 = vst.msk [vmem:[%s914 + $0x99] sm:$0xff] %vm858, %v839
      %929 = vst.msk [vmem:[%s914 + $0xa9] sm:$0xff] %vm858, %v840
      %930 = vst.msk [vmem:[%s914 + $0xb1] sm:$0xff] %vm858, %v841
      %931 = vst.msk [vmem:[%s914 + $0xc1] sm:$0xff] %vm858, %v842
      %932 = vst.msk [vmem:[%s914 + $0xc9] sm:$0xff] %vm858, %v843
      %933 = vst.msk [vmem:[%s914 + $0xd9] sm:$0xff] %vm858, %v844
      %934 = vst.msk [vmem:[%s914 + $0xe1] sm:$0xff] %vm858, %v845
      %935 = vst.msk [vmem:[%s914 + $0xf1] sm:$0xff] %vm858, %v846
      %936 = vst.msk [vmem:[%s914 + $0xf9] sm:$0xff] %vm858, %v847
      %937 = vst.msk [vmem:[%s914 + $0x109] sm:$0xff] %vm858, %v848
      %938 = vst.msk [vmem:[%s914 + $0x111] sm:$0xff] %vm858, %v849
      %939 = vst.msk [vmem:[%s914 + $0x121] sm:$0xff] %vm858, %v850
      %940 = vst.msk [vmem:[%s914 + $0x129] sm:$0xff] %vm858, %v851
      %941 = vst.msk [vmem:[%s914 + $0x139] sm:$0xff] %vm858, %v852
      %942 = vst.msk [vmem:[%s914 + $0x141] sm:$0xff] %vm858, %v853
      %943 = vst.msk [vmem:[%s914 + $0x151] sm:$0xff] %vm858, %v854
      %944 = vst.msk [vmem:[%s914 + $0x159] sm:$0xff] %vm858, %v855
      %945 = vst.msk [vmem:[%s914 + $0x169] sm:$0xff] %vm858, %v856
      %946 = vst.msk [vmem:[%s914 + $0x171] sm:$0xff] %vm858, %v857
      %v947 = vld [vmem:[#allocation2] sm:$0xff]
      %v948 = vld [vmem:[#allocation2 + $0x8] sm:$0xff]
      %v949 = vld [vmem:[#allocation2 + $0x18] sm:$0xff]
      %v950 = vld [vmem:[#allocation2 + $0x20] sm:$0xff]
      %v951 = vld [vmem:[#allocation2 + $0x30] sm:$0xff]
      %v952 = vld [vmem:[#allocation2 + $0x38] sm:$0xff]
      %v953 = vld [vmem:[#allocation2 + $0x48] sm:$0xff]
      %v954 = vld [vmem:[#allocation2 + $0x50] sm:$0xff]
      %v955 = vld [vmem:[#allocation2 + $0x60] sm:$0xff]
      %v956 = vld [vmem:[#allocation2 + $0x68] sm:$0xff]
      %v957 = vld [vmem:[#allocation2 + $0x78] sm:$0xff]
      %v958 = vld [vmem:[#allocation2 + $0x80] sm:$0xff]
      %v959 = vld [vmem:[#allocation2 + $0x90] sm:$0xff]
      %v960 = vld [vmem:[#allocation2 + $0x98] sm:$0xff]
      %v961 = vld [vmem:[#allocation2 + $0xa8] sm:$0xff]
      %v962 = vld [vmem:[#allocation2 + $0xb0] sm:$0xff]
      %v963 = vld [vmem:[#allocation2 + $0xc0] sm:$0xff]
      %v964 = vld [vmem:[#allocation2 + $0xc8] sm:$0xff]
      %v965 = vld [vmem:[#allocation2 + $0xd8] sm:$0xff]
      %v966 = vld [vmem:[#allocation2 + $0xe0] sm:$0xff]
      %v967 = vld [vmem:[#allocation2 + $0xf0] sm:$0xff]
      %v968 = vld [vmem:[#allocation2 + $0xf8] sm:$0xff]
      %v969 = vld [vmem:[#allocation2 + $0x108] sm:$0xff]
      %v970 = vld [vmem:[#allocation2 + $0x110] sm:$0xff]
      %v971 = vld [vmem:[#allocation2 + $0x120] sm:$0xff]
      %v972 = vld [vmem:[#allocation2 + $0x128] sm:$0xff]
      %v973 = vld [vmem:[#allocation2 + $0x138] sm:$0xff]
      %v974 = vld [vmem:[#allocation2 + $0x140] sm:$0xff]
      %v975 = vld [vmem:[#allocation2 + $0x150] sm:$0xff]
      %v976 = vld [vmem:[#allocation2 + $0x158] sm:$0xff]
      %v977 = vld [vmem:[#allocation2 + $0x168] sm:$0xff]
      %v978 = vld [vmem:[#allocation2 + $0x170] sm:$0xff]
      %979 = vst.msk [vmem:[#allocation3] sm:$0xff] %vm858, %v947
      %980 = vst.msk [vmem:[#allocation3 + $0x8] sm:$0xff] %vm858, %v948
      %981 = vst.msk [vmem:[#allocation3 + $0x10] sm:$0xff] %vm858, %v949
      %982 = vst.msk [vmem:[#allocation3 + $0x18] sm:$0xff] %vm858, %v950
      %983 = vst.msk [vmem:[#allocation3 + $0x20] sm:$0xff] %vm858, %v951
      %984 = vst.msk [vmem:[#allocation3 + $0x28] sm:$0xff] %vm858, %v952
      %985 = vst.msk [vmem:[#allocation3 + $0x30] sm:$0xff] %vm858, %v953
      %986 = vst.msk [vmem:[#allocation3 + $0x38] sm:$0xff] %vm858, %v954
      %987 = vst.msk [vmem:[#allocation3 + $0x40] sm:$0xff] %vm858, %v955
      %988 = vst.msk [vmem:[#allocation3 + $0x48] sm:$0xff] %vm858, %v956
      %989 = vst.msk [vmem:[#allocation3 + $0x50] sm:$0xff] %vm858, %v957
      %990 = vst.msk [vmem:[#allocation3 + $0x58] sm:$0xff] %vm858, %v958
      %991 = vst.msk [vmem:[#allocation3 + $0x60] sm:$0xff] %vm858, %v959
      %992 = vst.msk [vmem:[#allocation3 + $0x68] sm:$0xff] %vm858, %v960
      %993 = vst.msk [vmem:[#allocation3 + $0x70] sm:$0xff] %vm858, %v961
      %994 = vst.msk [vmem:[#allocation3 + $0x78] sm:$0xff] %vm858, %v962
      %995 = vst.msk [vmem:[#allocation3 + $0x80] sm:$0xff] %vm858, %v963
      %996 = vst.msk [vmem:[#allocation3 + $0x88] sm:$0xff] %vm858, %v964
      %997 = vst.msk [vmem:[#allocation3 + $0x90] sm:$0xff] %vm858, %v965
      %998 = vst.msk [vmem:[#allocation3 + $0x98] sm:$0xff] %vm858, %v966
      %999 = vst.msk [vmem:[#allocation3 + $0xa0] sm:$0xff] %vm858, %v967
      %1000 = vst.msk [vmem:[#allocation3 + $0xa8] sm:$0xff] %vm858, %v968
      %1001 = vst.msk [vmem:[#allocation3 + $0xb0] sm:$0xff] %vm858, %v969
      %1002 = vst.msk [vmem:[#allocation3 + $0xb8] sm:$0xff] %vm858, %v970
      %1003 = vst.msk [vmem:[#allocation3 + $0xc0] sm:$0xff] %vm858, %v971
      %1004 = vst.msk [vmem:[#allocation3 + $0xc8] sm:$0xff] %vm858, %v972
      %1005 = vst.msk [vmem:[#allocation3 + $0xd0] sm:$0xff] %vm858, %v973
      %1006 = vst.msk [vmem:[#allocation3 + $0xd8] sm:$0xff] %vm858, %v974
      %1007 = vst.msk [vmem:[#allocation3 + $0xe0] sm:$0xff] %vm858, %v975
      %1008 = vst.msk [vmem:[#allocation3 + $0xe8] sm:$0xff] %vm858, %v976
      %1009 = vst.msk [vmem:[#allocation3 + $0xf0] sm:$0xff] %vm858, %v977
      %1010 = vst.msk [vmem:[#allocation3 + $0xf8] sm:$0xff] %vm858, %v978
      %v1011 = vld [vmem:[#allocation2 + $0x1] sm:$0xff]
      %v1012 = vld [vmem:[#allocation2 + $0x9] sm:$0xff]
      %v1013 = vld [vmem:[#allocation2 + $0x19] sm:$0xff]
      %v1014 = vld [vmem:[#allocation2 + $0x21] sm:$0xff]
      %v1015 = vld [vmem:[#allocation2 + $0x31] sm:$0xff]
      %v1016 = vld [vmem:[#allocation2 + $0x39] sm:$0xff]
      %v1017 = vld [vmem:[#allocation2 + $0x49] sm:$0xff]
      %v1018 = vld [vmem:[#allocation2 + $0x51] sm:$0xff]
      %v1019 = vld [vmem:[#allocation2 + $0x61] sm:$0xff]
      %v1020 = vld [vmem:[#allocation2 + $0x69] sm:$0xff]
      %v1021 = vld [vmem:[#allocation2 + $0x79] sm:$0xff]
      %v1022 = vld [vmem:[#allocation2 + $0x81] sm:$0xff]
      %v1023 = vld [vmem:[#allocation2 + $0x91] sm:$0xff]
      %v1024 = vld [vmem:[#allocation2 + $0x99] sm:$0xff]
      %v1025 = vld [vmem:[#allocation2 + $0xa9] sm:$0xff]
      %v1026 = vld [vmem:[#allocation2 + $0xb1] sm:$0xff]
      %v1027 = vld [vmem:[#allocation2 + $0xc1] sm:$0xff]
      %v1028 = vld [vmem:[#allocation2 + $0xc9] sm:$0xff]
      %v1029 = vld [vmem:[#allocation2 + $0xd9] sm:$0xff]
      %v1030 = vld [vmem:[#allocation2 + $0xe1] sm:$0xff]
      %v1031 = vld [vmem:[#allocation2 + $0xf1] sm:$0xff]
      %v1032 = vld [vmem:[#allocation2 + $0xf9] sm:$0xff]
      %v1033 = vld [vmem:[#allocation2 + $0x109] sm:$0xff]
      %v1034 = vld [vmem:[#allocation2 + $0x111] sm:$0xff]
      %v1035 = vld [vmem:[#allocation2 + $0x121] sm:$0xff]
      %v1036 = vld [vmem:[#allocation2 + $0x129] sm:$0xff]
      %v1037 = vld [vmem:[#allocation2 + $0x139] sm:$0xff]
      %v1038 = vld [vmem:[#allocation2 + $0x141] sm:$0xff]
      %v1039 = vld [vmem:[#allocation2 + $0x151] sm:$0xff]
      %v1040 = vld [vmem:[#allocation2 + $0x159] sm:$0xff]
      %v1041 = vld [vmem:[#allocation2 + $0x169] sm:$0xff]
      %v1042 = vld [vmem:[#allocation2 + $0x171] sm:$0xff]
      %1075 = vrot.lane.b32.xlu0 %v1011, 8
      %v1076 = vpop.permute.xlu0 %1075
      %1077 = vrot.lane.b32.xlu0 %v1012, 8
      %v1078 = vpop.permute.xlu0 %1077
      %1079 = vrot.lane.b32.xlu0 %v1013, 8
      %v1080 = vpop.permute.xlu0 %1079
      %1081 = vrot.lane.b32.xlu0 %v1014, 8
      %v1082 = vpop.permute.xlu0 %1081
      %1083 = vrot.lane.b32.xlu0 %v1015, 8
      %v1084 = vpop.permute.xlu0 %1083
      %1085 = vrot.lane.b32.xlu0 %v1016, 8
      %v1086 = vpop.permute.xlu0 %1085
      %1087 = vrot.lane.b32.xlu0 %v1017, 8
      %v1088 = vpop.permute.xlu0 %1087
      %1089 = vrot.lane.b32.xlu0 %v1018, 8
      %v1090 = vpop.permute.xlu0 %1089
      %1091 = vrot.lane.b32.xlu0 %v1019, 8
      %v1092 = vpop.permute.xlu0 %1091
      %1093 = vrot.lane.b32.xlu0 %v1020, 8
      %v1094 = vpop.permute.xlu0 %1093
      %1095 = vrot.lane.b32.xlu0 %v1021, 8
      %v1096 = vpop.permute.xlu0 %1095
      %1097 = vrot.lane.b32.xlu0 %v1022, 8
      %v1098 = vpop.permute.xlu0 %1097
      %1099 = vrot.lane.b32.xlu0 %v1023, 8
      %v1100 = vpop.permute.xlu0 %1099
      %1101 = vrot.lane.b32.xlu0 %v1024, 8
      %v1102 = vpop.permute.xlu0 %1101
      %1103 = vrot.lane.b32.xlu0 %v1025, 8
      %v1104 = vpop.permute.xlu0 %1103
      %1105 = vrot.lane.b32.xlu0 %v1026, 8
      %v1106 = vpop.permute.xlu0 %1105
      %1107 = vrot.lane.b32.xlu0 %v1027, 8
      %v1108 = vpop.permute.xlu0 %1107
      %1109 = vrot.lane.b32.xlu0 %v1028, 8
      %v1110 = vpop.permute.xlu0 %1109
      %1111 = vrot.lane.b32.xlu0 %v1029, 8
      %v1112 = vpop.permute.xlu0 %1111
      %1113 = vrot.lane.b32.xlu0 %v1030, 8
      %v1114 = vpop.permute.xlu0 %1113
      %1115 = vrot.lane.b32.xlu0 %v1031, 8
      %v1116 = vpop.permute.xlu0 %1115
      %1117 = vrot.lane.b32.xlu0 %v1032, 8
      %v1118 = vpop.permute.xlu0 %1117
      %1119 = vrot.lane.b32.xlu0 %v1033, 8
      %v1120 = vpop.permute.xlu0 %1119
      %1121 = vrot.lane.b32.xlu0 %v1034, 8
      %v1122 = vpop.permute.xlu0 %1121
      %1123 = vrot.lane.b32.xlu0 %v1035, 8
      %v1124 = vpop.permute.xlu0 %1123
      %1125 = vrot.lane.b32.xlu0 %v1036, 8
      %v1126 = vpop.permute.xlu0 %1125
      %1127 = vrot.lane.b32.xlu0 %v1037, 8
      %v1128 = vpop.permute.xlu0 %1127
      %1129 = vrot.lane.b32.xlu0 %v1038, 8
      %v1130 = vpop.permute.xlu0 %1129
      %1131 = vrot.lane.b32.xlu0 %v1039, 8
      %v1132 = vpop.permute.xlu0 %1131
      %1133 = vrot.lane.b32.xlu0 %v1040, 8
      %v1134 = vpop.permute.xlu0 %1133
      %1135 = vrot.lane.b32.xlu0 %v1041, 8
      %v1136 = vpop.permute.xlu0 %1135
      %1137 = vrot.lane.b32.xlu0 %v1042, 8
      %v1138 = vpop.permute.xlu0 %1137
      %vm1171 = vcmask 130112
      %1172 = vst.msk [vmem:[#allocation3] sm:$0xff] %vm1171, %v1076
      %1173 = vst.msk [vmem:[#allocation3 + $0x8] sm:$0xff] %vm1171, %v1078
      %1174 = vst.msk [vmem:[#allocation3 + $0x10] sm:$0xff] %vm1171, %v1080
      %1175 = vst.msk [vmem:[#allocation3 + $0x18] sm:$0xff] %vm1171, %v1082
      %1176 = vst.msk [vmem:[#allocation3 + $0x20] sm:$0xff] %vm1171, %v1084
      %1177 = vst.msk [vmem:[#allocation3 + $0x28] sm:$0xff] %vm1171, %v1086
      %1178 = vst.msk [vmem:[#allocation3 + $0x30] sm:$0xff] %vm1171, %v1088
      %1179 = vst.msk [vmem:[#allocation3 + $0x38] sm:$0xff] %vm1171, %v1090
      %1180 = vst.msk [vmem:[#allocation3 + $0x40] sm:$0xff] %vm1171, %v1092
      %1181 = vst.msk [vmem:[#allocation3 + $0x48] sm:$0xff] %vm1171, %v1094
      %1182 = vst.msk [vmem:[#allocation3 + $0x50] sm:$0xff] %vm1171, %v1096
      %1183 = vst.msk [vmem:[#allocation3 + $0x58] sm:$0xff] %vm1171, %v1098
      %1184 = vst.msk [vmem:[#allocation3 + $0x60] sm:$0xff] %vm1171, %v1100
      %1185 = vst.msk [vmem:[#allocation3 + $0x68] sm:$0xff] %vm1171, %v1102
      %1186 = vst.msk [vmem:[#allocation3 + $0x70] sm:$0xff] %vm1171, %v1104
      %1187 = vst.msk [vmem:[#allocation3 + $0x78] sm:$0xff] %vm1171, %v1106
      %1188 = vst.msk [vmem:[#allocation3 + $0x80] sm:$0xff] %vm1171, %v1108
      %1189 = vst.msk [vmem:[#allocation3 + $0x88] sm:$0xff] %vm1171, %v1110
      %1190 = vst.msk [vmem:[#allocation3 + $0x90] sm:$0xff] %vm1171, %v1112
      %1191 = vst.msk [vmem:[#allocation3 + $0x98] sm:$0xff] %vm1171, %v1114
      %1192 = vst.msk [vmem:[#allocation3 + $0xa0] sm:$0xff] %vm1171, %v1116
      %1193 = vst.msk [vmem:[#allocation3 + $0xa8] sm:$0xff] %vm1171, %v1118
      %1194 = vst.msk [vmem:[#allocation3 + $0xb0] sm:$0xff] %vm1171, %v1120
      %1195 = vst.msk [vmem:[#allocation3 + $0xb8] sm:$0xff] %vm1171, %v1122
      %1196 = vst.msk [vmem:[#allocation3 + $0xc0] sm:$0xff] %vm1171, %v1124
      %1197 = vst.msk [vmem:[#allocation3 + $0xc8] sm:$0xff] %vm1171, %v1126
      %1198 = vst.msk [vmem:[#allocation3 + $0xd0] sm:$0xff] %vm1171, %v1128
      %1199 = vst.msk [vmem:[#allocation3 + $0xd8] sm:$0xff] %vm1171, %v1130
      %1200 = vst.msk [vmem:[#allocation3 + $0xe0] sm:$0xff] %vm1171, %v1132
      %1201 = vst.msk [vmem:[#allocation3 + $0xe8] sm:$0xff] %vm1171, %v1134
      %1202 = vst.msk [vmem:[#allocation3 + $0xf0] sm:$0xff] %vm1171, %v1136
      %1203 = vst.msk [vmem:[#allocation3 + $0xf8] sm:$0xff] %vm1171, %v1138
      %v1204 = vld [vmem:[#allocation2 + $0x2] sm:$0xff]
      %v1205 = vld [vmem:[#allocation2 + $0xa] sm:$0xff]
      %v1206 = vld [vmem:[#allocation2 + $0x1a] sm:$0xff]
      %v1207 = vld [vmem:[#allocation2 + $0x22] sm:$0xff]
      %v1208 = vld [vmem:[#allocation2 + $0x32] sm:$0xff]
      %v1209 = vld [vmem:[#allocation2 + $0x3a] sm:$0xff]
      %v1210 = vld [vmem:[#allocation2 + $0x4a] sm:$0xff]
      %v1211 = vld [vmem:[#allocation2 + $0x52] sm:$0xff]
      %v1212 = vld [vmem:[#allocation2 + $0x62] sm:$0xff]
      %v1213 = vld [vmem:[#allocation2 + $0x6a] sm:$0xff]
      %v1214 = vld [vmem:[#allocation2 + $0x7a] sm:$0xff]
      %v1215 = vld [vmem:[#allocation2 + $0x82] sm:$0xff]
      %v1216 = vld [vmem:[#allocation2 + $0x92] sm:$0xff]
      %v1217 = vld [vmem:[#allocation2 + $0x9a] sm:$0xff]
      %v1218 = vld [vmem:[#allocation2 + $0xaa] sm:$0xff]
      %v1219 = vld [vmem:[#allocation2 + $0xb2] sm:$0xff]
      %v1220 = vld [vmem:[#allocation2 + $0xc2] sm:$0xff]
      %v1221 = vld [vmem:[#allocation2 + $0xca] sm:$0xff]
      %v1222 = vld [vmem:[#allocation2 + $0xda] sm:$0xff]
      %v1223 = vld [vmem:[#allocation2 + $0xe2] sm:$0xff]
      %v1224 = vld [vmem:[#allocation2 + $0xf2] sm:$0xff]
      %v1225 = vld [vmem:[#allocation2 + $0xfa] sm:$0xff]
      %v1226 = vld [vmem:[#allocation2 + $0x10a] sm:$0xff]
      %v1227 = vld [vmem:[#allocation2 + $0x112] sm:$0xff]
      %v1228 = vld [vmem:[#allocation2 + $0x122] sm:$0xff]
      %v1229 = vld [vmem:[#allocation2 + $0x12a] sm:$0xff]
      %v1230 = vld [vmem:[#allocation2 + $0x13a] sm:$0xff]
      %v1231 = vld [vmem:[#allocation2 + $0x142] sm:$0xff]
      %v1232 = vld [vmem:[#allocation2 + $0x152] sm:$0xff]
      %v1233 = vld [vmem:[#allocation2 + $0x15a] sm:$0xff]
      %v1234 = vld [vmem:[#allocation2 + $0x16a] sm:$0xff]
      %v1235 = vld [vmem:[#allocation2 + $0x172] sm:$0xff]
      %1268 = vrot.lane.b32.xlu0 %v1204, 16
      %v1269 = vpop.permute.xlu0 %1268
      %1270 = vrot.lane.b32.xlu0 %v1205, 16
      %v1271 = vpop.permute.xlu0 %1270
      %1272 = vrot.lane.b32.xlu0 %v1206, 16
      %v1273 = vpop.permute.xlu0 %1272
      %1274 = vrot.lane.b32.xlu0 %v1207, 16
      %v1275 = vpop.permute.xlu0 %1274
      %1276 = vrot.lane.b32.xlu0 %v1208, 16
      %v1277 = vpop.permute.xlu0 %1276
      %1278 = vrot.lane.b32.xlu0 %v1209, 16
      %v1279 = vpop.permute.xlu0 %1278
      %1280 = vrot.lane.b32.xlu0 %v1210, 16
      %v1281 = vpop.permute.xlu0 %1280
      %1282 = vrot.lane.b32.xlu0 %v1211, 16
      %v1283 = vpop.permute.xlu0 %1282
      %1284 = vrot.lane.b32.xlu0 %v1212, 16
      %v1285 = vpop.permute.xlu0 %1284
      %1286 = vrot.lane.b32.xlu0 %v1213, 16
      %v1287 = vpop.permute.xlu0 %1286
      %1288 = vrot.lane.b32.xlu0 %v1214, 16
      %v1289 = vpop.permute.xlu0 %1288
      %1290 = vrot.lane.b32.xlu0 %v1215, 16
      %v1291 = vpop.permute.xlu0 %1290
      %1292 = vrot.lane.b32.xlu0 %v1216, 16
      %v1293 = vpop.permute.xlu0 %1292
      %1294 = vrot.lane.b32.xlu0 %v1217, 16
      %v1295 = vpop.permute.xlu0 %1294
      %1296 = vrot.lane.b32.xlu0 %v1218, 16
      %v1297 = vpop.permute.xlu0 %1296
      %1298 = vrot.lane.b32.xlu0 %v1219, 16
      %v1299 = vpop.permute.xlu0 %1298
      %1300 = vrot.lane.b32.xlu0 %v1220, 16
      %v1301 = vpop.permute.xlu0 %1300
      %1302 = vrot.lane.b32.xlu0 %v1221, 16
      %v1303 = vpop.permute.xlu0 %1302
      %1304 = vrot.lane.b32.xlu0 %v1222, 16
      %v1305 = vpop.permute.xlu0 %1304
      %1306 = vrot.lane.b32.xlu0 %v1223, 16
      %v1307 = vpop.permute.xlu0 %1306
      %1308 = vrot.lane.b32.xlu0 %v1224, 16
      %v1309 = vpop.permute.xlu0 %1308
      %1310 = vrot.lane.b32.xlu0 %v1225, 16
      %v1311 = vpop.permute.xlu0 %1310
      %1312 = vrot.lane.b32.xlu0 %v1226, 16
      %v1313 = vpop.permute.xlu0 %1312
      %1314 = vrot.lane.b32.xlu0 %v1227, 16
      %v1315 = vpop.permute.xlu0 %1314
      %1316 = vrot.lane.b32.xlu0 %v1228, 16
      %v1317 = vpop.permute.xlu0 %1316
      %1318 = vrot.lane.b32.xlu0 %v1229, 16
      %v1319 = vpop.permute.xlu0 %1318
      %1320 = vrot.lane.b32.xlu0 %v1230, 16
      %v1321 = vpop.permute.xlu0 %1320
      %1322 = vrot.lane.b32.xlu0 %v1231, 16
      %v1323 = vpop.permute.xlu0 %1322
      %1324 = vrot.lane.b32.xlu0 %v1232, 16
      %v1325 = vpop.permute.xlu0 %1324
      %1326 = vrot.lane.b32.xlu0 %v1233, 16
      %v1327 = vpop.permute.xlu0 %1326
      %1328 = vrot.lane.b32.xlu0 %v1234, 16
      %v1329 = vpop.permute.xlu0 %1328
      %1330 = vrot.lane.b32.xlu0 %v1235, 16
      %v1331 = vpop.permute.xlu0 %1330
      %vm1364 = vcmask 195712
      %1365 = vst.msk [vmem:[#allocation3] sm:$0xff] %vm1364, %v1269
      %1366 = vst.msk [vmem:[#allocation3 + $0x8] sm:$0xff] %vm1364, %v1271
      %1367 = vst.msk [vmem:[#allocation3 + $0x10] sm:$0xff] %vm1364, %v1273
      %1368 = vst.msk [vmem:[#allocation3 + $0x18] sm:$0xff] %vm1364, %v1275
      %1369 = vst.msk [vmem:[#allocation3 + $0x20] sm:$0xff] %vm1364, %v1277
      %1370 = vst.msk [vmem:[#allocation3 + $0x28] sm:$0xff] %vm1364, %v1279
      %1371 = vst.msk [vmem:[#allocation3 + $0x30] sm:$0xff] %vm1364, %v1281
      %1372 = vst.msk [vmem:[#allocation3 + $0x38] sm:$0xff] %vm1364, %v1283
      %1373 = vst.msk [vmem:[#allocation3 + $0x40] sm:$0xff] %vm1364, %v1285
      %1374 = vst.msk [vmem:[#allocation3 + $0x48] sm:$0xff] %vm1364, %v1287
      %1375 = vst.msk [vmem:[#allocation3 + $0x50] sm:$0xff] %vm1364, %v1289
      %1376 = vst.msk [vmem:[#allocation3 + $0x58] sm:$0xff] %vm1364, %v1291
      %1377 = vst.msk [vmem:[#allocation3 + $0x60] sm:$0xff] %vm1364, %v1293
      %1378 = vst.msk [vmem:[#allocation3 + $0x68] sm:$0xff] %vm1364, %v1295
      %1379 = vst.msk [vmem:[#allocation3 + $0x70] sm:$0xff] %vm1364, %v1297
      %1380 = vst.msk [vmem:[#allocation3 + $0x78] sm:$0xff] %vm1364, %v1299
      %1381 = vst.msk [vmem:[#allocation3 + $0x80] sm:$0xff] %vm1364, %v1301
      %1382 = vst.msk [vmem:[#allocation3 + $0x88] sm:$0xff] %vm1364, %v1303
      %1383 = vst.msk [vmem:[#allocation3 + $0x90] sm:$0xff] %vm1364, %v1305
      %1384 = vst.msk [vmem:[#allocation3 + $0x98] sm:$0xff] %vm1364, %v1307
      %1385 = vst.msk [vmem:[#allocation3 + $0xa0] sm:$0xff] %vm1364, %v1309
      %1386 = vst.msk [vmem:[#allocation3 + $0xa8] sm:$0xff] %vm1364, %v1311
      %1387 = vst.msk [vmem:[#allocation3 + $0xb0] sm:$0xff] %vm1364, %v1313
      %1388 = vst.msk [vmem:[#allocation3 + $0xb8] sm:$0xff] %vm1364, %v1315
      %1389 = vst.msk [vmem:[#allocation3 + $0xc0] sm:$0xff] %vm1364, %v1317
      %1390 = vst.msk [vmem:[#allocation3 + $0xc8] sm:$0xff] %vm1364, %v1319
      %1391 = vst.msk [vmem:[#allocation3 + $0xd0] sm:$0xff] %vm1364, %v1321
      %1392 = vst.msk [vmem:[#allocation3 + $0xd8] sm:$0xff] %vm1364, %v1323
      %1393 = vst.msk [vmem:[#allocation3 + $0xe0] sm:$0xff] %vm1364, %v1325
      %1394 = vst.msk [vmem:[#allocation3 + $0xe8] sm:$0xff] %vm1364, %v1327
      %1395 = vst.msk [vmem:[#allocation3 + $0xf0] sm:$0xff] %vm1364, %v1329
      %1396 = vst.msk [vmem:[#allocation3 + $0xf8] sm:$0xff] %vm1364, %v1331
      %v1397 = vld [vmem:[%s914] sm:$0xff]
      %v1398 = vld [vmem:[%s914 + $0x8] sm:$0xff]
      %v1399 = vld [vmem:[%s914 + $0x18] sm:$0xff]
      %v1400 = vld [vmem:[%s914 + $0x20] sm:$0xff]
      %v1401 = vld [vmem:[%s914 + $0x30] sm:$0xff]
      %v1402 = vld [vmem:[%s914 + $0x38] sm:$0xff]
      %v1403 = vld [vmem:[%s914 + $0x48] sm:$0xff]
      %v1404 = vld [vmem:[%s914 + $0x50] sm:$0xff]
      %v1405 = vld [vmem:[%s914 + $0x60] sm:$0xff]
      %v1406 = vld [vmem:[%s914 + $0x68] sm:$0xff]
      %v1407 = vld [vmem:[%s914 + $0x78] sm:$0xff]
      %v1408 = vld [vmem:[%s914 + $0x80] sm:$0xff]
      %v1409 = vld [vmem:[%s914 + $0x90] sm:$0xff]
      %v1410 = vld [vmem:[%s914 + $0x98] sm:$0xff]
      %v1411 = vld [vmem:[%s914 + $0xa8] sm:$0xff]
      %v1412 = vld [vmem:[%s914 + $0xb0] sm:$0xff]
      %v1413 = vld [vmem:[%s914 + $0xc0] sm:$0xff]
      %v1414 = vld [vmem:[%s914 + $0xc8] sm:$0xff]
      %v1415 = vld [vmem:[%s914 + $0xd8] sm:$0xff]
      %v1416 = vld [vmem:[%s914 + $0xe0] sm:$0xff]
      %v1417 = vld [vmem:[%s914 + $0xf0] sm:$0xff]
      %v1418 = vld [vmem:[%s914 + $0xf8] sm:$0xff]
      %v1419 = vld [vmem:[%s914 + $0x108] sm:$0xff]
      %v1420 = vld [vmem:[%s914 + $0x110] sm:$0xff]
      %v1421 = vld [vmem:[%s914 + $0x120] sm:$0xff]
      %v1422 = vld [vmem:[%s914 + $0x128] sm:$0xff]
      %v1423 = vld [vmem:[%s914 + $0x138] sm:$0xff]
      %v1424 = vld [vmem:[%s914 + $0x140] sm:$0xff]
      %v1425 = vld [vmem:[%s914 + $0x150] sm:$0xff]
      %v1426 = vld [vmem:[%s914 + $0x158] sm:$0xff]
      %v1427 = vld [vmem:[%s914 + $0x168] sm:$0xff]
      %v1428 = vld [vmem:[%s914 + $0x170] sm:$0xff]
      %1461 = vrot.lane.b32.xlu0 %v1397, 24
      %v1462 = vpop.permute.xlu0 %1461
      %1463 = vrot.lane.b32.xlu0 %v1398, 24
      %v1464 = vpop.permute.xlu0 %1463
      %1465 = vrot.lane.b32.xlu0 %v1399, 24
      %v1466 = vpop.permute.xlu0 %1465
      %1467 = vrot.lane.b32.xlu0 %v1400, 24
      %v1468 = vpop.permute.xlu0 %1467
      %1469 = vrot.lane.b32.xlu0 %v1401, 24
      %v1470 = vpop.permute.xlu0 %1469
      %1471 = vrot.lane.b32.xlu0 %v1402, 24
      %v1472 = vpop.permute.xlu0 %1471
      %1473 = vrot.lane.b32.xlu0 %v1403, 24
      %v1474 = vpop.permute.xlu0 %1473
      %1475 = vrot.lane.b32.xlu0 %v1404, 24
      %v1476 = vpop.permute.xlu0 %1475
      %1477 = vrot.lane.b32.xlu0 %v1405, 24
      %v1478 = vpop.permute.xlu0 %1477
      %1479 = vrot.lane.b32.xlu0 %v1406, 24
      %v1480 = vpop.permute.xlu0 %1479
      %1481 = vrot.lane.b32.xlu0 %v1407, 24
      %v1482 = vpop.permute.xlu0 %1481
      %1483 = vrot.lane.b32.xlu0 %v1408, 24
      %v1484 = vpop.permute.xlu0 %1483
      %1485 = vrot.lane.b32.xlu0 %v1409, 24
      %v1486 = vpop.permute.xlu0 %1485
      %1487 = vrot.lane.b32.xlu0 %v1410, 24
      %v1488 = vpop.permute.xlu0 %1487
      %1489 = vrot.lane.b32.xlu0 %v1411, 24
      %v1490 = vpop.permute.xlu0 %1489
      %1491 = vrot.lane.b32.xlu0 %v1412, 24
      %v1492 = vpop.permute.xlu0 %1491
      %1493 = vrot.lane.b32.xlu0 %v1413, 24
      %v1494 = vpop.permute.xlu0 %1493
      %1495 = vrot.lane.b32.xlu0 %v1414, 24
      %v1496 = vpop.permute.xlu0 %1495
      %1497 = vrot.lane.b32.xlu0 %v1415, 24
      %v1498 = vpop.permute.xlu0 %1497
      %1499 = vrot.lane.b32.xlu0 %v1416, 24
      %v1500 = vpop.permute.xlu0 %1499
      %1501 = vrot.lane.b32.xlu0 %v1417, 24
      %v1502 = vpop.permute.xlu0 %1501
      %1503 = vrot.lane.b32.xlu0 %v1418, 24
      %v1504 = vpop.permute.xlu0 %1503
      %1505 = vrot.lane.b32.xlu0 %v1419, 24
      %v1506 = vpop.permute.xlu0 %1505
      %1507 = vrot.lane.b32.xlu0 %v1420, 24
      %v1508 = vpop.permute.xlu0 %1507
      %1509 = vrot.lane.b32.xlu0 %v1421, 24
      %v1510 = vpop.permute.xlu0 %1509
      %1511 = vrot.lane.b32.xlu0 %v1422, 24
      %v1512 = vpop.permute.xlu0 %1511
      %1513 = vrot.lane.b32.xlu0 %v1423, 24
      %v1514 = vpop.permute.xlu0 %1513
      %1515 = vrot.lane.b32.xlu0 %v1424, 24
      %v1516 = vpop.permute.xlu0 %1515
      %1517 = vrot.lane.b32.xlu0 %v1425, 24
      %v1518 = vpop.permute.xlu0 %1517
      %1519 = vrot.lane.b32.xlu0 %v1426, 24
      %v1520 = vpop.permute.xlu0 %1519
      %1521 = vrot.lane.b32.xlu0 %v1427, 24
      %v1522 = vpop.permute.xlu0 %1521
      %1523 = vrot.lane.b32.xlu0 %v1428, 24
      %v1524 = vpop.permute.xlu0 %1523
      %vm1557 = vcmask 261312
      %1558 = vst.msk [vmem:[#allocation3] sm:$0xff] %vm1557, %v1462
      %1559 = vst.msk [vmem:[#allocation3 + $0x8] sm:$0xff] %vm1557, %v1464
      %1560 = vst.msk [vmem:[#allocation3 + $0x10] sm:$0xff] %vm1557, %v1466
      %1561 = vst.msk [vmem:[#allocation3 + $0x18] sm:$0xff] %vm1557, %v1468
      %1562 = vst.msk [vmem:[#allocation3 + $0x20] sm:$0xff] %vm1557, %v1470
      %1563 = vst.msk [vmem:[#allocation3 + $0x28] sm:$0xff] %vm1557, %v1472
      %1564 = vst.msk [vmem:[#allocation3 + $0x30] sm:$0xff] %vm1557, %v1474
      %1565 = vst.msk [vmem:[#allocation3 + $0x38] sm:$0xff] %vm1557, %v1476
      %1566 = vst.msk [vmem:[#allocation3 + $0x40] sm:$0xff] %vm1557, %v1478
      %1567 = vst.msk [vmem:[#allocation3 + $0x48] sm:$0xff] %vm1557, %v1480
      %1568 = vst.msk [vmem:[#allocation3 + $0x50] sm:$0xff] %vm1557, %v1482
      %1569 = vst.msk [vmem:[#allocation3 + $0x58] sm:$0xff] %vm1557, %v1484
      %1570 = vst.msk [vmem:[#allocation3 + $0x60] sm:$0xff] %vm1557, %v1486
      %1571 = vst.msk [vmem:[#allocation3 + $0x68] sm:$0xff] %vm1557, %v1488
      %1572 = vst.msk [vmem:[#allocation3 + $0x70] sm:$0xff] %vm1557, %v1490
      %1573 = vst.msk [vmem:[#allocation3 + $0x78] sm:$0xff] %vm1557, %v1492
      %1574 = vst.msk [vmem:[#allocation3 + $0x80] sm:$0xff] %vm1557, %v1494
      %1575 = vst.msk [vmem:[#allocation3 + $0x88] sm:$0xff] %vm1557, %v1496
      %1576 = vst.msk [vmem:[#allocation3 + $0x90] sm:$0xff] %vm1557, %v1498
      %1577 = vst.msk [vmem:[#allocation3 + $0x98] sm:$0xff] %vm1557, %v1500
      %1578 = vst.msk [vmem:[#allocation3 + $0xa0] sm:$0xff] %vm1557, %v1502
      %1579 = vst.msk [vmem:[#allocation3 + $0xa8] sm:$0xff] %vm1557, %v1504
      %1580 = vst.msk [vmem:[#allocation3 + $0xb0] sm:$0xff] %vm1557, %v1506
      %1581 = vst.msk [vmem:[#allocation3 + $0xb8] sm:$0xff] %vm1557, %v1508
      %1582 = vst.msk [vmem:[#allocation3 + $0xc0] sm:$0xff] %vm1557, %v1510
      %1583 = vst.msk [vmem:[#allocation3 + $0xc8] sm:$0xff] %vm1557, %v1512
      %1584 = vst.msk [vmem:[#allocation3 + $0xd0] sm:$0xff] %vm1557, %v1514
      %1585 = vst.msk [vmem:[#allocation3 + $0xd8] sm:$0xff] %vm1557, %v1516
      %1586 = vst.msk [vmem:[#allocation3 + $0xe0] sm:$0xff] %vm1557, %v1518
      %1587 = vst.msk [vmem:[#allocation3 + $0xe8] sm:$0xff] %vm1557, %v1520
      %1588 = vst.msk [vmem:[#allocation3 + $0xf0] sm:$0xff] %vm1557, %v1522
      %1589 = vst.msk [vmem:[#allocation3 + $0xf8] sm:$0xff] %vm1557, %v1524
      %v1590 = vld [vmem:[%s914 + $0x1] sm:$0xff]
      %v1591 = vld [vmem:[%s914 + $0x9] sm:$0xff]
      %v1592 = vld [vmem:[%s914 + $0x19] sm:$0xff]
      %v1593 = vld [vmem:[%s914 + $0x21] sm:$0xff]
      %v1594 = vld [vmem:[%s914 + $0x31] sm:$0xff]
      %v1595 = vld [vmem:[%s914 + $0x39] sm:$0xff]
      %v1596 = vld [vmem:[%s914 + $0x49] sm:$0xff]
      %v1597 = vld [vmem:[%s914 + $0x51] sm:$0xff]
      %v1598 = vld [vmem:[%s914 + $0x61] sm:$0xff]
      %v1599 = vld [vmem:[%s914 + $0x69] sm:$0xff]
      %v1600 = vld [vmem:[%s914 + $0x79] sm:$0xff]
      %v1601 = vld [vmem:[%s914 + $0x81] sm:$0xff]
      %v1602 = vld [vmem:[%s914 + $0x91] sm:$0xff]
      %v1603 = vld [vmem:[%s914 + $0x99] sm:$0xff]
      %v1604 = vld [vmem:[%s914 + $0xa9] sm:$0xff]
      %v1605 = vld [vmem:[%s914 + $0xb1] sm:$0xff]
      %v1606 = vld [vmem:[%s914 + $0xc1] sm:$0xff]
      %v1607 = vld [vmem:[%s914 + $0xc9] sm:$0xff]
      %v1608 = vld [vmem:[%s914 + $0xd9] sm:$0xff]
      %v1609 = vld [vmem:[%s914 + $0xe1] sm:$0xff]
      %v1610 = vld [vmem:[%s914 + $0xf1] sm:$0xff]
      %v1611 = vld [vmem:[%s914 + $0xf9] sm:$0xff]
      %v1612 = vld [vmem:[%s914 + $0x109] sm:$0xff]
      %v1613 = vld [vmem:[%s914 + $0x111] sm:$0xff]
      %v1614 = vld [vmem:[%s914 + $0x121] sm:$0xff]
      %v1615 = vld [vmem:[%s914 + $0x129] sm:$0xff]
      %v1616 = vld [vmem:[%s914 + $0x139] sm:$0xff]
      %v1617 = vld [vmem:[%s914 + $0x141] sm:$0xff]
      %v1618 = vld [vmem:[%s914 + $0x151] sm:$0xff]
      %v1619 = vld [vmem:[%s914 + $0x159] sm:$0xff]
      %v1620 = vld [vmem:[%s914 + $0x169] sm:$0xff]
      %v1621 = vld [vmem:[%s914 + $0x171] sm:$0xff]
      %1654 = vrot.lane.b32.xlu0 %v1590, 32
      %v1655 = vpop.permute.xlu0 %1654
      %1656 = vrot.lane.b32.xlu0 %v1591, 32
      %v1657 = vpop.permute.xlu0 %1656
      %1658 = vrot.lane.b32.xlu0 %v1592, 32
      %v1659 = vpop.permute.xlu0 %1658
      %1660 = vrot.lane.b32.xlu0 %v1593, 32
      %v1661 = vpop.permute.xlu0 %1660
      %1662 = vrot.lane.b32.xlu0 %v1594, 32
      %v1663 = vpop.permute.xlu0 %1662
      %1664 = vrot.lane.b32.xlu0 %v1595, 32
      %v1665 = vpop.permute.xlu0 %1664
      %1666 = vrot.lane.b32.xlu0 %v1596, 32
      %v1667 = vpop.permute.xlu0 %1666
      %1668 = vrot.lane.b32.xlu0 %v1597, 32
      %v1669 = vpop.permute.xlu0 %1668
      %1670 = vrot.lane.b32.xlu0 %v1598, 32
      %v1671 = vpop.permute.xlu0 %1670
      %1672 = vrot.lane.b32.xlu0 %v1599, 32
      %v1673 = vpop.permute.xlu0 %1672
      %1674 = vrot.lane.b32.xlu0 %v1600, 32
      %v1675 = vpop.permute.xlu0 %1674
      %1676 = vrot.lane.b32.xlu0 %v1601, 32
      %v1677 = vpop.permute.xlu0 %1676
      %1678 = vrot.lane.b32.xlu0 %v1602, 32
      %v1679 = vpop.permute.xlu0 %1678
      %1680 = vrot.lane.b32.xlu0 %v1603, 32
      %v1681 = vpop.permute.xlu0 %1680
      %1682 = vrot.lane.b32.xlu0 %v1604, 32
      %v1683 = vpop.permute.xlu0 %1682
      %1684 = vrot.lane.b32.xlu0 %v1605, 32
      %v1685 = vpop.permute.xlu0 %1684
      %1686 = vrot.lane.b32.xlu0 %v1606, 32
      %v1687 = vpop.permute.xlu0 %1686
      %1688 = vrot.lane.b32.xlu0 %v1607, 32
      %v1689 = vpop.permute.xlu0 %1688
      %1690 = vrot.lane.b32.xlu0 %v1608, 32
      %v1691 = vpop.permute.xlu0 %1690
      %1692 = vrot.lane.b32.xlu0 %v1609, 32
      %v1693 = vpop.permute.xlu0 %1692
      %1694 = vrot.lane.b32.xlu0 %v1610, 32
      %v1695 = vpop.permute.xlu0 %1694
      %1696 = vrot.lane.b32.xlu0 %v1611, 32
      %v1697 = vpop.permute.xlu0 %1696
      %1698 = vrot.lane.b32.xlu0 %v1612, 32
      %v1699 = vpop.permute.xlu0 %1698
      %1700 = vrot.lane.b32.xlu0 %v1613, 32
      %v1701 = vpop.permute.xlu0 %1700
      %1702 = vrot.lane.b32.xlu0 %v1614, 32
      %v1703 = vpop.permute.xlu0 %1702
      %1704 = vrot.lane.b32.xlu0 %v1615, 32
      %v1705 = vpop.permute.xlu0 %1704
      %1706 = vrot.lane.b32.xlu0 %v1616, 32
      %v1707 = vpop.permute.xlu0 %1706
      %1708 = vrot.lane.b32.xlu0 %v1617, 32
      %v1709 = vpop.permute.xlu0 %1708
      %1710 = vrot.lane.b32.xlu0 %v1618, 32
      %v1711 = vpop.permute.xlu0 %1710
      %1712 = vrot.lane.b32.xlu0 %v1619, 32
      %v1713 = vpop.permute.xlu0 %1712
      %1714 = vrot.lane.b32.xlu0 %v1620, 32
      %v1715 = vpop.permute.xlu0 %1714
      %1716 = vrot.lane.b32.xlu0 %v1621, 32
      %v1717 = vpop.permute.xlu0 %1716
      %vm1750 = vcmask 326912
      %1751 = vst.msk [vmem:[#allocation3] sm:$0xff] %vm1750, %v1655
      %1752 = vst.msk [vmem:[#allocation3 + $0x8] sm:$0xff] %vm1750, %v1657
      %1753 = vst.msk [vmem:[#allocation3 + $0x10] sm:$0xff] %vm1750, %v1659
      %1754 = vst.msk [vmem:[#allocation3 + $0x18] sm:$0xff] %vm1750, %v1661
      %1755 = vst.msk [vmem:[#allocation3 + $0x20] sm:$0xff] %vm1750, %v1663
      %1756 = vst.msk [vmem:[#allocation3 + $0x28] sm:$0xff] %vm1750, %v1665
      %1757 = vst.msk [vmem:[#allocation3 + $0x30] sm:$0xff] %vm1750, %v1667
      %1758 = vst.msk [vmem:[#allocation3 + $0x38] sm:$0xff] %vm1750, %v1669
      %1759 = vst.msk [vmem:[#allocation3 + $0x40] sm:$0xff] %vm1750, %v1671
      %1760 = vst.msk [vmem:[#allocation3 + $0x48] sm:$0xff] %vm1750, %v1673
      %1761 = vst.msk [vmem:[#allocation3 + $0x50] sm:$0xff] %vm1750, %v1675
      %1762 = vst.msk [vmem:[#allocation3 + $0x58] sm:$0xff] %vm1750, %v1677
      %1763 = vst.msk [vmem:[#allocation3 + $0x60] sm:$0xff] %vm1750, %v1679
      %1764 = vst.msk [vmem:[#allocation3 + $0x68] sm:$0xff] %vm1750, %v1681
      %1765 = vst.msk [vmem:[#allocation3 + $0x70] sm:$0xff] %vm1750, %v1683
      %1766 = vst.msk [vmem:[#allocation3 + $0x78] sm:$0xff] %vm1750, %v1685
      %1767 = vst.msk [vmem:[#allocation3 + $0x80] sm:$0xff] %vm1750, %v1687
      %1768 = vst.msk [vmem:[#allocation3 + $0x88] sm:$0xff] %vm1750, %v1689
      %1769 = vst.msk [vmem:[#allocation3 + $0x90] sm:$0xff] %vm1750, %v1691
      %1770 = vst.msk [vmem:[#allocation3 + $0x98] sm:$0xff] %vm1750, %v1693
      %1771 = vst.msk [vmem:[#allocation3 + $0xa0] sm:$0xff] %vm1750, %v1695
      %1772 = vst.msk [vmem:[#allocation3 + $0xa8] sm:$0xff] %vm1750, %v1697
      %1773 = vst.msk [vmem:[#allocation3 + $0xb0] sm:$0xff] %vm1750, %v1699
      %1774 = vst.msk [vmem:[#allocation3 + $0xb8] sm:$0xff] %vm1750, %v1701
      %1775 = vst.msk [vmem:[#allocation3 + $0xc0] sm:$0xff] %vm1750, %v1703
      %1776 = vst.msk [vmem:[#allocation3 + $0xc8] sm:$0xff] %vm1750, %v1705
      %1777 = vst.msk [vmem:[#allocation3 + $0xd0] sm:$0xff] %vm1750, %v1707
      %1778 = vst.msk [vmem:[#allocation3 + $0xd8] sm:$0xff] %vm1750, %v1709
      %1779 = vst.msk [vmem:[#allocation3 + $0xe0] sm:$0xff] %vm1750, %v1711
      %1780 = vst.msk [vmem:[#allocation3 + $0xe8] sm:$0xff] %vm1750, %v1713
      %1781 = vst.msk [vmem:[#allocation3 + $0xf0] sm:$0xff] %vm1750, %v1715
      %1782 = vst.msk [vmem:[#allocation3 + $0xf8] sm:$0xff] %vm1750, %v1717
      %v1783 = vld [vmem:[%s914 + $0x2] sm:$0xff]
      %v1784 = vld [vmem:[%s914 + $0xa] sm:$0xff]
      %v1785 = vld [vmem:[%s914 + $0x1a] sm:$0xff]
      %v1786 = vld [vmem:[%s914 + $0x22] sm:$0xff]
      %v1787 = vld [vmem:[%s914 + $0x32] sm:$0xff]
      %v1788 = vld [vmem:[%s914 + $0x3a] sm:$0xff]
      %v1789 = vld [vmem:[%s914 + $0x4a] sm:$0xff]
      %v1790 = vld [vmem:[%s914 + $0x52] sm:$0xff]
      %v1791 = vld [vmem:[%s914 + $0x62] sm:$0xff]
      %v1792 = vld [vmem:[%s914 + $0x6a] sm:$0xff]
      %v1793 = vld [vmem:[%s914 + $0x7a] sm:$0xff]
      %v1794 = vld [vmem:[%s914 + $0x82] sm:$0xff]
      %v1795 = vld [vmem:[%s914 + $0x92] sm:$0xff]
      %v1796 = vld [vmem:[%s914 + $0x9a] sm:$0xff]
      %v1797 = vld [vmem:[%s914 + $0xaa] sm:$0xff]
      %v1798 = vld [vmem:[%s914 + $0xb2] sm:$0xff]
      %v1799 = vld [vmem:[%s914 + $0xc2] sm:$0xff]
      %v1800 = vld [vmem:[%s914 + $0xca] sm:$0xff]
      %v1801 = vld [vmem:[%s914 + $0xda] sm:$0xff]
      %v1802 = vld [vmem:[%s914 + $0xe2] sm:$0xff]
      %v1803 = vld [vmem:[%s914 + $0xf2] sm:$0xff]
      %v1804 = vld [vmem:[%s914 + $0xfa] sm:$0xff]
      %v1805 = vld [vmem:[%s914 + $0x10a] sm:$0xff]
      %v1806 = vld [vmem:[%s914 + $0x112] sm:$0xff]
      %v1807 = vld [vmem:[%s914 + $0x122] sm:$0xff]
      %v1808 = vld [vmem:[%s914 + $0x12a] sm:$0xff]
      %v1809 = vld [vmem:[%s914 + $0x13a] sm:$0xff]
      %v1810 = vld [vmem:[%s914 + $0x142] sm:$0xff]
      %v1811 = vld [vmem:[%s914 + $0x152] sm:$0xff]
      %v1812 = vld [vmem:[%s914 + $0x15a] sm:$0xff]
      %v1813 = vld [vmem:[%s914 + $0x16a] sm:$0xff]
      %v1814 = vld [vmem:[%s914 + $0x172] sm:$0xff]
      %1847 = vrot.lane.b32.xlu0 %v1783, 40
      %v1848 = vpop.permute.xlu0 %1847
      %1849 = vrot.lane.b32.xlu0 %v1784, 40
      %v1850 = vpop.permute.xlu0 %1849
      %1851 = vrot.lane.b32.xlu0 %v1785, 40
      %v1852 = vpop.permute.xlu0 %1851
      %1853 = vrot.lane.b32.xlu0 %v1786, 40
      %v1854 = vpop.permute.xlu0 %1853
      %1855 = vrot.lane.b32.xlu0 %v1787, 40
      %v1856 = vpop.permute.xlu0 %1855
      %1857 = vrot.lane.b32.xlu0 %v1788, 40
      %v1858 = vpop.permute.xlu0 %1857
      %1859 = vrot.lane.b32.xlu0 %v1789, 40
      %v1860 = vpop.permute.xlu0 %1859
      %1861 = vrot.lane.b32.xlu0 %v1790, 40
      %v1862 = vpop.permute.xlu0 %1861
      %1863 = vrot.lane.b32.xlu0 %v1791, 40
      %v1864 = vpop.permute.xlu0 %1863
      %1865 = vrot.lane.b32.xlu0 %v1792, 40
      %v1866 = vpop.permute.xlu0 %1865
      %1867 = vrot.lane.b32.xlu0 %v1793, 40
      %v1868 = vpop.permute.xlu0 %1867
      %1869 = vrot.lane.b32.xlu0 %v1794, 40
      %v1870 = vpop.permute.xlu0 %1869
      %1871 = vrot.lane.b32.xlu0 %v1795, 40
      %v1872 = vpop.permute.xlu0 %1871
      %1873 = vrot.lane.b32.xlu0 %v1796, 40
      %v1874 = vpop.permute.xlu0 %1873
      %1875 = vrot.lane.b32.xlu0 %v1797, 40
      %v1876 = vpop.permute.xlu0 %1875
      %1877 = vrot.lane.b32.xlu0 %v1798, 40
      %v1878 = vpop.permute.xlu0 %1877
      %1879 = vrot.lane.b32.xlu0 %v1799, 40
      %v1880 = vpop.permute.xlu0 %1879
      %1881 = vrot.lane.b32.xlu0 %v1800, 40
      %v1882 = vpop.permute.xlu0 %1881
      %1883 = vrot.lane.b32.xlu0 %v1801, 40
      %v1884 = vpop.permute.xlu0 %1883
      %1885 = vrot.lane.b32.xlu0 %v1802, 40
      %v1886 = vpop.permute.xlu0 %1885
      %1887 = vrot.lane.b32.xlu0 %v1803, 40
      %v1888 = vpop.permute.xlu0 %1887
      %1889 = vrot.lane.b32.xlu0 %v1804, 40
      %v1890 = vpop.permute.xlu0 %1889
      %1891 = vrot.lane.b32.xlu0 %v1805, 40
      %v1892 = vpop.permute.xlu0 %1891
      %1893 = vrot.lane.b32.xlu0 %v1806, 40
      %v1894 = vpop.permute.xlu0 %1893
      %1895 = vrot.lane.b32.xlu0 %v1807, 40
      %v1896 = vpop.permute.xlu0 %1895
      %1897 = vrot.lane.b32.xlu0 %v1808, 40
      %v1898 = vpop.permute.xlu0 %1897
      %1899 = vrot.lane.b32.xlu0 %v1809, 40
      %v1900 = vpop.permute.xlu0 %1899
      %1901 = vrot.lane.b32.xlu0 %v1810, 40
      %v1902 = vpop.permute.xlu0 %1901
      %1903 = vrot.lane.b32.xlu0 %v1811, 40
      %v1904 = vpop.permute.xlu0 %1903
      %1905 = vrot.lane.b32.xlu0 %v1812, 40
      %v1906 = vpop.permute.xlu0 %1905
      %1907 = vrot.lane.b32.xlu0 %v1813, 40
      %v1908 = vpop.permute.xlu0 %1907
      %1909 = vrot.lane.b32.xlu0 %v1814, 40
      %v1910 = vpop.permute.xlu0 %1909
      %vm1943 = vcmask 392512
      %1944 = vst.msk [vmem:[#allocation3] sm:$0xff] %vm1943, %v1848
      %1945 = vst.msk [vmem:[#allocation3 + $0x8] sm:$0xff] %vm1943, %v1850
      %1946 = vst.msk [vmem:[#allocation3 + $0x10] sm:$0xff] %vm1943, %v1852
      %1947 = vst.msk [vmem:[#allocation3 + $0x18] sm:$0xff] %vm1943, %v1854
      %1948 = vst.msk [vmem:[#allocation3 + $0x20] sm:$0xff] %vm1943, %v1856
      %1949 = vst.msk [vmem:[#allocation3 + $0x28] sm:$0xff] %vm1943, %v1858
      %1950 = vst.msk [vmem:[#allocation3 + $0x30] sm:$0xff] %vm1943, %v1860
      %1951 = vst.msk [vmem:[#allocation3 + $0x38] sm:$0xff] %vm1943, %v1862
      %1952 = vst.msk [vmem:[#allocation3 + $0x40] sm:$0xff] %vm1943, %v1864
      %1953 = vst.msk [vmem:[#allocation3 + $0x48] sm:$0xff] %vm1943, %v1866
      %1954 = vst.msk [vmem:[#allocation3 + $0x50] sm:$0xff] %vm1943, %v1868
      %1955 = vst.msk [vmem:[#allocation3 + $0x58] sm:$0xff] %vm1943, %v1870
      %1956 = vst.msk [vmem:[#allocation3 + $0x60] sm:$0xff] %vm1943, %v1872
      %1957 = vst.msk [vmem:[#allocation3 + $0x68] sm:$0xff] %vm1943, %v1874
      %1958 = vst.msk [vmem:[#allocation3 + $0x70] sm:$0xff] %vm1943, %v1876
      %1959 = vst.msk [vmem:[#allocation3 + $0x78] sm:$0xff] %vm1943, %v1878
      %1960 = vst.msk [vmem:[#allocation3 + $0x80] sm:$0xff] %vm1943, %v1880
      %1961 = vst.msk [vmem:[#allocation3 + $0x88] sm:$0xff] %vm1943, %v1882
      %1962 = vst.msk [vmem:[#allocation3 + $0x90] sm:$0xff] %vm1943, %v1884
      %1963 = vst.msk [vmem:[#allocation3 + $0x98] sm:$0xff] %vm1943, %v1886
      %1964 = vst.msk [vmem:[#allocation3 + $0xa0] sm:$0xff] %vm1943, %v1888
      %1965 = vst.msk [vmem:[#allocation3 + $0xa8] sm:$0xff] %vm1943, %v1890
      %1966 = vst.msk [vmem:[#allocation3 + $0xb0] sm:$0xff] %vm1943, %v1892
      %1967 = vst.msk [vmem:[#allocation3 + $0xb8] sm:$0xff] %vm1943, %v1894
      %1968 = vst.msk [vmem:[#allocation3 + $0xc0] sm:$0xff] %vm1943, %v1896
      %1969 = vst.msk [vmem:[#allocation3 + $0xc8] sm:$0xff] %vm1943, %v1898
      %1970 = vst.msk [vmem:[#allocation3 + $0xd0] sm:$0xff] %vm1943, %v1900
      %1971 = vst.msk [vmem:[#allocation3 + $0xd8] sm:$0xff] %vm1943, %v1902
      %1972 = vst.msk [vmem:[#allocation3 + $0xe0] sm:$0xff] %vm1943, %v1904
      %1973 = vst.msk [vmem:[#allocation3 + $0xe8] sm:$0xff] %vm1943, %v1906
      %1974 = vst.msk [vmem:[#allocation3 + $0xf0] sm:$0xff] %vm1943, %v1908
      %1975 = vst.msk [vmem:[#allocation3 + $0xf8] sm:$0xff] %vm1943, %v1910
      %s1976 = scalar_lea.vmem [#allocation2], 48
      %v1977 = vld [vmem:[%s1976] sm:$0xff]
      %v1978 = vld [vmem:[%s1976 + $0x8] sm:$0xff]
      %v1979 = vld [vmem:[%s1976 + $0x18] sm:$0xff]
      %v1980 = vld [vmem:[%s1976 + $0x20] sm:$0xff]
      %v1981 = vld [vmem:[%s1976 + $0x30] sm:$0xff]
      %v1982 = vld [vmem:[%s1976 + $0x38] sm:$0xff]
      %v1983 = vld [vmem:[%s1976 + $0x48] sm:$0xff]
      %v1984 = vld [vmem:[%s1976 + $0x50] sm:$0xff]
      %v1985 = vld [vmem:[%s1976 + $0x60] sm:$0xff]
      %v1986 = vld [vmem:[%s1976 + $0x68] sm:$0xff]
      %v1987 = vld [vmem:[%s1976 + $0x78] sm:$0xff]
      %v1988 = vld [vmem:[%s1976 + $0x80] sm:$0xff]
      %v1989 = vld [vmem:[%s1976 + $0x90] sm:$0xff]
      %v1990 = vld [vmem:[%s1976 + $0x98] sm:$0xff]
      %v1991 = vld [vmem:[%s1976 + $0xa8] sm:$0xff]
      %v1992 = vld [vmem:[%s1976 + $0xb0] sm:$0xff]
      %v1993 = vld [vmem:[%s1976 + $0xc0] sm:$0xff]
      %v1994 = vld [vmem:[%s1976 + $0xc8] sm:$0xff]
      %v1995 = vld [vmem:[%s1976 + $0xd8] sm:$0xff]
      %v1996 = vld [vmem:[%s1976 + $0xe0] sm:$0xff]
      %v1997 = vld [vmem:[%s1976 + $0xf0] sm:$0xff]
      %v1998 = vld [vmem:[%s1976 + $0xf8] sm:$0xff]
      %v1999 = vld [vmem:[%s1976 + $0x108] sm:$0xff]
      %v2000 = vld [vmem:[%s1976 + $0x110] sm:$0xff]
      %v2001 = vld [vmem:[%s1976 + $0x120] sm:$0xff]
      %v2002 = vld [vmem:[%s1976 + $0x128] sm:$0xff]
      %v2003 = vld [vmem:[%s1976 + $0x138] sm:$0xff]
      %v2004 = vld [vmem:[%s1976 + $0x140] sm:$0xff]
      %v2005 = vld [vmem:[%s1976 + $0x150] sm:$0xff]
      %v2006 = vld [vmem:[%s1976 + $0x158] sm:$0xff]
      %v2007 = vld [vmem:[%s1976 + $0x168] sm:$0xff]
      %v2008 = vld [vmem:[%s1976 + $0x170] sm:$0xff]
      %2041 = vrot.lane.b32.xlu0 %v1977, 48
      %v2042 = vpop.permute.xlu0 %2041
      %2043 = vrot.lane.b32.xlu0 %v1978, 48
      %v2044 = vpop.permute.xlu0 %2043
      %2045 = vrot.lane.b32.xlu0 %v1979, 48
      %v2046 = vpop.permute.xlu0 %2045
      %2047 = vrot.lane.b32.xlu0 %v1980, 48
      %v2048 = vpop.permute.xlu0 %2047
      %2049 = vrot.lane.b32.xlu0 %v1981, 48
      %v2050 = vpop.permute.xlu0 %2049
      %2051 = vrot.lane.b32.xlu0 %v1982, 48
      %v2052 = vpop.permute.xlu0 %2051
      %2053 = vrot.lane.b32.xlu0 %v1983, 48
      %v2054 = vpop.permute.xlu0 %2053
      %2055 = vrot.lane.b32.xlu0 %v1984, 48
      %v2056 = vpop.permute.xlu0 %2055
      %2057 = vrot.lane.b32.xlu0 %v1985, 48
      %v2058 = vpop.permute.xlu0 %2057
      %2059 = vrot.lane.b32.xlu0 %v1986, 48
      %v2060 = vpop.permute.xlu0 %2059
      %2061 = vrot.lane.b32.xlu0 %v1987, 48
      %v2062 = vpop.permute.xlu0 %2061
      %2063 = vrot.lane.b32.xlu0 %v1988, 48
      %v2064 = vpop.permute.xlu0 %2063
      %2065 = vrot.lane.b32.xlu0 %v1989, 48
      %v2066 = vpop.permute.xlu0 %2065
      %2067 = vrot.lane.b32.xlu0 %v1990, 48
      %v2068 = vpop.permute.xlu0 %2067
      %2069 = vrot.lane.b32.xlu0 %v1991, 48
      %v2070 = vpop.permute.xlu0 %2069
      %2071 = vrot.lane.b32.xlu0 %v1992, 48
      %v2072 = vpop.permute.xlu0 %2071
      %2073 = vrot.lane.b32.xlu0 %v1993, 48
      %v2074 = vpop.permute.xlu0 %2073
      %2075 = vrot.lane.b32.xlu0 %v1994, 48
      %v2076 = vpop.permute.xlu0 %2075
      %2077 = vrot.lane.b32.xlu0 %v1995, 48
      %v2078 = vpop.permute.xlu0 %2077
      %2079 = vrot.lane.b32.xlu0 %v1996, 48
      %v2080 = vpop.permute.xlu0 %2079
      %2081 = vrot.lane.b32.xlu0 %v1997, 48
      %v2082 = vpop.permute.xlu0 %2081
      %2083 = vrot.lane.b32.xlu0 %v1998, 48
      %v2084 = vpop.permute.xlu0 %2083
      %2085 = vrot.lane.b32.xlu0 %v1999, 48
      %v2086 = vpop.permute.xlu0 %2085
      %2087 = vrot.lane.b32.xlu0 %v2000, 48
      %v2088 = vpop.permute.xlu0 %2087
      %2089 = vrot.lane.b32.xlu0 %v2001, 48
      %v2090 = vpop.permute.xlu0 %2089
      %2091 = vrot.lane.b32.xlu0 %v2002, 48
      %v2092 = vpop.permute.xlu0 %2091
      %2093 = vrot.lane.b32.xlu0 %v2003, 48
      %v2094 = vpop.permute.xlu0 %2093
      %2095 = vrot.lane.b32.xlu0 %v2004, 48
      %v2096 = vpop.permute.xlu0 %2095
      %2097 = vrot.lane.b32.xlu0 %v2005, 48
      %v2098 = vpop.permute.xlu0 %2097
      %2099 = vrot.lane.b32.xlu0 %v2006, 48
      %v2100 = vpop.permute.xlu0 %2099
      %2101 = vrot.lane.b32.xlu0 %v2007, 48
      %v2102 = vpop.permute.xlu0 %2101
      %2103 = vrot.lane.b32.xlu0 %v2008, 48
      %v2104 = vpop.permute.xlu0 %2103
      %vm2137 = vcmask 458112
      %2138 = vst.msk [vmem:[#allocation3] sm:$0xff] %vm2137, %v2042
      %2139 = vst.msk [vmem:[#allocation3 + $0x8] sm:$0xff] %vm2137, %v2044
      %2140 = vst.msk [vmem:[#allocation3 + $0x10] sm:$0xff] %vm2137, %v2046
      %2141 = vst.msk [vmem:[#allocation3 + $0x18] sm:$0xff] %vm2137, %v2048
      %2142 = vst.msk [vmem:[#allocation3 + $0x20] sm:$0xff] %vm2137, %v2050
      %2143 = vst.msk [vmem:[#allocation3 + $0x28] sm:$0xff] %vm2137, %v2052
      %2144 = vst.msk [vmem:[#allocation3 + $0x30] sm:$0xff] %vm2137, %v2054
      %2145 = vst.msk [vmem:[#allocation3 + $0x38] sm:$0xff] %vm2137, %v2056
      %2146 = vst.msk [vmem:[#allocation3 + $0x40] sm:$0xff] %vm2137, %v2058
      %2147 = vst.msk [vmem:[#allocation3 + $0x48] sm:$0xff] %vm2137, %v2060
      %2148 = vst.msk [vmem:[#allocation3 + $0x50] sm:$0xff] %vm2137, %v2062
      %2149 = vst.msk [vmem:[#allocation3 + $0x58] sm:$0xff] %vm2137, %v2064
      %2150 = vst.msk [vmem:[#allocation3 + $0x60] sm:$0xff] %vm2137, %v2066
      %2151 = vst.msk [vmem:[#allocation3 + $0x68] sm:$0xff] %vm2137, %v2068
      %2152 = vst.msk [vmem:[#allocation3 + $0x70] sm:$0xff] %vm2137, %v2070
      %2153 = vst.msk [vmem:[#allocation3 + $0x78] sm:$0xff] %vm2137, %v2072
      %2154 = vst.msk [vmem:[#allocation3 + $0x80] sm:$0xff] %vm2137, %v2074
      %2155 = vst.msk [vmem:[#allocation3 + $0x88] sm:$0xff] %vm2137, %v2076
      %2156 = vst.msk [vmem:[#allocation3 + $0x90] sm:$0xff] %vm2137, %v2078
      %2157 = vst.msk [vmem:[#allocation3 + $0x98] sm:$0xff] %vm2137, %v2080
      %2158 = vst.msk [vmem:[#allocation3 + $0xa0] sm:$0xff] %vm2137, %v2082
      %2159 = vst.msk [vmem:[#allocation3 + $0xa8] sm:$0xff] %vm2137, %v2084
      %2160 = vst.msk [vmem:[#allocation3 + $0xb0] sm:$0xff] %vm2137, %v2086
      %2161 = vst.msk [vmem:[#allocation3 + $0xb8] sm:$0xff] %vm2137, %v2088
      %2162 = vst.msk [vmem:[#allocation3 + $0xc0] sm:$0xff] %vm2137, %v2090
      %2163 = vst.msk [vmem:[#allocation3 + $0xc8] sm:$0xff] %vm2137, %v2092
      %2164 = vst.msk [vmem:[#allocation3 + $0xd0] sm:$0xff] %vm2137, %v2094
      %2165 = vst.msk [vmem:[#allocation3 + $0xd8] sm:$0xff] %vm2137, %v2096
      %2166 = vst.msk [vmem:[#allocation3 + $0xe0] sm:$0xff] %vm2137, %v2098
      %2167 = vst.msk [vmem:[#allocation3 + $0xe8] sm:$0xff] %vm2137, %v2100
      %2168 = vst.msk [vmem:[#allocation3 + $0xf0] sm:$0xff] %vm2137, %v2102
      %2169 = vst.msk [vmem:[#allocation3 + $0xf8] sm:$0xff] %vm2137, %v2104
      %v2170 = vld [vmem:[%s1976 + $0x1] sm:$0xff]
      %v2171 = vld [vmem:[%s1976 + $0x9] sm:$0xff]
      %v2172 = vld [vmem:[%s1976 + $0x19] sm:$0xff]
      %v2173 = vld [vmem:[%s1976 + $0x21] sm:$0xff]
      %v2174 = vld [vmem:[%s1976 + $0x31] sm:$0xff]
      %v2175 = vld [vmem:[%s1976 + $0x39] sm:$0xff]
      %v2176 = vld [vmem:[%s1976 + $0x49] sm:$0xff]
      %v2177 = vld [vmem:[%s1976 + $0x51] sm:$0xff]
      %v2178 = vld [vmem:[%s1976 + $0x61] sm:$0xff]
      %v2179 = vld [vmem:[%s1976 + $0x69] sm:$0xff]
      %v2180 = vld [vmem:[%s1976 + $0x79] sm:$0xff]
      %v2181 = vld [vmem:[%s1976 + $0x81] sm:$0xff]
      %v2182 = vld [vmem:[%s1976 + $0x91] sm:$0xff]
      %v2183 = vld [vmem:[%s1976 + $0x99] sm:$0xff]
      %v2184 = vld [vmem:[%s1976 + $0xa9] sm:$0xff]
      %v2185 = vld [vmem:[%s1976 + $0xb1] sm:$0xff]
      %v2186 = vld [vmem:[%s1976 + $0xc1] sm:$0xff]
      %v2187 = vld [vmem:[%s1976 + $0xc9] sm:$0xff]
      %v2188 = vld [vmem:[%s1976 + $0xd9] sm:$0xff]
      %v2189 = vld [vmem:[%s1976 + $0xe1] sm:$0xff]
      %v2190 = vld [vmem:[%s1976 + $0xf1] sm:$0xff]
      %v2191 = vld [vmem:[%s1976 + $0xf9] sm:$0xff]
      %v2192 = vld [vmem:[%s1976 + $0x109] sm:$0xff]
      %v2193 = vld [vmem:[%s1976 + $0x111] sm:$0xff]
      %v2194 = vld [vmem:[%s1976 + $0x121] sm:$0xff]
      %v2195 = vld [vmem:[%s1976 + $0x129] sm:$0xff]
      %v2196 = vld [vmem:[%s1976 + $0x139] sm:$0xff]
      %v2197 = vld [vmem:[%s1976 + $0x141] sm:$0xff]
      %v2198 = vld [vmem:[%s1976 + $0x151] sm:$0xff]
      %v2199 = vld [vmem:[%s1976 + $0x159] sm:$0xff]
      %v2200 = vld [vmem:[%s1976 + $0x169] sm:$0xff]
      %v2201 = vld [vmem:[%s1976 + $0x171] sm:$0xff]
      %2234 = vrot.lane.b32.xlu0 %v2170, 56
      %v2235 = vpop.permute.xlu0 %2234
      %2236 = vrot.lane.b32.xlu0 %v2171, 56
      %v2237 = vpop.permute.xlu0 %2236
      %2238 = vrot.lane.b32.xlu0 %v2172, 56
      %v2239 = vpop.permute.xlu0 %2238
      %2240 = vrot.lane.b32.xlu0 %v2173, 56
      %v2241 = vpop.permute.xlu0 %2240
      %2242 = vrot.lane.b32.xlu0 %v2174, 56
      %v2243 = vpop.permute.xlu0 %2242
      %2244 = vrot.lane.b32.xlu0 %v2175, 56
      %v2245 = vpop.permute.xlu0 %2244
      %2246 = vrot.lane.b32.xlu0 %v2176, 56
      %v2247 = vpop.permute.xlu0 %2246
      %2248 = vrot.lane.b32.xlu0 %v2177, 56
      %v2249 = vpop.permute.xlu0 %2248
      %2250 = vrot.lane.b32.xlu0 %v2178, 56
      %v2251 = vpop.permute.xlu0 %2250
      %2252 = vrot.lane.b32.xlu0 %v2179, 56
      %v2253 = vpop.permute.xlu0 %2252
      %2254 = vrot.lane.b32.xlu0 %v2180, 56
      %v2255 = vpop.permute.xlu0 %2254
      %2256 = vrot.lane.b32.xlu0 %v2181, 56
      %v2257 = vpop.permute.xlu0 %2256
      %2258 = vrot.lane.b32.xlu0 %v2182, 56
      %v2259 = vpop.permute.xlu0 %2258
      %2260 = vrot.lane.b32.xlu0 %v2183, 56
      %v2261 = vpop.permute.xlu0 %2260
      %2262 = vrot.lane.b32.xlu0 %v2184, 56
      %v2263 = vpop.permute.xlu0 %2262
      %2264 = vrot.lane.b32.xlu0 %v2185, 56
      %v2265 = vpop.permute.xlu0 %2264
      %2266 = vrot.lane.b32.xlu0 %v2186, 56
      %v2267 = vpop.permute.xlu0 %2266
      %2268 = vrot.lane.b32.xlu0 %v2187, 56
      %v2269 = vpop.permute.xlu0 %2268
      %2270 = vrot.lane.b32.xlu0 %v2188, 56
      %v2271 = vpop.permute.xlu0 %2270
      %2272 = vrot.lane.b32.xlu0 %v2189, 56
      %v2273 = vpop.permute.xlu0 %2272
      %2274 = vrot.lane.b32.xlu0 %v2190, 56
      %v2275 = vpop.permute.xlu0 %2274
      %2276 = vrot.lane.b32.xlu0 %v2191, 56
      %v2277 = vpop.permute.xlu0 %2276
      %2278 = vrot.lane.b32.xlu0 %v2192, 56
      %v2279 = vpop.permute.xlu0 %2278
      %2280 = vrot.lane.b32.xlu0 %v2193, 56
      %v2281 = vpop.permute.xlu0 %2280
      %2282 = vrot.lane.b32.xlu0 %v2194, 56
      %v2283 = vpop.permute.xlu0 %2282
      %2284 = vrot.lane.b32.xlu0 %v2195, 56
      %v2285 = vpop.permute.xlu0 %2284
      %2286 = vrot.lane.b32.xlu0 %v2196, 56
      %v2287 = vpop.permute.xlu0 %2286
      %2288 = vrot.lane.b32.xlu0 %v2197, 56
      %v2289 = vpop.permute.xlu0 %2288
      %2290 = vrot.lane.b32.xlu0 %v2198, 56
      %v2291 = vpop.permute.xlu0 %2290
      %2292 = vrot.lane.b32.xlu0 %v2199, 56
      %v2293 = vpop.permute.xlu0 %2292
      %2294 = vrot.lane.b32.xlu0 %v2200, 56
      %v2295 = vpop.permute.xlu0 %2294
      %2296 = vrot.lane.b32.xlu0 %v2201, 56
      %v2297 = vpop.permute.xlu0 %2296
      %vm2330 = vcmask 523712
      %2331 = vst.msk [vmem:[#allocation3] sm:$0xff] %vm2330, %v2235
      %2332 = vst.msk [vmem:[#allocation3 + $0x8] sm:$0xff] %vm2330, %v2237
      %2333 = vst.msk [vmem:[#allocation3 + $0x10] sm:$0xff] %vm2330, %v2239
      %2334 = vst.msk [vmem:[#allocation3 + $0x18] sm:$0xff] %vm2330, %v2241
      %2335 = vst.msk [vmem:[#allocation3 + $0x20] sm:$0xff] %vm2330, %v2243
      %2336 = vst.msk [vmem:[#allocation3 + $0x28] sm:$0xff] %vm2330, %v2245
      %2337 = vst.msk [vmem:[#allocation3 + $0x30] sm:$0xff] %vm2330, %v2247
      %2338 = vst.msk [vmem:[#allocation3 + $0x38] sm:$0xff] %vm2330, %v2249
      %2339 = vst.msk [vmem:[#allocation3 + $0x40] sm:$0xff] %vm2330, %v2251
      %2340 = vst.msk [vmem:[#allocation3 + $0x48] sm:$0xff] %vm2330, %v2253
      %2341 = vst.msk [vmem:[#allocation3 + $0x50] sm:$0xff] %vm2330, %v2255
      %2342 = vst.msk [vmem:[#allocation3 + $0x58] sm:$0xff] %vm2330, %v2257
      %2343 = vst.msk [vmem:[#allocation3 + $0x60] sm:$0xff] %vm2330, %v2259
      %2344 = vst.msk [vmem:[#allocation3 + $0x68] sm:$0xff] %vm2330, %v2261
      %2345 = vst.msk [vmem:[#allocation3 + $0x70] sm:$0xff] %vm2330, %v2263
      %2346 = vst.msk [vmem:[#allocation3 + $0x78] sm:$0xff] %vm2330, %v2265
      %2347 = vst.msk [vmem:[#allocation3 + $0x80] sm:$0xff] %vm2330, %v2267
      %2348 = vst.msk [vmem:[#allocation3 + $0x88] sm:$0xff] %vm2330, %v2269
      %2349 = vst.msk [vmem:[#allocation3 + $0x90] sm:$0xff] %vm2330, %v2271
      %2350 = vst.msk [vmem:[#allocation3 + $0x98] sm:$0xff] %vm2330, %v2273
      %2351 = vst.msk [vmem:[#allocation3 + $0xa0] sm:$0xff] %vm2330, %v2275
      %2352 = vst.msk [vmem:[#allocation3 + $0xa8] sm:$0xff] %vm2330, %v2277
      %2353 = vst.msk [vmem:[#allocation3 + $0xb0] sm:$0xff] %vm2330, %v2279
      %2354 = vst.msk [vmem:[#allocation3 + $0xb8] sm:$0xff] %vm2330, %v2281
      %2355 = vst.msk [vmem:[#allocation3 + $0xc0] sm:$0xff] %vm2330, %v2283
      %2356 = vst.msk [vmem:[#allocation3 + $0xc8] sm:$0xff] %vm2330, %v2285
      %2357 = vst.msk [vmem:[#allocation3 + $0xd0] sm:$0xff] %vm2330, %v2287
      %2358 = vst.msk [vmem:[#allocation3 + $0xd8] sm:$0xff] %vm2330, %v2289
      %2359 = vst.msk [vmem:[#allocation3 + $0xe0] sm:$0xff] %vm2330, %v2291
      %2360 = vst.msk [vmem:[#allocation3 + $0xe8] sm:$0xff] %vm2330, %v2293
      %2361 = vst.msk [vmem:[#allocation3 + $0xf0] sm:$0xff] %vm2330, %v2295
      %2362 = vst.msk [vmem:[#allocation3 + $0xf8] sm:$0xff] %vm2330, %v2297
      %v2363 = vld [vmem:[%s1976 + $0x2] sm:$0xff]
      %v2364 = vld [vmem:[%s1976 + $0xa] sm:$0xff]
      %v2365 = vld [vmem:[%s1976 + $0x1a] sm:$0xff]
      %v2366 = vld [vmem:[%s1976 + $0x22] sm:$0xff]
      %v2367 = vld [vmem:[%s1976 + $0x32] sm:$0xff]
      %v2368 = vld [vmem:[%s1976 + $0x3a] sm:$0xff]
      %v2369 = vld [vmem:[%s1976 + $0x4a] sm:$0xff]
      %v2370 = vld [vmem:[%s1976 + $0x52] sm:$0xff]
      %v2371 = vld [vmem:[%s1976 + $0x62] sm:$0xff]
      %v2372 = vld [vmem:[%s1976 + $0x6a] sm:$0xff]
      %v2373 = vld [vmem:[%s1976 + $0x7a] sm:$0xff]
      %v2374 = vld [vmem:[%s1976 + $0x82] sm:$0xff]
      %v2375 = vld [vmem:[%s1976 + $0x92] sm:$0xff]
      %v2376 = vld [vmem:[%s1976 + $0x9a] sm:$0xff]
      %v2377 = vld [vmem:[%s1976 + $0xaa] sm:$0xff]
      %v2378 = vld [vmem:[%s1976 + $0xb2] sm:$0xff]
      %v2379 = vld [vmem:[%s1976 + $0xc2] sm:$0xff]
      %v2380 = vld [vmem:[%s1976 + $0xca] sm:$0xff]
      %v2381 = vld [vmem:[%s1976 + $0xda] sm:$0xff]
      %v2382 = vld [vmem:[%s1976 + $0xe2] sm:$0xff]
      %v2383 = vld [vmem:[%s1976 + $0xf2] sm:$0xff]
      %v2384 = vld [vmem:[%s1976 + $0xfa] sm:$0xff]
      %v2385 = vld [vmem:[%s1976 + $0x10a] sm:$0xff]
      %v2386 = vld [vmem:[%s1976 + $0x112] sm:$0xff]
      %v2387 = vld [vmem:[%s1976 + $0x122] sm:$0xff]
      %v2388 = vld [vmem:[%s1976 + $0x12a] sm:$0xff]
      %v2389 = vld [vmem:[%s1976 + $0x13a] sm:$0xff]
      %v2390 = vld [vmem:[%s1976 + $0x142] sm:$0xff]
      %v2391 = vld [vmem:[%s1976 + $0x152] sm:$0xff]
      %v2392 = vld [vmem:[%s1976 + $0x15a] sm:$0xff]
      %v2393 = vld [vmem:[%s1976 + $0x16a] sm:$0xff]
      %v2394 = vld [vmem:[%s1976 + $0x172] sm:$0xff]
      %2427 = vrot.lane.b32.xlu0 %v2363, 64
      %v2428 = vpop.permute.xlu0 %2427
      %2429 = vrot.lane.b32.xlu0 %v2364, 64
      %v2430 = vpop.permute.xlu0 %2429
      %2431 = vrot.lane.b32.xlu0 %v2365, 64
      %v2432 = vpop.permute.xlu0 %2431
      %2433 = vrot.lane.b32.xlu0 %v2366, 64
      %v2434 = vpop.permute.xlu0 %2433
      %2435 = vrot.lane.b32.xlu0 %v2367, 64
      %v2436 = vpop.permute.xlu0 %2435
      %2437 = vrot.lane.b32.xlu0 %v2368, 64
      %v2438 = vpop.permute.xlu0 %2437
      %2439 = vrot.lane.b32.xlu0 %v2369, 64
      %v2440 = vpop.permute.xlu0 %2439
      %2441 = vrot.lane.b32.xlu0 %v2370, 64
      %v2442 = vpop.permute.xlu0 %2441
      %2443 = vrot.lane.b32.xlu0 %v2371, 64
      %v2444 = vpop.permute.xlu0 %2443
      %2445 = vrot.lane.b32.xlu0 %v2372, 64
      %v2446 = vpop.permute.xlu0 %2445
      %2447 = vrot.lane.b32.xlu0 %v2373, 64
      %v2448 = vpop.permute.xlu0 %2447
      %2449 = vrot.lane.b32.xlu0 %v2374, 64
      %v2450 = vpop.permute.xlu0 %2449
      %2451 = vrot.lane.b32.xlu0 %v2375, 64
      %v2452 = vpop.permute.xlu0 %2451
      %2453 = vrot.lane.b32.xlu0 %v2376, 64
      %v2454 = vpop.permute.xlu0 %2453
      %2455 = vrot.lane.b32.xlu0 %v2377, 64
      %v2456 = vpop.permute.xlu0 %2455
      %2457 = vrot.lane.b32.xlu0 %v2378, 64
      %v2458 = vpop.permute.xlu0 %2457
      %2459 = vrot.lane.b32.xlu0 %v2379, 64
      %v2460 = vpop.permute.xlu0 %2459
      %2461 = vrot.lane.b32.xlu0 %v2380, 64
      %v2462 = vpop.permute.xlu0 %2461
      %2463 = vrot.lane.b32.xlu0 %v2381, 64
      %v2464 = vpop.permute.xlu0 %2463
      %2465 = vrot.lane.b32.xlu0 %v2382, 64
      %v2466 = vpop.permute.xlu0 %2465
      %2467 = vrot.lane.b32.xlu0 %v2383, 64
      %v2468 = vpop.permute.xlu0 %2467
      %2469 = vrot.lane.b32.xlu0 %v2384, 64
      %v2470 = vpop.permute.xlu0 %2469
      %2471 = vrot.lane.b32.xlu0 %v2385, 64
      %v2472 = vpop.permute.xlu0 %2471
      %2473 = vrot.lane.b32.xlu0 %v2386, 64
      %v2474 = vpop.permute.xlu0 %2473
      %2475 = vrot.lane.b32.xlu0 %v2387, 64
      %v2476 = vpop.permute.xlu0 %2475
      %2477 = vrot.lane.b32.xlu0 %v2388, 64
      %v2478 = vpop.permute.xlu0 %2477
      %2479 = vrot.lane.b32.xlu0 %v2389, 64
      %v2480 = vpop.permute.xlu0 %2479
      %2481 = vrot.lane.b32.xlu0 %v2390, 64
      %v2482 = vpop.permute.xlu0 %2481
      %2483 = vrot.lane.b32.xlu0 %v2391, 64
      %v2484 = vpop.permute.xlu0 %2483
      %2485 = vrot.lane.b32.xlu0 %v2392, 64
      %v2486 = vpop.permute.xlu0 %2485
      %2487 = vrot.lane.b32.xlu0 %v2393, 64
      %v2488 = vpop.permute.xlu0 %2487
      %2489 = vrot.lane.b32.xlu0 %v2394, 64
      %v2490 = vpop.permute.xlu0 %2489
      %vm2523 = vcmask 589312
      %2524 = vst.msk [vmem:[#allocation3] sm:$0xff] %vm2523, %v2428
      %2525 = vst.msk [vmem:[#allocation3 + $0x8] sm:$0xff] %vm2523, %v2430
      %2526 = vst.msk [vmem:[#allocation3 + $0x10] sm:$0xff] %vm2523, %v2432
      %2527 = vst.msk [vmem:[#allocation3 + $0x18] sm:$0xff] %vm2523, %v2434
      %2528 = vst.msk [vmem:[#allocation3 + $0x20] sm:$0xff] %vm2523, %v2436
      %2529 = vst.msk [vmem:[#allocation3 + $0x28] sm:$0xff] %vm2523, %v2438
      %2530 = vst.msk [vmem:[#allocation3 + $0x30] sm:$0xff] %vm2523, %v2440
      %2531 = vst.msk [vmem:[#allocation3 + $0x38] sm:$0xff] %vm2523, %v2442
      %2532 = vst.msk [vmem:[#allocation3 + $0x40] sm:$0xff] %vm2523, %v2444
      %2533 = vst.msk [vmem:[#allocation3 + $0x48] sm:$0xff] %vm2523, %v2446
      %2534 = vst.msk [vmem:[#allocation3 + $0x50] sm:$0xff] %vm2523, %v2448
      %2535 = vst.msk [vmem:[#allocation3 + $0x58] sm:$0xff] %vm2523, %v2450
      %2536 = vst.msk [vmem:[#allocation3 + $0x60] sm:$0xff] %vm2523, %v2452
      %2537 = vst.msk [vmem:[#allocation3 + $0x68] sm:$0xff] %vm2523, %v2454
      %2538 = vst.msk [vmem:[#allocation3 + $0x70] sm:$0xff] %vm2523, %v2456
      %2539 = vst.msk [vmem:[#allocation3 + $0x78] sm:$0xff] %vm2523, %v2458
      %2540 = vst.msk [vmem:[#allocation3 + $0x80] sm:$0xff] %vm2523, %v2460
      %2541 = vst.msk [vmem:[#allocation3 + $0x88] sm:$0xff] %vm2523, %v2462
      %2542 = vst.msk [vmem:[#allocation3 + $0x90] sm:$0xff] %vm2523, %v2464
      %2543 = vst.msk [vmem:[#allocation3 + $0x98] sm:$0xff] %vm2523, %v2466
      %2544 = vst.msk [vmem:[#allocation3 + $0xa0] sm:$0xff] %vm2523, %v2468
      %2545 = vst.msk [vmem:[#allocation3 + $0xa8] sm:$0xff] %vm2523, %v2470
      %2546 = vst.msk [vmem:[#allocation3 + $0xb0] sm:$0xff] %vm2523, %v2472
      %2547 = vst.msk [vmem:[#allocation3 + $0xb8] sm:$0xff] %vm2523, %v2474
      %2548 = vst.msk [vmem:[#allocation3 + $0xc0] sm:$0xff] %vm2523, %v2476
      %2549 = vst.msk [vmem:[#allocation3 + $0xc8] sm:$0xff] %vm2523, %v2478
      %2550 = vst.msk [vmem:[#allocation3 + $0xd0] sm:$0xff] %vm2523, %v2480
      %2551 = vst.msk [vmem:[#allocation3 + $0xd8] sm:$0xff] %vm2523, %v2482
      %2552 = vst.msk [vmem:[#allocation3 + $0xe0] sm:$0xff] %vm2523, %v2484
      %2553 = vst.msk [vmem:[#allocation3 + $0xe8] sm:$0xff] %vm2523, %v2486
      %2554 = vst.msk [vmem:[#allocation3 + $0xf0] sm:$0xff] %vm2523, %v2488
      %2555 = vst.msk [vmem:[#allocation3 + $0xf8] sm:$0xff] %vm2523, %v2490
      %v2556 = vld [vmem:[#allocation3] sm:$0xff]
      %v2557 = vld [vmem:[#allocation3 + $0x8] sm:$0xff]
      %v2558 = vld [vmem:[#allocation3 + $0x10] sm:$0xff]
      %v2559 = vld [vmem:[#allocation3 + $0x18] sm:$0xff]
      %v2560 = vld [vmem:[#allocation3 + $0x20] sm:$0xff]
      %v2561 = vld [vmem:[#allocation3 + $0x28] sm:$0xff]
      %v2562 = vld [vmem:[#allocation3 + $0x30] sm:$0xff]
      %v2563 = vld [vmem:[#allocation3 + $0x38] sm:$0xff]
      %v2564 = vld [vmem:[#allocation3 + $0x40] sm:$0xff]
      %v2565 = vld [vmem:[#allocation3 + $0x48] sm:$0xff]
      %v2566 = vld [vmem:[#allocation3 + $0x50] sm:$0xff]
      %v2567 = vld [vmem:[#allocation3 + $0x58] sm:$0xff]
      %v2568 = vld [vmem:[#allocation3 + $0x60] sm:$0xff]
      %v2569 = vld [vmem:[#allocation3 + $0x68] sm:$0xff]
      %v2570 = vld [vmem:[#allocation3 + $0x70] sm:$0xff]
      %v2571 = vld [vmem:[#allocation3 + $0x78] sm:$0xff]
      %v2572 = vld [vmem:[#allocation3 + $0x80] sm:$0xff]
      %v2573 = vld [vmem:[#allocation3 + $0x88] sm:$0xff]
      %v2574 = vld [vmem:[#allocation3 + $0x90] sm:$0xff]
      %v2575 = vld [vmem:[#allocation3 + $0x98] sm:$0xff]
      %v2576 = vld [vmem:[#allocation3 + $0xa0] sm:$0xff]
      %v2577 = vld [vmem:[#allocation3 + $0xa8] sm:$0xff]
      %v2578 = vld [vmem:[#allocation3 + $0xb0] sm:$0xff]
      %v2579 = vld [vmem:[#allocation3 + $0xb8] sm:$0xff]
      %v2580 = vld [vmem:[#allocation3 + $0xc0] sm:$0xff]
      %v2581 = vld [vmem:[#allocation3 + $0xc8] sm:$0xff]
      %v2582 = vld [vmem:[#allocation3 + $0xd0] sm:$0xff]
      %v2583 = vld [vmem:[#allocation3 + $0xd8] sm:$0xff]
      %v2584 = vld [vmem:[#allocation3 + $0xe0] sm:$0xff]
      %v2585 = vld [vmem:[#allocation3 + $0xe8] sm:$0xff]
      %v2586 = vld [vmem:[#allocation3 + $0xf0] sm:$0xff]
      %v2587 = vld [vmem:[#allocation3 + $0xf8] sm:$0xff]
      %v2588 = vld [vmem:[%s6] sm:$0xff]
      %v2589 = vld [vmem:[%s6 + $0x8] sm:$0xff]
      %v2590 = vld [vmem:[%s6 + $0x10] sm:$0xff]
      %v2591 = vld [vmem:[%s6 + $0x18] sm:$0xff]
      %v2592 = vld [vmem:[%s6 + $0x20] sm:$0xff]
      %v2593 = vld [vmem:[%s6 + $0x28] sm:$0xff]
      %v2594 = vld [vmem:[%s6 + $0x30] sm:$0xff]
      %v2595 = vld [vmem:[%s6 + $0x38] sm:$0xff]
      %v2596 = vld [vmem:[%s6 + $0x40] sm:$0xff]
      %vm2597 = vcmask 588800
      %v2599 = vsel %vm2597, %v2556, 0
      %v2602 = vsel %vm2597, %v2557, 0
      %v2605 = vsel %vm2597, %v2558, 0
      %v2608 = vsel %vm2597, %v2559, 0
      %v2611 = vsel %vm2597, %v2560, 0
      %v2614 = vsel %vm2597, %v2561, 0
      %v2617 = vsel %vm2597, %v2562, 0
      %v2620 = vsel %vm2597, %v2563, 0
      %v2623 = vsel %vm2597, %v2564, 0
      %v2626 = vsel %vm2597, %v2565, 0
      %v2629 = vsel %vm2597, %v2566, 0
      %v2632 = vsel %vm2597, %v2567, 0
      %v2635 = vsel %vm2597, %v2568, 0
      %v2638 = vsel %vm2597, %v2569, 0
      %v2641 = vsel %vm2597, %v2570, 0
      %v2644 = vsel %vm2597, %v2571, 0
      %v2647 = vsel %vm2597, %v2572, 0
      %v2650 = vsel %vm2597, %v2573, 0
      %v2653 = vsel %vm2597, %v2574, 0
      %v2656 = vsel %vm2597, %v2575, 0
      %v2659 = vsel %vm2597, %v2576, 0
      %v2662 = vsel %vm2597, %v2577, 0
      %v2665 = vsel %vm2597, %v2578, 0
      %v2668 = vsel %vm2597, %v2579, 0
      %v2671 = vsel %vm2597, %v2580, 0
      %v2674 = vsel %vm2597, %v2581, 0
      %v2677 = vsel %vm2597, %v2582, 0
      %v2680 = vsel %vm2597, %v2583, 0
      %v2683 = vsel %vm2597, %v2584, 0
      %v2686 = vsel %vm2597, %v2585, 0
      %v2689 = vsel %vm2597, %v2586, 0
      %v2692 = vsel %vm2597, %v2587, 0
      %2694 = vmatprep.subr.mxu0 0.0
      %2695 = vmatpush1.msra.mxu0 %v2588
      %2696 = vmatprep.subr.mxu0 0.0
      %2697 = vmatpush1.msra.mxu0 %v2589
      %2698 = vmatprep.subr.mxu0 0.0
      %2699 = vmatpush1.msra.mxu0 %v2590
      %2700 = vmatprep.subr.mxu0 0.0
      %2701 = vmatpush1.msra.mxu0 %v2591
      %2702 = vmatprep.subr.mxu0 0.0
      %2703 = vmatpush1.msra.mxu0 %v2592
      %2704 = vmatprep.subr.mxu0 0.0
      %2705 = vmatpush1.msra.mxu0 %v2593
      %2706 = vmatprep.subr.mxu0 0.0
      %2707 = vmatpush1.msra.mxu0 %v2594
      %2708 = vmatprep.subr.mxu0 0.0
      %2709 = vmatpush1.msra.mxu0 %v2595
      %2710 = vmatprep.subr.mxu0 0.0
      %2711 = vmatpush1.msra.mxu0 %v2596
      %2712 = vmatprep.subr.mxu0 0.0
      %2713 = vmatpush1.msra.mxu0 0.0
      %2714 = vmatprep.subr.mxu0 0.0
      %2715 = vmatpush1.msra.mxu0 0.0
      %2716 = vmatprep.subr.mxu0 0.0
      %2717 = vmatpush1.msra.mxu0 0.0
      %2718 = vmatprep.subr.mxu0 0.0
      %2719 = vmatpush1.msra.mxu0 0.0
      %2720 = vmatprep.subr.mxu0 0.0
      %2721 = vmatpush1.msra.mxu0 0.0
      %2722 = vmatprep.subr.mxu0 0.0
      %2723 = vmatpush1.msra.mxu0 0.0
      %2724 = vmatprep.subr.mxu0 0.0
      %2725 = vmatpush1.msra.mxu0 0.0
      %2726 = vmatprep.subr.mxu0 0.0
      %2727 = vmatpush1.msra.mxu0 0.0
      %2728 = vmatprep.subr.mxu0 0.0
      %2729 = vmatpush1.msra.mxu0 0.0
      %2730 = vmatprep.subr.mxu0 0.0
      %2731 = vmatpush1.msra.mxu0 0.0
      %2732 = vmatprep.subr.mxu0 0.0
      %2733 = vmatpush1.msra.mxu0 0.0
      %2734 = vmatprep.subr.mxu0 0.0
      %2735 = vmatpush1.msra.mxu0 0.0
      %2736 = vmatprep.subr.mxu0 0.0
      %2737 = vmatpush1.msra.mxu0 0.0
      %2738 = vmatprep.subr.mxu0 0.0
      %2739 = vmatpush1.msra.mxu0 0.0
      %2740 = vmatprep.subr.mxu0 0.0
      %2741 = vmatpush1.msra.mxu0 0.0
      %2742 = vmatprep.subr.mxu0 0.0
      %2743 = vmatpush1.msra.mxu0 0.0
      %2744 = vmatprep.subr.mxu0 0.0
      %2745 = vmatpush1.msra.mxu0 0.0
      %2746 = vmatprep.subr.mxu0 0.0
      %2747 = vmatpush1.msra.mxu0 0.0
      %2748 = vmatprep.subr.mxu0 0.0
      %2749 = vmatpush1.msra.mxu0 0.0
      %2750 = vmatprep.subr.mxu0 0.0
      %2751 = vmatpush1.msra.mxu0 0.0
      %2752 = vmatprep.subr.mxu0 0.0
      %2753 = vmatpush1.msra.mxu0 0.0
      %2754 = vmatprep.subr.mxu0 0.0
      %2755 = vmatpush1.msra.mxu0 0.0
      %2756 = vmatprep.subr.mxu0 0.0
      %2757 = vmatpush1.msra.mxu0 0.0
      %2758 = vmatprep.mubr.f32.mxu0 0.0
      %2759 = vmatmul.mubr.f32.gmra.mrb[0].mxu0 %v2599
      %v2760 = vpop.f32.mrb[0].mxu0
      %v2761 = vadd.f32 0.0, %v2760
      %v2762 = vpop.f32.mrb[0].mxu0
      %2763 = vmatprep.mubr.f32.mxu0 0.0
      %2764 = vmatmul.mubr.f32.gmra.mrb[0].mxu0 %v2602
      %v2765 = vpop.f32.mrb[0].mxu0
      %v2766 = vadd.f32 0.0, %v2765
      %v2767 = vpop.f32.mrb[0].mxu0
      %2768 = vmatprep.mubr.f32.mxu0 0.0
      %2769 = vmatmul.mubr.f32.gmra.mrb[0].mxu0 %v2605
      %v2770 = vpop.f32.mrb[0].mxu0
      %v2771 = vadd.f32 0.0, %v2770
      %v2772 = vpop.f32.mrb[0].mxu0
      %2773 = vmatprep.mubr.f32.mxu0 0.0
      %2774 = vmatmul.mubr.f32.gmra.mrb[0].mxu0 %v2608
      %v2775 = vpop.f32.mrb[0].mxu0
      %v2776 = vadd.f32 0.0, %v2775
      %v2777 = vpop.f32.mrb[0].mxu0
      %2778 = vmatprep.mubr.f32.mxu0 0.0
      %2779 = vmatmul.mubr.f32.gmra.mrb[0].mxu0 %v2611
      %v2780 = vpop.f32.mrb[0].mxu0
      %v2781 = vadd.f32 0.0, %v2780
      %v2782 = vpop.f32.mrb[0].mxu0
      %2783 = vmatprep.mubr.f32.mxu0 0.0
      %2784 = vmatmul.mubr.f32.gmra.mrb[0].mxu0 %v2614
      %v2785 = vpop.f32.mrb[0].mxu0
      %v2786 = vadd.f32 0.0, %v2785
      %v2787 = vpop.f32.mrb[0].mxu0
      %2788 = vmatprep.mubr.f32.mxu0 0.0
      %2789 = vmatmul.mubr.f32.gmra.mrb[0].mxu0 %v2617
      %v2790 = vpop.f32.mrb[0].mxu0
      %v2791 = vadd.f32 0.0, %v2790
      %v2792 = vpop.f32.mrb[0].mxu0
      %2793 = vmatprep.mubr.f32.mxu0 0.0
      %2794 = vmatmul.mubr.f32.gmra.mrb[0].mxu0 %v2620
      %v2795 = vpop.f32.mrb[0].mxu0
      %v2796 = vadd.f32 0.0, %v2795
      %v2797 = vpop.f32.mrb[0].mxu0
      %2798 = vmatprep.mubr.f32.mxu0 0.0
      %2799 = vmatmul.mubr.f32.gmra.mrb[0].mxu0 %v2623
      %v2800 = vpop.f32.mrb[0].mxu0
      %v2801 = vadd.f32 0.0, %v2800
      %v2802 = vpop.f32.mrb[0].mxu0
      %2803 = vmatprep.mubr.f32.mxu0 0.0
      %2804 = vmatmul.mubr.f32.gmra.mrb[0].mxu0 %v2626
      %v2805 = vpop.f32.mrb[0].mxu0
      %v2806 = vadd.f32 0.0, %v2805
      %v2807 = vpop.f32.mrb[0].mxu0
      %2808 = vmatprep.mubr.f32.mxu0 0.0
      %2809 = vmatmul.mubr.f32.gmra.mrb[0].mxu0 %v2629
      %v2810 = vpop.f32.mrb[0].mxu0
      %v2811 = vadd.f32 0.0, %v2810
      %v2812 = vpop.f32.mrb[0].mxu0
      %2813 = vmatprep.mubr.f32.mxu0 0.0
      %2814 = vmatmul.mubr.f32.gmra.mrb[0].mxu0 %v2632
      %v2815 = vpop.f32.mrb[0].mxu0
      %v2816 = vadd.f32 0.0, %v2815
      %v2817 = vpop.f32.mrb[0].mxu0
      %2818 = vmatprep.mubr.f32.mxu0 0.0
      %2819 = vmatmul.mubr.f32.gmra.mrb[0].mxu0 %v2635
      %v2820 = vpop.f32.mrb[0].mxu0
      %v2821 = vadd.f32 0.0, %v2820
      %v2822 = vpop.f32.mrb[0].mxu0
      %2823 = vmatprep.mubr.f32.mxu0 0.0
      %2824 = vmatmul.mubr.f32.gmra.mrb[0].mxu0 %v2638
      %v2825 = vpop.f32.mrb[0].mxu0
      %v2826 = vadd.f32 0.0, %v2825
      %v2827 = vpop.f32.mrb[0].mxu0
      %2828 = vmatprep.mubr.f32.mxu0 0.0
      %2829 = vmatmul.mubr.f32.gmra.mrb[0].mxu0 %v2641
      %v2830 = vpop.f32.mrb[0].mxu0
      %v2831 = vadd.f32 0.0, %v2830
      %v2832 = vpop.f32.mrb[0].mxu0
      %2833 = vmatprep.mubr.f32.mxu0 0.0
      %2834 = vmatmul.mubr.f32.gmra.mrb[0].mxu0 %v2644
      %v2835 = vpop.f32.mrb[0].mxu0
      %v2836 = vadd.f32 0.0, %v2835
      %v2837 = vpop.f32.mrb[0].mxu0
      %2838 = vmatprep.mubr.f32.mxu0 0.0
      %2839 = vmatmul.mubr.f32.gmra.mrb[0].mxu0 %v2647
      %v2840 = vpop.f32.mrb[0].mxu0
      %v2841 = vadd.f32 0.0, %v2840
      %v2842 = vpop.f32.mrb[0].mxu0
      %2843 = vmatprep.mubr.f32.mxu0 0.0
      %2844 = vmatmul.mubr.f32.gmra.mrb[0].mxu0 %v2650
      %v2845 = vpop.f32.mrb[0].mxu0
      %v2846 = vadd.f32 0.0, %v2845
      %v2847 = vpop.f32.mrb[0].mxu0
      %2848 = vmatprep.mubr.f32.mxu0 0.0
      %2849 = vmatmul.mubr.f32.gmra.mrb[0].mxu0 %v2653
      %v2850 = vpop.f32.mrb[0].mxu0
      %v2851 = vadd.f32 0.0, %v2850
      %v2852 = vpop.f32.mrb[0].mxu0
      %2853 = vmatprep.mubr.f32.mxu0 0.0
      %2854 = vmatmul.mubr.f32.gmra.mrb[0].mxu0 %v2656
      %v2855 = vpop.f32.mrb[0].mxu0
      %v2856 = vadd.f32 0.0, %v2855
      %v2857 = vpop.f32.mrb[0].mxu0
      %2858 = vmatprep.mubr.f32.mxu0 0.0
      %2859 = vmatmul.mubr.f32.gmra.mrb[0].mxu0 %v2659
      %v2860 = vpop.f32.mrb[0].mxu0
      %v2861 = vadd.f32 0.0, %v2860
      %v2862 = vpop.f32.mrb[0].mxu0
      %2863 = vmatprep.mubr.f32.mxu0 0.0
      %2864 = vmatmul.mubr.f32.gmra.mrb[0].mxu0 %v2662
      %v2865 = vpop.f32.mrb[0].mxu0
      %v2866 = vadd.f32 0.0, %v2865
      %v2867 = vpop.f32.mrb[0].mxu0
      %2868 = vmatprep.mubr.f32.mxu0 0.0
      %2869 = vmatmul.mubr.f32.gmra.mrb[0].mxu0 %v2665
      %v2870 = vpop.f32.mrb[0].mxu0
      %v2871 = vadd.f32 0.0, %v2870
      %v2872 = vpop.f32.mrb[0].mxu0
      %2873 = vmatprep.mubr.f32.mxu0 0.0
      %2874 = vmatmul.mubr.f32.gmra.mrb[0].mxu0 %v2668
      %v2875 = vpop.f32.mrb[0].mxu0
      %v2876 = vadd.f32 0.0, %v2875
      %v2877 = vpop.f32.mrb[0].mxu0
      %2878 = vmatprep.mubr.f32.mxu0 0.0
      %2879 = vmatmul.mubr.f32.gmra.mrb[0].mxu0 %v2671
      %v2880 = vpop.f32.mrb[0].mxu0
      %v2881 = vadd.f32 0.0, %v2880
      %v2882 = vpop.f32.mrb[0].mxu0
      %2883 = vmatprep.mubr.f32.mxu0 0.0
      %2884 = vmatmul.mubr.f32.gmra.mrb[0].mxu0 %v2674
      %v2885 = vpop.f32.mrb[0].mxu0
      %v2886 = vadd.f32 0.0, %v2885
      %v2887 = vpop.f32.mrb[0].mxu0
      %2888 = vmatprep.mubr.f32.mxu0 0.0
      %2889 = vmatmul.mubr.f32.gmra.mrb[0].mxu0 %v2677
      %v2890 = vpop.f32.mrb[0].mxu0
      %v2891 = vadd.f32 0.0, %v2890
      %v2892 = vpop.f32.mrb[0].mxu0
      %2893 = vmatprep.mubr.f32.mxu0 0.0
      %2894 = vmatmul.mubr.f32.gmra.mrb[0].mxu0 %v2680
      %v2895 = vpop.f32.mrb[0].mxu0
      %v2896 = vadd.f32 0.0, %v2895
      %v2897 = vpop.f32.mrb[0].mxu0
      %2898 = vmatprep.mubr.f32.mxu0 0.0
      %2899 = vmatmul.mubr.f32.gmra.mrb[0].mxu0 %v2683
      %v2900 = vpop.f32.mrb[0].mxu0
      %v2901 = vadd.f32 0.0, %v2900
      %v2902 = vpop.f32.mrb[0].mxu0
      %2903 = vmatprep.mubr.f32.mxu0 0.0
      %2904 = vmatmul.mubr.f32.gmra.mrb[0].mxu0 %v2686
      %v2905 = vpop.f32.mrb[0].mxu0
      %v2906 = vadd.f32 0.0, %v2905
      %v2907 = vpop.f32.mrb[0].mxu0
      %2908 = vmatprep.mubr.f32.mxu0 0.0
      %2909 = vmatmul.mubr.f32.gmra.mrb[0].mxu0 %v2689
      %v2910 = vpop.f32.mrb[0].mxu0
      %v2911 = vadd.f32 0.0, %v2910
      %v2912 = vpop.f32.mrb[0].mxu0
      %2913 = vmatprep.mubr.f32.mxu0 0.0
      %2914 = vmatmul.mubr.f32.gmra.mrb[0].mxu0 %v2692
      %v2915 = vpop.f32.mrb[0].mxu0
      %v2916 = vadd.f32 0.0, %v2915
      %v2917 = vpop.f32.mrb[0].mxu0
      %2918 = vdwg.mxu0
      %2919 = vst.msk [vmem:[%s278] sm:$0xff] %vm422, %v279
      %2920 = vst.msk [vmem:[%s278 + $0x8] sm:$0xff] %vm422, %v280
      %2921 = vst.msk [vmem:[%s278 + $0x10] sm:$0xff] %vm422, %v281
      %2922 = vst.msk [vmem:[%s278 + $0x18] sm:$0xff] %vm422, %v282
      %2923 = vst.msk [vmem:[%s278 + $0x20] sm:$0xff] %vm422, %v283
      %2924 = vst.msk [vmem:[%s278 + $0x28] sm:$0xff] %vm422, %v284
      %2925 = vst.msk [vmem:[%s278 + $0x30] sm:$0xff] %vm422, %v285
      %2926 = vst.msk [vmem:[%s278 + $0x38] sm:$0xff] %vm422, %v286
      %2927 = vst.msk [vmem:[%s278 + $0x40] sm:$0xff] %vm422, %v287
      %2928 = vst.msk [vmem:[%s278 + $0x48] sm:$0xff] %vm422, %v288
      %2929 = vst.msk [vmem:[%s278 + $0x50] sm:$0xff] %vm422, %v289
      %2930 = vst.msk [vmem:[%s278 + $0x58] sm:$0xff] %vm422, %v290
      %2931 = vst.msk [vmem:[%s278 + $0x60] sm:$0xff] %vm422, %v291
      %2932 = vst.msk [vmem:[%s278 + $0x68] sm:$0xff] %vm422, %v292
      %2933 = vst.msk [vmem:[%s278 + $0x70] sm:$0xff] %vm422, %v293
      %2934 = vst.msk [vmem:[%s278 + $0x78] sm:$0xff] %vm422, %v294
      %2935 = vst.msk [vmem:[%s278 + $0x80] sm:$0xff] %vm422, %v295
      %2936 = vst.msk [vmem:[%s278 + $0x88] sm:$0xff] %vm422, %v296
      %2937 = vst.msk [vmem:[%s278 + $0x90] sm:$0xff] %vm422, %v297
      %2938 = vst.msk [vmem:[%s278 + $0x98] sm:$0xff] %vm422, %v298
      %2939 = vst.msk [vmem:[%s278 + $0xa0] sm:$0xff] %vm422, %v299
      %2940 = vst.msk [vmem:[%s278 + $0xa8] sm:$0xff] %vm422, %v300
      %2941 = vst.msk [vmem:[%s278 + $0xb0] sm:$0xff] %vm422, %v301
      %2942 = vst.msk [vmem:[%s278 + $0xb8] sm:$0xff] %vm422, %v302
      %2943 = vst.msk [vmem:[%s278 + $0xc0] sm:$0xff] %vm422, %v303
      %2944 = vst.msk [vmem:[%s278 + $0xc8] sm:$0xff] %vm422, %v304
      %2945 = vst.msk [vmem:[%s278 + $0xd0] sm:$0xff] %vm422, %v305
      %2946 = vst.msk [vmem:[%s278 + $0xd8] sm:$0xff] %vm422, %v306
      %2947 = vst.msk [vmem:[%s278 + $0xe0] sm:$0xff] %vm422, %v307
      %2948 = vst.msk [vmem:[%s278 + $0xe8] sm:$0xff] %vm422, %v308
      %2949 = vst.msk [vmem:[%s278 + $0xf0] sm:$0xff] %vm422, %v309
      %2950 = vst.msk [vmem:[%s278 + $0xf8] sm:$0xff] %vm422, %v310
      %2983 = vrot.lane.b32.xlu0 %v2761, 4
      %v2984 = vpop.permute.xlu0 %2983
      %2985 = vrot.lane.b32.xlu0 %v2766, 4
      %v2986 = vpop.permute.xlu0 %2985
      %2987 = vrot.lane.b32.xlu0 %v2771, 4
      %v2988 = vpop.permute.xlu0 %2987
      %2989 = vrot.lane.b32.xlu0 %v2776, 4
      %v2990 = vpop.permute.xlu0 %2989
      %2991 = vrot.lane.b32.xlu0 %v2781, 4
      %v2992 = vpop.permute.xlu0 %2991
      %2993 = vrot.lane.b32.xlu0 %v2786, 4
      %v2994 = vpop.permute.xlu0 %2993
      %2995 = vrot.lane.b32.xlu0 %v2791, 4
      %v2996 = vpop.permute.xlu0 %2995
      %2997 = vrot.lane.b32.xlu0 %v2796, 4
      %v2998 = vpop.permute.xlu0 %2997
      %2999 = vrot.lane.b32.xlu0 %v2801, 4
      %v3000 = vpop.permute.xlu0 %2999
      %3001 = vrot.lane.b32.xlu0 %v2806, 4
      %v3002 = vpop.permute.xlu0 %3001
      %3003 = vrot.lane.b32.xlu0 %v2811, 4
      %v3004 = vpop.permute.xlu0 %3003
      %3005 = vrot.lane.b32.xlu0 %v2816, 4
      %v3006 = vpop.permute.xlu0 %3005
      %3007 = vrot.lane.b32.xlu0 %v2821, 4
      %v3008 = vpop.permute.xlu0 %3007
      %3009 = vrot.lane.b32.xlu0 %v2826, 4
      %v3010 = vpop.permute.xlu0 %3009
      %3011 = vrot.lane.b32.xlu0 %v2831, 4
      %v3012 = vpop.permute.xlu0 %3011
      %3013 = vrot.lane.b32.xlu0 %v2836, 4
      %v3014 = vpop.permute.xlu0 %3013
      %3015 = vrot.lane.b32.xlu0 %v2841, 4
      %v3016 = vpop.permute.xlu0 %3015
      %3017 = vrot.lane.b32.xlu0 %v2846, 4
      %v3018 = vpop.permute.xlu0 %3017
      %3019 = vrot.lane.b32.xlu0 %v2851, 4
      %v3020 = vpop.permute.xlu0 %3019
      %3021 = vrot.lane.b32.xlu0 %v2856, 4
      %v3022 = vpop.permute.xlu0 %3021
      %3023 = vrot.lane.b32.xlu0 %v2861, 4
      %v3024 = vpop.permute.xlu0 %3023
      %3025 = vrot.lane.b32.xlu0 %v2866, 4
      %v3026 = vpop.permute.xlu0 %3025
      %3027 = vrot.lane.b32.xlu0 %v2871, 4
      %v3028 = vpop.permute.xlu0 %3027
      %3029 = vrot.lane.b32.xlu0 %v2876, 4
      %v3030 = vpop.permute.xlu0 %3029
      %3031 = vrot.lane.b32.xlu0 %v2881, 4
      %v3032 = vpop.permute.xlu0 %3031
      %3033 = vrot.lane.b32.xlu0 %v2886, 4
      %v3034 = vpop.permute.xlu0 %3033
      %3035 = vrot.lane.b32.xlu0 %v2891, 4
      %v3036 = vpop.permute.xlu0 %3035
      %3037 = vrot.lane.b32.xlu0 %v2896, 4
      %v3038 = vpop.permute.xlu0 %3037
      %3039 = vrot.lane.b32.xlu0 %v2901, 4
      %v3040 = vpop.permute.xlu0 %3039
      %3041 = vrot.lane.b32.xlu0 %v2906, 4
      %v3042 = vpop.permute.xlu0 %3041
      %3043 = vrot.lane.b32.xlu0 %v2911, 4
      %v3044 = vpop.permute.xlu0 %3043
      %3045 = vrot.lane.b32.xlu0 %v2916, 4
      %v3046 = vpop.permute.xlu0 %3045
      %vm3079 = vcmask 64544
      %3080 = vst.msk [vmem:[%s278] sm:$0xff] %vm3079, %v2984
      %3081 = vst.msk [vmem:[%s278 + $0x8] sm:$0xff] %vm3079, %v2986
      %3082 = vst.msk [vmem:[%s278 + $0x10] sm:$0xff] %vm3079, %v2988
      %3083 = vst.msk [vmem:[%s278 + $0x18] sm:$0xff] %vm3079, %v2990
      %3084 = vst.msk [vmem:[%s278 + $0x20] sm:$0xff] %vm3079, %v2992
      %3085 = vst.msk [vmem:[%s278 + $0x28] sm:$0xff] %vm3079, %v2994
      %3086 = vst.msk [vmem:[%s278 + $0x30] sm:$0xff] %vm3079, %v2996
      %3087 = vst.msk [vmem:[%s278 + $0x38] sm:$0xff] %vm3079, %v2998
      %3088 = vst.msk [vmem:[%s278 + $0x40] sm:$0xff] %vm3079, %v3000
      %3089 = vst.msk [vmem:[%s278 + $0x48] sm:$0xff] %vm3079, %v3002
      %3090 = vst.msk [vmem:[%s278 + $0x50] sm:$0xff] %vm3079, %v3004
      %3091 = vst.msk [vmem:[%s278 + $0x58] sm:$0xff] %vm3079, %v3006
      %3092 = vst.msk [vmem:[%s278 + $0x60] sm:$0xff] %vm3079, %v3008
      %3093 = vst.msk [vmem:[%s278 + $0x68] sm:$0xff] %vm3079, %v3010
      %3094 = vst.msk [vmem:[%s278 + $0x70] sm:$0xff] %vm3079, %v3012
      %3095 = vst.msk [vmem:[%s278 + $0x78] sm:$0xff] %vm3079, %v3014
      %3096 = vst.msk [vmem:[%s278 + $0x80] sm:$0xff] %vm3079, %v3016
      %3097 = vst.msk [vmem:[%s278 + $0x88] sm:$0xff] %vm3079, %v3018
      %3098 = vst.msk [vmem:[%s278 + $0x90] sm:$0xff] %vm3079, %v3020
      %3099 = vst.msk [vmem:[%s278 + $0x98] sm:$0xff] %vm3079, %v3022
      %3100 = vst.msk [vmem:[%s278 + $0xa0] sm:$0xff] %vm3079, %v3024
      %3101 = vst.msk [vmem:[%s278 + $0xa8] sm:$0xff] %vm3079, %v3026
      %3102 = vst.msk [vmem:[%s278 + $0xb0] sm:$0xff] %vm3079, %v3028
      %3103 = vst.msk [vmem:[%s278 + $0xb8] sm:$0xff] %vm3079, %v3030
      %3104 = vst.msk [vmem:[%s278 + $0xc0] sm:$0xff] %vm3079, %v3032
      %3105 = vst.msk [vmem:[%s278 + $0xc8] sm:$0xff] %vm3079, %v3034
      %3106 = vst.msk [vmem:[%s278 + $0xd0] sm:$0xff] %vm3079, %v3036
      %3107 = vst.msk [vmem:[%s278 + $0xd8] sm:$0xff] %vm3079, %v3038
      %3108 = vst.msk [vmem:[%s278 + $0xe0] sm:$0xff] %vm3079, %v3040
      %3109 = vst.msk [vmem:[%s278 + $0xe8] sm:$0xff] %vm3079, %v3042
      %3110 = vst.msk [vmem:[%s278 + $0xf0] sm:$0xff] %vm3079, %v3044
      %3111 = vst.msk [vmem:[%s278 + $0xf8] sm:$0xff] %vm3079, %v3046
      %p3112 = scmp.lt.s32.totalorder %s18, 1
      %s3113 = scalar_select %p3112, %s18, 1
      %s3114 = smul.addr %s3113, 32
      %s3115 = smul.addr %s3114, 8
      %s3116 = scalar_lea.vmem %s7, %s3115
      // Predicated region
      $region49: #{tpu_custom_call.1} parent=47 // pred_check
        %p3117 = pneg %p188
      $region50: #{tpu_custom_call.1} parent=47 // pred_check_branch
        %3119 = sbr.rel (%p3117) target = $region52
      $region51: #{tpu_custom_call.1} parent=47 // pred_region
        _
      $region52: #{tpu_custom_call.1} parent=47 // pred_fallthru
        _
    $region48: #{tpu_custom_call.1} parent=5 // pred_fallthru
      _
    %p3120 = scmp.le.s32.totalorder 2, %s13
    // Predicated region
    $region53: #{tpu_custom_call.1} parent=5 // pred_check
      %p3121 = pneg %p3120
    $region54: #{tpu_custom_call.1} parent=5 // pred_check_branch
      %3123 = sbr.rel (%p3121) target = $region56
    $region55: #{tpu_custom_call.1} parent=5 // pred_region
      %s3124 = ssub.s32 %s13, 2
      // Predicated region
      $region57: #{tpu_custom_call.1} parent=55 // pred_check
        %p3125 = pneg %p194
      $region58: #{tpu_custom_call.1} parent=55 // pred_check_branch
        %3127 = sbr.rel (%p3125) target = $region60
      $region59: #{tpu_custom_call.1} parent=55 // pred_region
        %p3128 = scmp.lt.s32.totalorder %s19, 1
        %s3129 = scalar_select %p3128, %s19, 1
        %s3130 = smul.addr %s3129, 32
        %s3131 = smul.addr %s3130, 8
        %s3132 = scalar_lea.vmem %s7, %s3131
      $region60: #{tpu_custom_call.1} parent=55 // pred_fallthru
        _
    $region56: #{tpu_custom_call.1} parent=5 // pred_fallthru
      _
  $region6: #{tpu_custom_call.1} parent=0 // loop_footer
    %s17 = sadd.s32 1, %s13
  $region7: #{tpu_custom_call.1} parent=0 // loop_footer_branch
    %12 = sbr.rel target = $region3
  $region8: #{tpu_custom_call.1} parent=0 // loop_exit
    _

</llo_original>
